<compile_context>
chip_gen: v7x
topology: tpu7x:2x2x1
jax: 0.10.0
libtpu: 0.0.40
codegen_flags: <defaults>
</compile_context>

<pallas_src>
import jax
import jax.numpy as jnp
from jax.experimental import pallas as pl
from jax.experimental.pallas import tpu as pltpu


def conv_block_kernel(xp_ref, w_ref, bias_ref, o_ref, im2col_ref):
    # xp_ref:     (1, H+2, W+2, Cin)  bf16 zero-padded NHWC image (conv halo)
    # w_ref:      (9*Cin, CPAD)       bf16 im2col conv weights, BN scale folded in
    # bias_ref:   (1, CPAD)           f32 folded conv-bias + BN shift
    # o_ref:      (1, P, CPAD)        f32 pooled output pixels (row-major), P=(H/2)*(W/2)
    # im2col_ref: (H*W, 9*Cin)        bf16 VMEM scratch holding the in-kernel im2col
    _, Hpad, Wpad, Cin = xp_ref.shape
    H, W = Hpad - 2, Wpad - 2
    Hp, Wp = H // 2, W // 2
    C = w_ref.shape[1]

    # In-VMEM im2col: write the 9 shifted taps of the padded tile into contiguous
    # K slots (tap-major, cin-minor) -- matches the wrapper's weight layout.
    for kh in range(3):
        for kw in range(3):
            t = kh * 3 + kw
            tap = xp_ref[0, kh:kh + H, kw:kw + W, :].reshape(H * W, Cin)
            im2col_ref[:, t * Cin:(t + 1) * Cin] = tap

    # Single MXU matmul with K = 9*Cin, f32 accumulation (instead of 9 tiny-K
    # matmuls + 8 VALU accumulations).
    acc = jnp.dot(im2col_ref[...], w_ref[...], preferred_element_type=jnp.float32)

    # MaxPool2d(2) on the (scaled) conv output, then one bias add and one ReLU.
    # Exact reordering: bias is a per-channel constant and ReLU is monotone.
    y = acc.reshape(Hp, 2, Wp, 2, C)
    y = jnp.max(y, axis=3)
    y = jnp.max(y, axis=1)                       # (Hp, Wp, C)
    pooled = y.reshape(Hp * Wp, C) + bias_ref[...]
    o_ref[0] = jnp.maximum(pooled, 0.0).astype(o_ref.dtype)


def conv_block_forward(x_nchw, conv_w, conv_b, gamma, beta, run_mean, run_var,
                       eps=1e-5):
    N, Cin, H, W = x_nchw.shape
    Cout = conv_w.shape[0]
    assert H % 2 == 0 and W % 2 == 0
    Hp, Wp = H // 2, W // 2
    P = Hp * Wp
    CPAD = max(128, ((Cout + 127) // 128) * 128)      # lane-dense output channels

    # ---- glue: NCHW -> NHWC, bf16, +1 halo pad (no im2col materialization in HBM) ----
    x = jnp.transpose(x_nchw, (0, 2, 3, 1)).astype(jnp.bfloat16)
    xp = jnp.pad(x, ((0, 0), (1, 1), (1, 1), (0, 0)))

    # ---- glue: fold BN(eval) scale into weights; bias deferred to post-pool ----
    scale = gamma / jnp.sqrt(run_var + eps)                        # f32
    bias = beta + scale * (conv_b - run_mean)                      # f32
    # (Cout, Cin, 3, 3) -> (kh, kw, cin, cout) -> (9*Cin, Cout), tap-major / cin-minor.
    w = jnp.transpose(conv_w, (2, 3, 1, 0)).reshape(9 * Cin, Cout) * scale[None, :]
    w = jnp.pad(w, ((0, 0), (0, CPAD - Cout))).astype(jnp.bfloat16)
    bias = jnp.pad(bias, (0, CPAD - Cout)).astype(jnp.float32).reshape(1, CPAD)

    out = pl.pallas_call(
        conv_block_kernel,
        out_shape=jax.ShapeDtypeStruct((N, P, CPAD), jnp.float32),
        grid=(N,),
        in_specs=[
            pl.BlockSpec((1, H + 2, W + 2, Cin), lambda n: (n, 0, 0, 0)),
            pl.BlockSpec((9 * Cin, CPAD), lambda n: (0, 0)),
            pl.BlockSpec((1, CPAD), lambda n: (0, 0)),
        ],
        out_specs=pl.BlockSpec((1, P, CPAD), lambda n: (n, 0, 0)),
        scratch_shapes=[pltpu.VMEM((H * W, 9 * Cin), jnp.bfloat16)],
        compiler_params=pltpu.CompilerParams(dimension_semantics=("parallel",)),
    )(xp, w, bias)

    # ---- glue: drop channel padding, back to PyTorch NCHW output ----
    out = out[:, :, :Cout].reshape(N, Hp, Wp, Cout)
    return jnp.transpose(out, (0, 3, 1, 2))


def ref_forward(x, conv_w, conv_b, gamma, beta, run_mean, run_var, eps=1e-5):
    """Pure-JAX f32 reference matching PyTorch ConvBlock (eval-mode BN)."""
    y = jax.lax.conv_general_dilated(
        x, conv_w, window_strides=(1, 1), padding=((1, 1), (1, 1)),
        dimension_numbers=("NCHW", "OIHW", "NCHW"))
    y = y + conv_b[None, :, None, None]
    inv = gamma / jnp.sqrt(run_var + eps)
    y = (y - run_mean[None, :, None, None]) * inv[None, :, None, None] \
        + beta[None, :, None, None]
    y = jnp.maximum(y, 0.0)
    y = jax.lax.reduce_window(y, -jnp.inf, jax.lax.max,
                              window_dimensions=(1, 1, 2, 2),
                              window_strides=(1, 1, 2, 2), padding="VALID")
    return y


if __name__ == "__main__":
    key = jax.random.PRNGKey(0)
    k1, k2, k3, k4, k5 = jax.random.split(key, 5)

    N, Cin, H, W = 2, 4, 16, 16
    Cout = 8

    # Deterministic synthetic parameters (shapes follow nn.Conv2d / nn.BatchNorm2d).
    x = jax.random.normal(k1, (N, Cin, H, W), jnp.float32)
    conv_w = 0.1 * jax.random.normal(k2, (Cout, Cin, 3, 3), jnp.float32)
    conv_b = 0.1 * jax.random.normal(k3, (Cout,), jnp.float32)
    gamma = 1.0 + 0.1 * jax.random.normal(k4, (Cout,), jnp.float32)
    beta = 0.1 * jax.random.normal(k5, (Cout,), jnp.float32)
    run_mean = jnp.zeros((Cout,), jnp.float32)   # PyTorch BN init
    run_var = jnp.ones((Cout,), jnp.float32)

    out = conv_block_forward(x, conv_w, conv_b, gamma, beta, run_mean, run_var)
    out = jax.block_until_ready(out)

    ref = ref_forward(x, conv_w, conv_b, gamma, beta, run_mean, run_var)
    assert out.shape == (N, Cout, H // 2, W // 2), out.shape
    # Tolerance accounts for bf16 input/weight streams (f32 accumulation) vs. f32 ref.
    if not jnp.allclose(out, ref, atol=3e-2, rtol=3e-2):
        raise AssertionError("Pallas ConvBlock output mismatch vs reference")

    print("KERNEL_OK")
</pallas_src>

<mosaic_0001>
module attributes {stable_mosaic.version = 11 : i64} {
  func.func @conv_block_kernel(%arg0: i32, %arg1: memref<1x18x18x4xbf16, #tpu.memory_space<vmem>>, %arg2: memref<36x128xbf16, #tpu.memory_space<vmem>>, %arg3: memref<1x128xf32, #tpu.memory_space<vmem>>, %arg4: memref<1x64x128xf32, #tpu.memory_space<vmem>>, %arg5: memref<256x36xbf16, #tpu.memory_space<vmem>>) attributes {dimension_semantics = [#tpu.dimension_semantics<parallel>], iteration_bounds = array<i64: 2>, scalar_prefetch = 0 : i64, scratch_operands = 1 : i64, tpu.core_type = #tpu.core_type<tc>, window_params = [{transform_indices = @transform_0, window_bounds = array<i64: 1, 18, 18, 4>}, {pipeline_mode = #tpu.pipeline_mode<synchronous>, transform_indices = @transform_1, window_bounds = array<i64: 36, 128>}, {pipeline_mode = #tpu.pipeline_mode<synchronous>, transform_indices = @transform_2, window_bounds = array<i64: 1, 128>}, {transform_indices = @transform_3, window_bounds = array<i64: 1, 64, 128>}]} {
    %c0 = arith.constant 0 : index
    %c0_0 = arith.constant 0 : index
    %c0_1 = arith.constant 0 : index
    %c0_2 = arith.constant 0 : index
    %0 = vector.load %arg1[%c0, %c0_0, %c0_1, %c0_2] : memref<1x18x18x4xbf16, #tpu.memory_space<vmem>>, vector<1x16x16x4xbf16>
    %1 = vector.shape_cast %0 : vector<1x16x16x4xbf16> to vector<16x16x4xbf16>
    %2 = vector.shape_cast %1 : vector<16x16x4xbf16> to vector<256x4xbf16>
    %c0_3 = arith.constant 0 : index
    %c0_4 = arith.constant 0 : index
    %3 = vector.load %arg5[%c0_3, %c0_4] : memref<256x36xbf16, #tpu.memory_space<vmem>>, vector<256x4xbf16>
    tpu.vector_store %arg5[%c0_3, %c0_4], %2 {strides = array<i32>} : memref<256x36xbf16, #tpu.memory_space<vmem>>, vector<256x4xbf16>,
    %c0_5 = arith.constant 0 : index
    %c0_6 = arith.constant 0 : index
    %c1 = arith.constant 1 : index
    %c0_7 = arith.constant 0 : index
    %4 = vector.load %arg1[%c0_5, %c0_6, %c1, %c0_7] : memref<1x18x18x4xbf16, #tpu.memory_space<vmem>>, vector<1x16x16x4xbf16>
    %5 = vector.shape_cast %4 : vector<1x16x16x4xbf16> to vector<16x16x4xbf16>
    %6 = vector.shape_cast %5 : vector<16x16x4xbf16> to vector<256x4xbf16>
    %c0_8 = arith.constant 0 : index
    %c4 = arith.constant 4 : index
    %7 = vector.load %arg5[%c0_8, %c4] : memref<256x36xbf16, #tpu.memory_space<vmem>>, vector<256x4xbf16>
    tpu.vector_store %arg5[%c0_8, %c4], %6 {strides = array<i32>} : memref<256x36xbf16, #tpu.memory_space<vmem>>, vector<256x4xbf16>,
    %c0_9 = arith.constant 0 : index
    %c0_10 = arith.constant 0 : index
    %c2 = arith.constant 2 : index
    %c0_11 = arith.constant 0 : index
    %8 = vector.load %arg1[%c0_9, %c0_10, %c2, %c0_11] : memref<1x18x18x4xbf16, #tpu.memory_space<vmem>>, vector<1x16x16x4xbf16>
    %9 = vector.shape_cast %8 : vector<1x16x16x4xbf16> to vector<16x16x4xbf16>
    %10 = vector.shape_cast %9 : vector<16x16x4xbf16> to vector<256x4xbf16>
    %c0_12 = arith.constant 0 : index
    %c8 = arith.constant 8 : index
    %11 = vector.load %arg5[%c0_12, %c8] : memref<256x36xbf16, #tpu.memory_space<vmem>>, vector<256x4xbf16>
    tpu.vector_store %arg5[%c0_12, %c8], %10 {strides = array<i32>} : memref<256x36xbf16, #tpu.memory_space<vmem>>, vector<256x4xbf16>,
    %c0_13 = arith.constant 0 : index
    %c1_14 = arith.constant 1 : index
    %c0_15 = arith.constant 0 : index
    %c0_16 = arith.constant 0 : index
    %12 = vector.load %arg1[%c0_13, %c1_14, %c0_15, %c0_16] : memref<1x18x18x4xbf16, #tpu.memory_space<vmem>>, vector<1x16x16x4xbf16>
    %13 = vector.shape_cast %12 : vector<1x16x16x4xbf16> to vector<16x16x4xbf16>
    %14 = vector.shape_cast %13 : vector<16x16x4xbf16> to vector<256x4xbf16>
    %c0_17 = arith.constant 0 : index
    %c12 = arith.constant 12 : index
    %15 = vector.load %arg5[%c0_17, %c12] : memref<256x36xbf16, #tpu.memory_space<vmem>>, vector<256x4xbf16>
    tpu.vector_store %arg5[%c0_17, %c12], %14 {strides = array<i32>} : memref<256x36xbf16, #tpu.memory_space<vmem>>, vector<256x4xbf16>,
    %c0_18 = arith.constant 0 : index
    %c1_19 = arith.constant 1 : index
    %c1_20 = arith.constant 1 : index
    %c0_21 = arith.constant 0 : index
    %16 = vector.load %arg1[%c0_18, %c1_19, %c1_20, %c0_21] : memref<1x18x18x4xbf16, #tpu.memory_space<vmem>>, vector<1x16x16x4xbf16>
    %17 = vector.shape_cast %16 : vector<1x16x16x4xbf16> to vector<16x16x4xbf16>
    %18 = vector.shape_cast %17 : vector<16x16x4xbf16> to vector<256x4xbf16>
    %c0_22 = arith.constant 0 : index
    %c16 = arith.constant 16 : index
    %19 = vector.load %arg5[%c0_22, %c16] : memref<256x36xbf16, #tpu.memory_space<vmem>>, vector<256x4xbf16>
    tpu.vector_store %arg5[%c0_22, %c16], %18 {strides = array<i32>} : memref<256x36xbf16, #tpu.memory_space<vmem>>, vector<256x4xbf16>,
    %c0_23 = arith.constant 0 : index
    %c1_24 = arith.constant 1 : index
    %c2_25 = arith.constant 2 : index
    %c0_26 = arith.constant 0 : index
    %20 = vector.load %arg1[%c0_23, %c1_24, %c2_25, %c0_26] : memref<1x18x18x4xbf16, #tpu.memory_space<vmem>>, vector<1x16x16x4xbf16>
    %21 = vector.shape_cast %20 : vector<1x16x16x4xbf16> to vector<16x16x4xbf16>
    %22 = vector.shape_cast %21 : vector<16x16x4xbf16> to vector<256x4xbf16>
    %c0_27 = arith.constant 0 : index
    %c20 = arith.constant 20 : index
    %23 = vector.load %arg5[%c0_27, %c20] : memref<256x36xbf16, #tpu.memory_space<vmem>>, vector<256x4xbf16>
    tpu.vector_store %arg5[%c0_27, %c20], %22 {strides = array<i32>} : memref<256x36xbf16, #tpu.memory_space<vmem>>, vector<256x4xbf16>,
    %c0_28 = arith.constant 0 : index
    %c2_29 = arith.constant 2 : index
    %c0_30 = arith.constant 0 : index
    %c0_31 = arith.constant 0 : index
    %24 = vector.load %arg1[%c0_28, %c2_29, %c0_30, %c0_31] : memref<1x18x18x4xbf16, #tpu.memory_space<vmem>>, vector<1x16x16x4xbf16>
    %25 = vector.shape_cast %24 : vector<1x16x16x4xbf16> to vector<16x16x4xbf16>
    %26 = vector.shape_cast %25 : vector<16x16x4xbf16> to vector<256x4xbf16>
    %c0_32 = arith.constant 0 : index
    %c24 = arith.constant 24 : index
    %27 = vector.load %arg5[%c0_32, %c24] : memref<256x36xbf16, #tpu.memory_space<vmem>>, vector<256x4xbf16>
    tpu.vector_store %arg5[%c0_32, %c24], %26 {strides = array<i32>} : memref<256x36xbf16, #tpu.memory_space<vmem>>, vector<256x4xbf16>,
    %c0_33 = arith.constant 0 : index
    %c2_34 = arith.constant 2 : index
    %c1_35 = arith.constant 1 : index
    %c0_36 = arith.constant 0 : index
    %28 = vector.load %arg1[%c0_33, %c2_34, %c1_35, %c0_36] : memref<1x18x18x4xbf16, #tpu.memory_space<vmem>>, vector<1x16x16x4xbf16>
    %29 = vector.shape_cast %28 : vector<1x16x16x4xbf16> to vector<16x16x4xbf16>
    %30 = vector.shape_cast %29 : vector<16x16x4xbf16> to vector<256x4xbf16>
    %c0_37 = arith.constant 0 : index
    %c28 = arith.constant 28 : index
    %31 = vector.load %arg5[%c0_37, %c28] : memref<256x36xbf16, #tpu.memory_space<vmem>>, vector<256x4xbf16>
    tpu.vector_store %arg5[%c0_37, %c28], %30 {strides = array<i32>} : memref<256x36xbf16, #tpu.memory_space<vmem>>, vector<256x4xbf16>,
    %c0_38 = arith.constant 0 : index
    %c2_39 = arith.constant 2 : index
    %c2_40 = arith.constant 2 : index
    %c0_41 = arith.constant 0 : index
    %32 = vector.load %arg1[%c0_38, %c2_39, %c2_40, %c0_41] : memref<1x18x18x4xbf16, #tpu.memory_space<vmem>>, vector<1x16x16x4xbf16>
    %33 = vector.shape_cast %32 : vector<1x16x16x4xbf16> to vector<16x16x4xbf16>
    %34 = vector.shape_cast %33 : vector<16x16x4xbf16> to vector<256x4xbf16>
    %c0_42 = arith.constant 0 : index
    %c32 = arith.constant 32 : index
    %35 = vector.load %arg5[%c0_42, %c32] : memref<256x36xbf16, #tpu.memory_space<vmem>>, vector<256x4xbf16>
    tpu.vector_store %arg5[%c0_42, %c32], %34 {strides = array<i32>} : memref<256x36xbf16, #tpu.memory_space<vmem>>, vector<256x4xbf16>,
    %c0_43 = arith.constant 0 : index
    %c0_44 = arith.constant 0 : index
    %36 = vector.load %arg5[%c0_43, %c0_44] : memref<256x36xbf16, #tpu.memory_space<vmem>>, vector<256x36xbf16>
    %c0_45 = arith.constant 0 : index
    %c0_46 = arith.constant 0 : index
    %37 = vector.load %arg2[%c0_45, %c0_46] : memref<36x128xbf16, #tpu.memory_space<vmem>>, vector<36x128xbf16>
    %cst = arith.constant dense<0.000000e+00> : vector<256x128xf32>
    %38 = tpu.matmul %36, %37, %cst {dimension_numbers = #tpu.dot_dimension_numbers<[1], [0], [0], [1], [0, 0, 1, 1], [], []>} : vector<256x36xbf16>, vector<36x128xbf16>, vector<256x128xf32> -> vector<256x128xf32>
    %39 = vector.shape_cast %38 : vector<256x128xf32> to vector<8x2x8x2x128xf32>
    %cst_47 = arith.constant dense<0xFF800000> : vector<8x2x8x128xf32>
    %40 = vector.multi_reduction <maximumf>, %39, %cst_47 [3] : vector<8x2x8x2x128xf32> to vector<8x2x8x128xf32>
    %cst_48 = arith.constant dense<0xFF800000> : vector<8x8x128xf32>
    %41 = vector.multi_reduction <maximumf>, %40, %cst_48 [1] : vector<8x2x8x128xf32> to vector<8x8x128xf32>
    %42 = vector.shape_cast %41 : vector<8x8x128xf32> to vector<64x128xf32>
    %c0_49 = arith.constant 0 : index
    %c0_50 = arith.constant 0 : index
    %43 = vector.load %arg3[%c0_49, %c0_50] : memref<1x128xf32, #tpu.memory_space<vmem>>, vector<1x128xf32>
    %44 = vector.broadcast %43 : vector<1x128xf32> to vector<64x128xf32>
    %45 = arith.addf %42, %44 : vector<64x128xf32>
    %cst_51 = arith.constant 0.000000e+00 : f32
    %46 = vector.broadcast %cst_51 : f32 to vector<64x128xf32>
    %47 = arith.maximumf %45, %46 : vector<64x128xf32>
    %c0_52 = arith.constant 0 : index
    %c0_53 = arith.constant 0 : index
    %c0_54 = arith.constant 0 : index
    %48 = vector.load %arg4[%c0_52, %c0_53, %c0_54] : memref<1x64x128xf32, #tpu.memory_space<vmem>>, vector<1x64x128xf32>
    %49 = vector.shape_cast %48 : vector<1x64x128xf32> to vector<64x128xf32>
    %50 = vector.shape_cast %47 : vector<64x128xf32> to vector<1x64x128xf32>
    tpu.vector_store %arg4[%c0_52, %c0_53, %c0_54], %50 {strides = array<i32>} : memref<1x64x128xf32, #tpu.memory_space<vmem>>, vector<1x64x128xf32>,
    return
  }
  func.func @transform_0(%arg0: i32) -> (i32, i32, i32, i32) {
    %c0_i32 = arith.constant 0 : i32
    %c0_i32_0 = arith.constant 0 : i32
    %c0_i32_1 = arith.constant 0 : i32
    %c0_i32_2 = arith.constant 0 : i32
    return %arg0, %c0_i32, %c0_i32_0, %c0_i32_1 : i32, i32, i32, i32
  }
  func.func @transform_1(%arg0: i32) -> (i32, i32) {
    %c0_i32 = arith.constant 0 : i32
    %c0_i32_0 = arith.constant 0 : i32
    %c0_i32_1 = arith.constant 0 : i32
    return %c0_i32, %c0_i32_0 : i32, i32
  }
  func.func @transform_2(%arg0: i32) -> (i32, i32) {
    %c0_i32 = arith.constant 0 : i32
    %c0_i32_0 = arith.constant 0 : i32
    %c0_i32_1 = arith.constant 0 : i32
    return %c0_i32, %c0_i32_0 : i32, i32
  }
  func.func @transform_3(%arg0: i32) -> (i32, i32, i32) {
    %c0_i32 = arith.constant 0 : i32
    %c0_i32_0 = arith.constant 0 : i32
    %c0_i32_1 = arith.constant 0 : i32
    return %arg0, %c0_i32, %c0_i32_0 : i32, i32, i32
  }
}

</mosaic_0001>

<llo_original>
// kernel: tpu_custom_call.1
$region0: #{tpu_custom_call.1}
  #allocation0 [shape = 'u32[]', space=smem, size = 0x4, offset = 0x4, fixed_abs, tag = 'smem constant byte address 0x4 - core index']
  #allocation1 [shape = 'u32[144,128]{1,0:T(1,128)}', space=vmem, size = 0x12000, scoped, tag = 'internal scratch']
  #allocation2 [shape = 'bf16[256,36]{1,0:T(16,128)(2,1)}', space=vmem, size = 0x10000, scoped, tag = 'scratch operand']
  %s0 = inlined_call_operand.vmem [shape: bf16[2,18,18,4], index: 0, kind: input, shape index: {}]
  %s1 = inlined_call_operand.vmem [shape: bf16[36,128], index: 1, kind: input, shape index: {}]
  %s2 = inlined_call_operand.vmem [shape: f32[1,128], index: 2, kind: input, shape index: {}]
  %s3 = inlined_call_operand.hbm [shape: f32[2,64,128], index: 3, kind: output, shape index: {}]
  %s4 = sld [smem:[#allocation0]]
  $region45: #{tpu_custom_call.1} parent=0
    _
  %s6 = ssub.s32 1, %s4
  %s7 = scalar_select 0, %s6, %s4
  $region1: #{tpu_custom_call.1} parent=0
    #allocation3 [shape = 'u8[65536]{0}', space=vmem, size = 0x10000, scoped, tag = 'output window, operand 0']
    #allocation4 [shape = 's32[2]{0}', space=sflag, size = 0x8, scoped, tag = 'scoped memory for tpu_custom_call.1']
    %8 = vsyncpa [#allocation4], 0
    %s9 = scalar_lea.sflag [#allocation4], 1
    %10 = vsyncpa %s9, 0
    loop: start=0, step=1, limit=4
    $region2: #{tpu_custom_call.1} parent=1 // loop_pre_header
      _
    $region3: #{tpu_custom_call.1} parent=1 // loop_header
      %s12 = sphi 0, %s16
      %p13 = scmp.ge.s32.totalorder %s12, 4
      %s22 = sphi 0, %s24
      %s25 = sphi 0, %s22
      %s26 = sphi 0, %s25
      %s42 = sphi 0, %s26
      %s46 = sphi 0, %s46
      %s48 = sphi 0, %s46
      %s49 = sphi 0, %s48
      %s63 = sphi 0, %s49
      %s67 = sphi 0, %s67
      %s69 = sphi 0, %s67
      %s70 = sphi 0, %s69
      %s84 = sphi 0, %s70
      %s90 = sphi 0, %s92
      %s93 = sphi 0, %s90
      %s94 = sphi 0, %s93
      %s110 = sphi 0, %s94
    $region4: #{tpu_custom_call.1} parent=1 // loop_header_branch
      %15 = sbr.rel (%p13) target = $region8
    $region5: #{tpu_custom_call.1} parent=1 // loop_body
      %s17 = ssub.s32 %s12, 1
      %s18 = ssub.s32 %s12, 2
      %s19 = sadd.s32 %s12, 1
      %s20 = ssub.s32 %s12, %s19
      %p21 = scmp.eq.s32.totalorder %s20, 0
      %s23 = sadd.s32 %s22, 1
      %s24 = scalar_select %p21, %s22, %s23
      %p27 = pneg %p21
      %p28 = scmp.eq.s32.totalorder %s12, 1
      %p29 = por %p27, %p28
      %p30 = scmp.ne.s32.totalorder %s22, %s25
      %p31 = scmp.eq.s32.totalorder %s12, 0
      %p32 = por %p30, %p31
      %p33 = scmp.ne.s32.totalorder %s22, %s25
      %p34 = scmp.eq.s32.totalorder %s17, 1
      %p35 = por %p33, %p34
      %p36 = scmp.ne.s32.totalorder %s25, %s26
      %p37 = scmp.eq.s32.totalorder %s17, 0
      %p38 = por %p36, %p37
      %p39 = scmp.ne.s32.totalorder %s25, %s26
      %p40 = scmp.eq.s32.totalorder %s18, 1
      %p41 = por %p39, %p40
      %p43 = scmp.ne.s32.totalorder %s26, %s42
      %p44 = scmp.eq.s32.totalorder %s18, 0
      %p45 = por %p43, %p44
      %s47 = sadd.s32 %s46, 1
      %p50 = scmp.eq.s32.totalorder %s12, 1
      %p51 = scmp.ne.s32.totalorder %s46, %s48
      %p52 = scmp.eq.s32.totalorder %s12, 0
      %p53 = por %p51, %p52
      %p54 = scmp.ne.s32.totalorder %s46, %s48
      %p55 = scmp.eq.s32.totalorder %s17, 1
      %p56 = por %p54, %p55
      %p57 = scmp.ne.s32.totalorder %s48, %s49
      %p58 = scmp.eq.s32.totalorder %s17, 0
      %p59 = por %p57, %p58
      %p60 = scmp.ne.s32.totalorder %s48, %s49
      %p61 = scmp.eq.s32.totalorder %s18, 1
      %p62 = por %p60, %p61
      %p64 = scmp.ne.s32.totalorder %s49, %s63
      %p65 = scmp.eq.s32.totalorder %s18, 0
      %p66 = por %p64, %p65
      %s68 = sadd.s32 %s67, 1
      %p71 = scmp.eq.s32.totalorder %s12, 1
      %p72 = scmp.ne.s32.totalorder %s67, %s69
      %p73 = scmp.eq.s32.totalorder %s12, 0
      %p74 = por %p72, %p73
      %p75 = scmp.ne.s32.totalorder %s67, %s69
      %p76 = scmp.eq.s32.totalorder %s17, 1
      %p77 = por %p75, %p76
      %p78 = scmp.ne.s32.totalorder %s69, %s70
      %p79 = scmp.eq.s32.totalorder %s17, 0
      %p80 = por %p78, %p79
      %p81 = scmp.ne.s32.totalorder %s69, %s70
      %p82 = scmp.eq.s32.totalorder %s18, 1
      %p83 = por %p81, %p82
      %p85 = scmp.ne.s32.totalorder %s70, %s84
      %p86 = scmp.eq.s32.totalorder %s18, 0
      %p87 = por %p85, %p86
      %s88 = ssub.s32 %s12, %s19
      %p89 = scmp.eq.s32.totalorder %s88, 0
      %s91 = sadd.s32 %s90, 1
      %s92 = scalar_select %p89, %s90, %s91
      %p95 = pneg %p89
      %p96 = scmp.eq.s32.totalorder %s12, 1
      %p97 = por %p95, %p96
      %p98 = scmp.ne.s32.totalorder %s90, %s93
      %p99 = scmp.eq.s32.totalorder %s12, 0
      %p100 = por %p98, %p99
      %p101 = scmp.ne.s32.totalorder %s90, %s93
      %p102 = scmp.eq.s32.totalorder %s17, 1
      %p103 = por %p101, %p102
      %p104 = scmp.ne.s32.totalorder %s93, %s94
      %p105 = scmp.eq.s32.totalorder %s17, 0
      %p106 = por %p104, %p105
      %p107 = scmp.ne.s32.totalorder %s93, %s94
      %p108 = scmp.eq.s32.totalorder %s18, 1
      %p109 = por %p107, %p108
      %p111 = scmp.ne.s32.totalorder %s94, %s110
      %p112 = scmp.eq.s32.totalorder %s18, 0
      %p113 = por %p111, %p112
      %p114 = scmp.le.s32.totalorder 1, %s12
      %p115 = scmp.lt.s32.totalorder %s12, 3
      %p116 = pnand %p114, %p115
      %p117 = pneg %p116
      // Predicated region
      $region9: #{tpu_custom_call.1} parent=5 // pred_check
        _
      $region10: #{tpu_custom_call.1} parent=5 // pred_check_branch
        %119 = sbr.rel (%p116) target = $region12
      $region11: #{tpu_custom_call.1} parent=5 // pred_region
        %s120 = ssub.s32 %s12, 1
        // Predicated region
        $region13: #{tpu_custom_call.1} parent=11 // pred_check
          %p121 = pneg %p59
        $region14: #{tpu_custom_call.1} parent=11 // pred_check_branch
          %123 = sbr.rel (%p121) target = $region16
        $region15: #{tpu_custom_call.1} parent=11 // pred_region
          _
        $region16: #{tpu_custom_call.1} parent=11 // pred_fallthru
          _
        // Predicated region
        $region17: #{tpu_custom_call.1} parent=11 // pred_check
          %p124 = pneg %p80
        $region18: #{tpu_custom_call.1} parent=11 // pred_check_branch
          %126 = sbr.rel (%p124) target = $region20
        $region19: #{tpu_custom_call.1} parent=11 // pred_region
          _
        $region20: #{tpu_custom_call.1} parent=11 // pred_fallthru
          _
      $region12: #{tpu_custom_call.1} parent=5 // pred_fallthru
        _
      %p127 = scmp.lt.s32.totalorder %s12, 2
      // Predicated region
      $region21: #{tpu_custom_call.1} parent=5 // pred_check
        %p128 = pneg %p127
      $region22: #{tpu_custom_call.1} parent=5 // pred_check_branch
        %130 = sbr.rel (%p128) target = $region24
      $region23: #{tpu_custom_call.1} parent=5 // pred_region
        // Predicated region
        $region25: #{tpu_custom_call.1} parent=23 // pred_check
          %p131 = pneg %p32
        $region26: #{tpu_custom_call.1} parent=23 // pred_check_branch
          %133 = sbr.rel (%p131) target = $region28
        $region27: #{tpu_custom_call.1} parent=23 // pred_region
          %p134 = scmp.lt.s32.totalorder %s12, 1
          %s135 = scalar_select %p134, %s12, 1
          %s136 = smul.addr %s135, 54
          %s137 = smul.addr %s136, 4
          %s138 = scalar_lea.vmem %s0, %s137
        $region28: #{tpu_custom_call.1} parent=23 // pred_fallthru
          _
      $region24: #{tpu_custom_call.1} parent=5 // pred_fallthru
        _
      %p139 = scmp.le.s32.totalorder 1, %s12
      %p140 = scmp.lt.s32.totalorder %s12, 3
      %p141 = pnand %p139, %p140
      %p142 = pneg %p141
      // Predicated region
      $region29: #{tpu_custom_call.1} parent=5 // pred_check
        _
      $region30: #{tpu_custom_call.1} parent=5 // pred_check_branch
        %144 = sbr.rel (%p141) target = $region32
      $region31: #{tpu_custom_call.1} parent=5 // pred_region
        %s145 = ssub.s32 %s12, 1
        %p146 = scmp.lt.s32.totalorder %s17, 1
        %s147 = scalar_select %p146, %s17, 1
        %s148 = smul.addr %s147, 54
        %s149 = smul.addr %s148, 4
        %s150 = scalar_lea.vmem %s0, %s149
        %p151 = pneg %p38
        %p152 = pneg %p35
        %p153 = pneg %p59
        %p154 = pneg %p56
        %p155 = pneg %p80
        %p156 = pneg %p77
        %p157 = pneg %p106
        %p158 = pneg %p103
        %s159 = sand.u32 %s93, 1
        %s160 = scalar_lea.sflag [#allocation4], %s159
        %s161 = sand.u32 %s93, 1
        %s162 = smul.addr %s161, 64
        %s163 = scalar_lea.vmem [#allocation3], %s162
        %p164 = scmp.lt.s32.totalorder %s17, 1
        %s165 = scalar_select %p164, %s17, 1
        %s166 = smul.addr %s165, 54
        %s167 = smul.addr %s166, 4
        %s168 = scalar_lea.vmem %s0, %s167
        %v170 = vld [vmem:[%s168] sm:$0xf]
        %v171 = vld [vmem:[%s168 + $0x4] sm:$0xf]
        %v172 = vld [vmem:[%s168 + $0xc] sm:$0xf]
        %v173 = vld [vmem:[%s168 + $0x10] sm:$0xf]
        %v174 = vld [vmem:[%s168 + $0x18] sm:$0xf]
        %v175 = vld [vmem:[%s168 + $0x1c] sm:$0xf]
        %v176 = vld [vmem:[%s168 + $0x24] sm:$0xf]
        %v177 = vld [vmem:[%s168 + $0x28] sm:$0xf]
        %v178 = vld [vmem:[%s168 + $0x30] sm:$0xf]
        %v179 = vld [vmem:[%s168 + $0x34] sm:$0xf]
        %v180 = vld [vmem:[%s168 + $0x3c] sm:$0xf]
        %v181 = vld [vmem:[%s168 + $0x40] sm:$0xf]
        %v182 = vld [vmem:[%s168 + $0x48] sm:$0xf]
        %v183 = vld [vmem:[%s168 + $0x4c] sm:$0xf]
        %v184 = vld [vmem:[%s168 + $0x54] sm:$0xf]
        %v185 = vld [vmem:[%s168 + $0x58] sm:$0xf]
        %v186 = vld [vmem:[%s168 + $0x60] sm:$0xf]
        %v187 = vld [vmem:[%s168 + $0x64] sm:$0xf]
        %v188 = vld [vmem:[%s168 + $0x6c] sm:$0xf]
        %v189 = vld [vmem:[%s168 + $0x70] sm:$0xf]
        %v190 = vld [vmem:[%s168 + $0x78] sm:$0xf]
        %v191 = vld [vmem:[%s168 + $0x7c] sm:$0xf]
        %v192 = vld [vmem:[%s168 + $0x84] sm:$0xf]
        %v193 = vld [vmem:[%s168 + $0x88] sm:$0xf]
        %v194 = vld [vmem:[%s168 + $0x90] sm:$0xf]
        %v195 = vld [vmem:[%s168 + $0x94] sm:$0xf]
        %v196 = vld [vmem:[%s168 + $0x9c] sm:$0xf]
        %v197 = vld [vmem:[%s168 + $0xa0] sm:$0xf]
        %v198 = vld [vmem:[%s168 + $0xa8] sm:$0xf]
        %v199 = vld [vmem:[%s168 + $0xac] sm:$0xf]
        %v200 = vld [vmem:[%s168 + $0xb4] sm:$0xf]
        %v201 = vld [vmem:[%s168 + $0xb8] sm:$0xf]
        %v234 = vunpack.c.l.b16 %v170
        %v235 = vunpack.c.l.b16 %v171
        %v236 = vunpack.c.l.b16 %v172
        %v237 = vunpack.c.l.b16 %v173
        %v238 = vunpack.c.l.b16 %v174
        %v239 = vunpack.c.l.b16 %v175
        %v240 = vunpack.c.l.b16 %v176
        %v241 = vunpack.c.l.b16 %v177
        %v242 = vunpack.c.l.b16 %v178
        %v243 = vunpack.c.l.b16 %v179
        %v244 = vunpack.c.l.b16 %v180
        %v245 = vunpack.c.l.b16 %v181
        %v246 = vunpack.c.l.b16 %v182
        %v247 = vunpack.c.l.b16 %v183
        %v248 = vunpack.c.l.b16 %v184
        %v249 = vunpack.c.l.b16 %v185
        %v250 = vunpack.c.l.b16 %v186
        %v251 = vunpack.c.l.b16 %v187
        %v252 = vunpack.c.l.b16 %v188
        %v253 = vunpack.c.l.b16 %v189
        %v254 = vunpack.c.l.b16 %v190
        %v255 = vunpack.c.l.b16 %v191
        %v256 = vunpack.c.l.b16 %v192
        %v257 = vunpack.c.l.b16 %v193
        %v258 = vunpack.c.l.b16 %v194
        %v259 = vunpack.c.l.b16 %v195
        %v260 = vunpack.c.l.b16 %v196
        %v261 = vunpack.c.l.b16 %v197
        %v262 = vunpack.c.l.b16 %v198
        %v263 = vunpack.c.l.b16 %v199
        %v264 = vunpack.c.l.b16 %v200
        %v265 = vunpack.c.l.b16 %v201
        %v266 = vpack.c.b16 %v235, %v234
        %v267 = vpack.c.b16 %v237, %v236
        %v268 = vpack.c.b16 %v239, %v238
        %v269 = vpack.c.b16 %v241, %v240
        %v270 = vpack.c.b16 %v243, %v242
        %v271 = vpack.c.b16 %v245, %v244
        %v272 = vpack.c.b16 %v247, %v246
        %v273 = vpack.c.b16 %v249, %v248
        %v274 = vpack.c.b16 %v251, %v250
        %v275 = vpack.c.b16 %v253, %v252
        %v276 = vpack.c.b16 %v255, %v254
        %v277 = vpack.c.b16 %v257, %v256
        %v278 = vpack.c.b16 %v259, %v258
        %v279 = vpack.c.b16 %v261, %v260
        %v280 = vpack.c.b16 %v263, %v262
        %v281 = vpack.c.b16 %v265, %v264
        %vm298 = vcmask 31744
        %299 = vst.msk [vmem:[#allocation2] sm:$0xff] %vm298, %v266
        %300 = vst.msk [vmem:[#allocation2 + $0x8] sm:$0xff] %vm298, %v267
        %301 = vst.msk [vmem:[#allocation2 + $0x10] sm:$0xff] %vm298, %v268
        %302 = vst.msk [vmem:[#allocation2 + $0x18] sm:$0xff] %vm298, %v269
        %303 = vst.msk [vmem:[#allocation2 + $0x20] sm:$0xff] %vm298, %v270
        %304 = vst.msk [vmem:[#allocation2 + $0x28] sm:$0xff] %vm298, %v271
        %305 = vst.msk [vmem:[#allocation2 + $0x30] sm:$0xff] %vm298, %v272
        %306 = vst.msk [vmem:[#allocation2 + $0x38] sm:$0xff] %vm298, %v273
        %307 = vst.msk [vmem:[#allocation2 + $0x40] sm:$0xff] %vm298, %v274
        %308 = vst.msk [vmem:[#allocation2 + $0x48] sm:$0xff] %vm298, %v275
        %309 = vst.msk [vmem:[#allocation2 + $0x50] sm:$0xff] %vm298, %v276
        %310 = vst.msk [vmem:[#allocation2 + $0x58] sm:$0xff] %vm298, %v277
        %311 = vst.msk [vmem:[#allocation2 + $0x60] sm:$0xff] %vm298, %v278
        %312 = vst.msk [vmem:[#allocation2 + $0x68] sm:$0xff] %vm298, %v279
        %313 = vst.msk [vmem:[#allocation2 + $0x70] sm:$0xff] %vm298, %v280
        %314 = vst.msk [vmem:[#allocation2 + $0x78] sm:$0xff] %vm298, %v281
        %v315 = vld [vmem:[%s168] sm:$0xf]
        %v316 = vld [vmem:[%s168 + $0x4] sm:$0xf]
        %v317 = vld [vmem:[%s168 + $0x8] sm:$0x1]
        %v318 = vld [vmem:[%s168 + $0xc] sm:$0xf]
        %v319 = vld [vmem:[%s168 + $0x10] sm:$0xf]
        %v320 = vld [vmem:[%s168 + $0x14] sm:$0x1]
        %v321 = vld [vmem:[%s168 + $0x18] sm:$0xf]
        %v322 = vld [vmem:[%s168 + $0x1c] sm:$0xf]
        %v323 = vld [vmem:[%s168 + $0x20] sm:$0x1]
        %v324 = vld [vmem:[%s168 + $0x24] sm:$0xf]
        %v325 = vld [vmem:[%s168 + $0x28] sm:$0xf]
        %v326 = vld [vmem:[%s168 + $0x2c] sm:$0x1]
        %v327 = vld [vmem:[%s168 + $0x30] sm:$0xf]
        %v328 = vld [vmem:[%s168 + $0x34] sm:$0xf]
        %v329 = vld [vmem:[%s168 + $0x38] sm:$0x1]
        %v330 = vld [vmem:[%s168 + $0x3c] sm:$0xf]
        %v331 = vld [vmem:[%s168 + $0x40] sm:$0xf]
        %v332 = vld [vmem:[%s168 + $0x44] sm:$0x1]
        %v333 = vld [vmem:[%s168 + $0x48] sm:$0xf]
        %v334 = vld [vmem:[%s168 + $0x4c] sm:$0xf]
        %v335 = vld [vmem:[%s168 + $0x50] sm:$0x1]
        %v336 = vld [vmem:[%s168 + $0x54] sm:$0xf]
        %v337 = vld [vmem:[%s168 + $0x58] sm:$0xf]
        %v338 = vld [vmem:[%s168 + $0x5c] sm:$0x1]
        %v339 = vld [vmem:[%s168 + $0x60] sm:$0xf]
        %v340 = vld [vmem:[%s168 + $0x64] sm:$0xf]
        %v341 = vld [vmem:[%s168 + $0x68] sm:$0x1]
        %v342 = vld [vmem:[%s168 + $0x6c] sm:$0xf]
        %v343 = vld [vmem:[%s168 + $0x70] sm:$0xf]
        %v344 = vld [vmem:[%s168 + $0x74] sm:$0x1]
        %v345 = vld [vmem:[%s168 + $0x78] sm:$0xf]
        %v346 = vld [vmem:[%s168 + $0x7c] sm:$0xf]
        %v347 = vld [vmem:[%s168 + $0x80] sm:$0x1]
        %v348 = vld [vmem:[%s168 + $0x84] sm:$0xf]
        %v349 = vld [vmem:[%s168 + $0x88] sm:$0xf]
        %v350 = vld [vmem:[%s168 + $0x8c] sm:$0x1]
        %v351 = vld [vmem:[%s168 + $0x90] sm:$0xf]
        %v352 = vld [vmem:[%s168 + $0x94] sm:$0xf]
        %v353 = vld [vmem:[%s168 + $0x98] sm:$0x1]
        %v354 = vld [vmem:[%s168 + $0x9c] sm:$0xf]
        %v355 = vld [vmem:[%s168 + $0xa0] sm:$0xf]
        %v356 = vld [vmem:[%s168 + $0xa4] sm:$0x1]
        %v357 = vld [vmem:[%s168 + $0xa8] sm:$0xf]
        %v358 = vld [vmem:[%s168 + $0xac] sm:$0xf]
        %v359 = vld [vmem:[%s168 + $0xb0] sm:$0x1]
        %v360 = vld [vmem:[%s168 + $0xb4] sm:$0xf]
        %v361 = vld [vmem:[%s168 + $0xb8] sm:$0xf]
        %v362 = vld [vmem:[%s168 + $0xbc] sm:$0x1]
        %vm363 = vsmask.f32 3328
        %vm364 = vsmask.f32 7440
        %vm365 = vmor %vm363, %vm364
        %v367 = vshrl.u32 %v315, 16
        %v369 = vrot.slane %v367, 4
        %v370 = vshll.u32 %v315, 16
        %v372 = vrot.slane %v370, 5
        %v373 = vor.u32 %v369, %v372
        %v374 = vrot.slane %v373, 4
        %v376 = vshll.u32 %v316, 16
        %v378 = vrot.slane %v376, 5
        %v379 = vsel %vm365, %v374, %v378
        %v380 = vshrl.u32 %v316, 16
        %v382 = vrot.slane %v380, 4
        %v383 = vor.u32 %v382, %v378
        %v384 = vrot.slane %v383, 4
        %v386 = vshll.u32 %v317, 16
        %v388 = vrot.slane %v386, 5
        %v389 = vsel %vm365, %v384, %v388
        %v391 = vshrl.u32 %v318, 16
        %v393 = vrot.slane %v391, 4
        %v394 = vshll.u32 %v318, 16
        %v396 = vrot.slane %v394, 5
        %v397 = vor.u32 %v393, %v396
        %v398 = vrot.slane %v397, 4
        %v400 = vshll.u32 %v319, 16
        %v402 = vrot.slane %v400, 5
        %v403 = vsel %vm365, %v398, %v402
        %v404 = vshrl.u32 %v319, 16
        %v406 = vrot.slane %v404, 4
        %v407 = vor.u32 %v406, %v402
        %v408 = vrot.slane %v407, 4
        %v410 = vshll.u32 %v320, 16
        %v412 = vrot.slane %v410, 5
        %v413 = vsel %vm365, %v408, %v412
        %v415 = vshrl.u32 %v321, 16
        %v417 = vrot.slane %v415, 4
        %v418 = vshll.u32 %v321, 16
        %v420 = vrot.slane %v418, 5
        %v421 = vor.u32 %v417, %v420
        %v422 = vrot.slane %v421, 4
        %v424 = vshll.u32 %v322, 16
        %v426 = vrot.slane %v424, 5
        %v427 = vsel %vm365, %v422, %v426
        %v428 = vshrl.u32 %v322, 16
        %v430 = vrot.slane %v428, 4
        %v431 = vor.u32 %v430, %v426
        %v432 = vrot.slane %v431, 4
        %v434 = vshll.u32 %v323, 16
        %v436 = vrot.slane %v434, 5
        %v437 = vsel %vm365, %v432, %v436
        %v439 = vshrl.u32 %v324, 16
        %v441 = vrot.slane %v439, 4
        %v442 = vshll.u32 %v324, 16
        %v444 = vrot.slane %v442, 5
        %v445 = vor.u32 %v441, %v444
        %v446 = vrot.slane %v445, 4
        %v448 = vshll.u32 %v325, 16
        %v450 = vrot.slane %v448, 5
        %v451 = vsel %vm365, %v446, %v450
        %v452 = vshrl.u32 %v325, 16
        %v454 = vrot.slane %v452, 4
        %v455 = vor.u32 %v454, %v450
        %v456 = vrot.slane %v455, 4
        %v458 = vshll.u32 %v326, 16
        %v460 = vrot.slane %v458, 5
        %v461 = vsel %vm365, %v456, %v460
        %v463 = vshrl.u32 %v327, 16
        %v465 = vrot.slane %v463, 4
        %v466 = vshll.u32 %v327, 16
        %v468 = vrot.slane %v466, 5
        %v469 = vor.u32 %v465, %v468
        %v470 = vrot.slane %v469, 4
        %v472 = vshll.u32 %v328, 16
        %v474 = vrot.slane %v472, 5
        %v475 = vsel %vm365, %v470, %v474
        %v476 = vshrl.u32 %v328, 16
        %v478 = vrot.slane %v476, 4
        %v479 = vor.u32 %v478, %v474
        %v480 = vrot.slane %v479, 4
        %v482 = vshll.u32 %v329, 16
        %v484 = vrot.slane %v482, 5
        %v485 = vsel %vm365, %v480, %v484
        %v487 = vshrl.u32 %v330, 16
        %v489 = vrot.slane %v487, 4
        %v490 = vshll.u32 %v330, 16
        %v492 = vrot.slane %v490, 5
        %v493 = vor.u32 %v489, %v492
        %v494 = vrot.slane %v493, 4
        %v496 = vshll.u32 %v331, 16
        %v498 = vrot.slane %v496, 5
        %v499 = vsel %vm365, %v494, %v498
        %v500 = vshrl.u32 %v331, 16
        %v502 = vrot.slane %v500, 4
        %v503 = vor.u32 %v502, %v498
        %v504 = vrot.slane %v503, 4
        %v506 = vshll.u32 %v332, 16
        %v508 = vrot.slane %v506, 5
        %v509 = vsel %vm365, %v504, %v508
        %v511 = vshrl.u32 %v333, 16
        %v513 = vrot.slane %v511, 4
        %v514 = vshll.u32 %v333, 16
        %v516 = vrot.slane %v514, 5
        %v517 = vor.u32 %v513, %v516
        %v518 = vrot.slane %v517, 4
        %v520 = vshll.u32 %v334, 16
        %v522 = vrot.slane %v520, 5
        %v523 = vsel %vm365, %v518, %v522
        %v524 = vshrl.u32 %v334, 16
        %v526 = vrot.slane %v524, 4
        %v527 = vor.u32 %v526, %v522
        %v528 = vrot.slane %v527, 4
        %v530 = vshll.u32 %v335, 16
        %v532 = vrot.slane %v530, 5
        %v533 = vsel %vm365, %v528, %v532
        %v535 = vshrl.u32 %v336, 16
        %v537 = vrot.slane %v535, 4
        %v538 = vshll.u32 %v336, 16
        %v540 = vrot.slane %v538, 5
        %v541 = vor.u32 %v537, %v540
        %v542 = vrot.slane %v541, 4
        %v544 = vshll.u32 %v337, 16
        %v546 = vrot.slane %v544, 5
        %v547 = vsel %vm365, %v542, %v546
        %v548 = vshrl.u32 %v337, 16
        %v550 = vrot.slane %v548, 4
        %v551 = vor.u32 %v550, %v546
        %v552 = vrot.slane %v551, 4
        %v554 = vshll.u32 %v338, 16
        %v556 = vrot.slane %v554, 5
        %v557 = vsel %vm365, %v552, %v556
        %v559 = vshrl.u32 %v339, 16
        %v561 = vrot.slane %v559, 4
        %v562 = vshll.u32 %v339, 16
        %v564 = vrot.slane %v562, 5
        %v565 = vor.u32 %v561, %v564
        %v566 = vrot.slane %v565, 4
        %v568 = vshll.u32 %v340, 16
        %v570 = vrot.slane %v568, 5
        %v571 = vsel %vm365, %v566, %v570
        %v572 = vshrl.u32 %v340, 16
        %v574 = vrot.slane %v572, 4
        %v575 = vor.u32 %v574, %v570
        %v576 = vrot.slane %v575, 4
        %v578 = vshll.u32 %v341, 16
        %v580 = vrot.slane %v578, 5
        %v581 = vsel %vm365, %v576, %v580
        %v583 = vshrl.u32 %v342, 16
        %v585 = vrot.slane %v583, 4
        %v586 = vshll.u32 %v342, 16
        %v588 = vrot.slane %v586, 5
        %v589 = vor.u32 %v585, %v588
        %v590 = vrot.slane %v589, 4
        %v592 = vshll.u32 %v343, 16
        %v594 = vrot.slane %v592, 5
        %v595 = vsel %vm365, %v590, %v594
        %v596 = vshrl.u32 %v343, 16
        %v598 = vrot.slane %v596, 4
        %v599 = vor.u32 %v598, %v594
        %v600 = vrot.slane %v599, 4
        %v602 = vshll.u32 %v344, 16
        %v604 = vrot.slane %v602, 5
        %v605 = vsel %vm365, %v600, %v604
        %v607 = vshrl.u32 %v345, 16
        %v609 = vrot.slane %v607, 4
        %v610 = vshll.u32 %v345, 16
        %v612 = vrot.slane %v610, 5
        %v613 = vor.u32 %v609, %v612
        %v614 = vrot.slane %v613, 4
        %v616 = vshll.u32 %v346, 16
        %v618 = vrot.slane %v616, 5
        %v619 = vsel %vm365, %v614, %v618
        %v620 = vshrl.u32 %v346, 16
        %v622 = vrot.slane %v620, 4
        %v623 = vor.u32 %v622, %v618
        %v624 = vrot.slane %v623, 4
        %v626 = vshll.u32 %v347, 16
        %v628 = vrot.slane %v626, 5
        %v629 = vsel %vm365, %v624, %v628
        %v631 = vshrl.u32 %v348, 16
        %v633 = vrot.slane %v631, 4
        %v634 = vshll.u32 %v348, 16
        %v636 = vrot.slane %v634, 5
        %v637 = vor.u32 %v633, %v636
        %v638 = vrot.slane %v637, 4
        %v640 = vshll.u32 %v349, 16
        %v642 = vrot.slane %v640, 5
        %v643 = vsel %vm365, %v638, %v642
        %v644 = vshrl.u32 %v349, 16
        %v646 = vrot.slane %v644, 4
        %v647 = vor.u32 %v646, %v642
        %v648 = vrot.slane %v647, 4
        %v650 = vshll.u32 %v350, 16
        %v652 = vrot.slane %v650, 5
        %v653 = vsel %vm365, %v648, %v652
        %v655 = vshrl.u32 %v351, 16
        %v657 = vrot.slane %v655, 4
        %v658 = vshll.u32 %v351, 16
        %v660 = vrot.slane %v658, 5
        %v661 = vor.u32 %v657, %v660
        %v662 = vrot.slane %v661, 4
        %v664 = vshll.u32 %v352, 16
        %v666 = vrot.slane %v664, 5
        %v667 = vsel %vm365, %v662, %v666
        %v668 = vshrl.u32 %v352, 16
        %v670 = vrot.slane %v668, 4
        %v671 = vor.u32 %v670, %v666
        %v672 = vrot.slane %v671, 4
        %v674 = vshll.u32 %v353, 16
        %v676 = vrot.slane %v674, 5
        %v677 = vsel %vm365, %v672, %v676
        %v679 = vshrl.u32 %v354, 16
        %v681 = vrot.slane %v679, 4
        %v682 = vshll.u32 %v354, 16
        %v684 = vrot.slane %v682, 5
        %v685 = vor.u32 %v681, %v684
        %v686 = vrot.slane %v685, 4
        %v688 = vshll.u32 %v355, 16
        %v690 = vrot.slane %v688, 5
        %v691 = vsel %vm365, %v686, %v690
        %v692 = vshrl.u32 %v355, 16
        %v694 = vrot.slane %v692, 4
        %v695 = vor.u32 %v694, %v690
        %v696 = vrot.slane %v695, 4
        %v698 = vshll.u32 %v356, 16
        %v700 = vrot.slane %v698, 5
        %v701 = vsel %vm365, %v696, %v700
        %v703 = vshrl.u32 %v357, 16
        %v705 = vrot.slane %v703, 4
        %v706 = vshll.u32 %v357, 16
        %v708 = vrot.slane %v706, 5
        %v709 = vor.u32 %v705, %v708
        %v710 = vrot.slane %v709, 4
        %v712 = vshll.u32 %v358, 16
        %v714 = vrot.slane %v712, 5
        %v715 = vsel %vm365, %v710, %v714
        %v716 = vshrl.u32 %v358, 16
        %v718 = vrot.slane %v716, 4
        %v719 = vor.u32 %v718, %v714
        %v720 = vrot.slane %v719, 4
        %v722 = vshll.u32 %v359, 16
        %v724 = vrot.slane %v722, 5
        %v725 = vsel %vm365, %v720, %v724
        %v727 = vshrl.u32 %v360, 16
        %v729 = vrot.slane %v727, 4
        %v730 = vshll.u32 %v360, 16
        %v732 = vrot.slane %v730, 5
        %v733 = vor.u32 %v729, %v732
        %v734 = vrot.slane %v733, 4
        %v736 = vshll.u32 %v361, 16
        %v738 = vrot.slane %v736, 5
        %v739 = vsel %vm365, %v734, %v738
        %v740 = vshrl.u32 %v361, 16
        %v742 = vrot.slane %v740, 4
        %v743 = vor.u32 %v742, %v738
        %v744 = vrot.slane %v743, 4
        %v746 = vshll.u32 %v362, 16
        %v748 = vrot.slane %v746, 5
        %v749 = vsel %vm365, %v744, %v748
        %v750 = vunpack.c.l.b16 %v379
        %v751 = vunpack.c.l.b16 %v389
        %v752 = vunpack.c.l.b16 %v403
        %v753 = vunpack.c.l.b16 %v413
        %v754 = vunpack.c.l.b16 %v427
        %v755 = vunpack.c.l.b16 %v437
        %v756 = vunpack.c.l.b16 %v451
        %v757 = vunpack.c.l.b16 %v461
        %v758 = vunpack.c.l.b16 %v475
        %v759 = vunpack.c.l.b16 %v485
        %v760 = vunpack.c.l.b16 %v499
        %v761 = vunpack.c.l.b16 %v509
        %v762 = vunpack.c.l.b16 %v523
        %v763 = vunpack.c.l.b16 %v533
        %v764 = vunpack.c.l.b16 %v547
        %v765 = vunpack.c.l.b16 %v557
        %v766 = vunpack.c.l.b16 %v571
        %v767 = vunpack.c.l.b16 %v581
        %v768 = vunpack.c.l.b16 %v595
        %v769 = vunpack.c.l.b16 %v605
        %v770 = vunpack.c.l.b16 %v619
        %v771 = vunpack.c.l.b16 %v629
        %v772 = vunpack.c.l.b16 %v643
        %v773 = vunpack.c.l.b16 %v653
        %v774 = vunpack.c.l.b16 %v667
        %v775 = vunpack.c.l.b16 %v677
        %v776 = vunpack.c.l.b16 %v691
        %v777 = vunpack.c.l.b16 %v701
        %v778 = vunpack.c.l.b16 %v715
        %v779 = vunpack.c.l.b16 %v725
        %v780 = vunpack.c.l.b16 %v739
        %v781 = vunpack.c.l.b16 %v749
        %v782 = vpack.c.b16 %v751, %v750
        %v783 = vpack.c.b16 %v753, %v752
        %v784 = vpack.c.b16 %v755, %v754
        %v785 = vpack.c.b16 %v757, %v756
        %v786 = vpack.c.b16 %v759, %v758
        %v787 = vpack.c.b16 %v761, %v760
        %v788 = vpack.c.b16 %v763, %v762
        %v789 = vpack.c.b16 %v765, %v764
        %v790 = vpack.c.b16 %v767, %v766
        %v791 = vpack.c.b16 %v769, %v768
        %v792 = vpack.c.b16 %v771, %v770
        %v793 = vpack.c.b16 %v773, %v772
        %v794 = vpack.c.b16 %v775, %v774
        %v795 = vpack.c.b16 %v777, %v776
        %v796 = vpack.c.b16 %v779, %v778
        %v797 = vpack.c.b16 %v781, %v780
        %798 = vrot.lane.b32.xlu0 %v782, 4
        %v799 = vpop.permute.xlu0 %798
        %800 = vrot.lane.b32.xlu0 %v783, 4
        %v801 = vpop.permute.xlu0 %800
        %802 = vrot.lane.b32.xlu0 %v784, 4
        %v803 = vpop.permute.xlu0 %802
        %804 = vrot.lane.b32.xlu0 %v785, 4
        %v805 = vpop.permute.xlu0 %804
        %806 = vrot.lane.b32.xlu0 %v786, 4
        %v807 = vpop.permute.xlu0 %806
        %808 = vrot.lane.b32.xlu0 %v787, 4
        %v809 = vpop.permute.xlu0 %808
        %810 = vrot.lane.b32.xlu0 %v788, 4
        %v811 = vpop.permute.xlu0 %810
        %812 = vrot.lane.b32.xlu0 %v789, 4
        %v813 = vpop.permute.xlu0 %812
        %814 = vrot.lane.b32.xlu0 %v790, 4
        %v815 = vpop.permute.xlu0 %814
        %816 = vrot.lane.b32.xlu0 %v791, 4
        %v817 = vpop.permute.xlu0 %816
        %818 = vrot.lane.b32.xlu0 %v792, 4
        %v819 = vpop.permute.xlu0 %818
        %820 = vrot.lane.b32.xlu0 %v793, 4
        %v821 = vpop.permute.xlu0 %820
        %822 = vrot.lane.b32.xlu0 %v794, 4
        %v823 = vpop.permute.xlu0 %822
        %824 = vrot.lane.b32.xlu0 %v795, 4
        %v825 = vpop.permute.xlu0 %824
        %826 = vrot.lane.b32.xlu0 %v796, 4
        %v827 = vpop.permute.xlu0 %826
        %828 = vrot.lane.b32.xlu0 %v797, 4
        %v829 = vpop.permute.xlu0 %828
        %vm846 = vcmask 64544
        %847 = vst.msk [vmem:[#allocation2] sm:$0xff] %vm846, %v799
        %848 = vst.msk [vmem:[#allocation2 + $0x8] sm:$0xff] %vm846, %v801
        %849 = vst.msk [vmem:[#allocation2 + $0x10] sm:$0xff] %vm846, %v803
        %850 = vst.msk [vmem:[#allocation2 + $0x18] sm:$0xff] %vm846, %v805
        %851 = vst.msk [vmem:[#allocation2 + $0x20] sm:$0xff] %vm846, %v807
        %852 = vst.msk [vmem:[#allocation2 + $0x28] sm:$0xff] %vm846, %v809
        %853 = vst.msk [vmem:[#allocation2 + $0x30] sm:$0xff] %vm846, %v811
        %854 = vst.msk [vmem:[#allocation2 + $0x38] sm:$0xff] %vm846, %v813
        %855 = vst.msk [vmem:[#allocation2 + $0x40] sm:$0xff] %vm846, %v815
        %856 = vst.msk [vmem:[#allocation2 + $0x48] sm:$0xff] %vm846, %v817
        %857 = vst.msk [vmem:[#allocation2 + $0x50] sm:$0xff] %vm846, %v819
        %858 = vst.msk [vmem:[#allocation2 + $0x58] sm:$0xff] %vm846, %v821
        %859 = vst.msk [vmem:[#allocation2 + $0x60] sm:$0xff] %vm846, %v823
        %860 = vst.msk [vmem:[#allocation2 + $0x68] sm:$0xff] %vm846, %v825
        %861 = vst.msk [vmem:[#allocation2 + $0x70] sm:$0xff] %vm846, %v827
        %862 = vst.msk [vmem:[#allocation2 + $0x78] sm:$0xff] %vm846, %v829
        %v863 = vld [vmem:[%s168] sm:$0xe]
        %v864 = vld [vmem:[%s168 + $0x4] sm:$0xf]
        %v865 = vld [vmem:[%s168 + $0x8] sm:$0x1]
        %v866 = vld [vmem:[%s168 + $0xc] sm:$0xe]
        %v867 = vld [vmem:[%s168 + $0x10] sm:$0xf]
        %v868 = vld [vmem:[%s168 + $0x14] sm:$0x1]
        %v869 = vld [vmem:[%s168 + $0x18] sm:$0xe]
        %v870 = vld [vmem:[%s168 + $0x1c] sm:$0xf]
        %v871 = vld [vmem:[%s168 + $0x20] sm:$0x1]
        %v872 = vld [vmem:[%s168 + $0x24] sm:$0xe]
        %v873 = vld [vmem:[%s168 + $0x28] sm:$0xf]
        %v874 = vld [vmem:[%s168 + $0x2c] sm:$0x1]
        %v875 = vld [vmem:[%s168 + $0x30] sm:$0xe]
        %v876 = vld [vmem:[%s168 + $0x34] sm:$0xf]
        %v877 = vld [vmem:[%s168 + $0x38] sm:$0x1]
        %v878 = vld [vmem:[%s168 + $0x3c] sm:$0xe]
        %v879 = vld [vmem:[%s168 + $0x40] sm:$0xf]
        %v880 = vld [vmem:[%s168 + $0x44] sm:$0x1]
        %v881 = vld [vmem:[%s168 + $0x48] sm:$0xe]
        %v882 = vld [vmem:[%s168 + $0x4c] sm:$0xf]
        %v883 = vld [vmem:[%s168 + $0x50] sm:$0x1]
        %v884 = vld [vmem:[%s168 + $0x54] sm:$0xe]
        %v885 = vld [vmem:[%s168 + $0x58] sm:$0xf]
        %v886 = vld [vmem:[%s168 + $0x5c] sm:$0x1]
        %v887 = vld [vmem:[%s168 + $0x60] sm:$0xe]
        %v888 = vld [vmem:[%s168 + $0x64] sm:$0xf]
        %v889 = vld [vmem:[%s168 + $0x68] sm:$0x1]
        %v890 = vld [vmem:[%s168 + $0x6c] sm:$0xe]
        %v891 = vld [vmem:[%s168 + $0x70] sm:$0xf]
        %v892 = vld [vmem:[%s168 + $0x74] sm:$0x1]
        %v893 = vld [vmem:[%s168 + $0x78] sm:$0xe]
        %v894 = vld [vmem:[%s168 + $0x7c] sm:$0xf]
        %v895 = vld [vmem:[%s168 + $0x80] sm:$0x1]
        %v896 = vld [vmem:[%s168 + $0x84] sm:$0xe]
        %v897 = vld [vmem:[%s168 + $0x88] sm:$0xf]
        %v898 = vld [vmem:[%s168 + $0x8c] sm:$0x1]
        %v899 = vld [vmem:[%s168 + $0x90] sm:$0xe]
        %v900 = vld [vmem:[%s168 + $0x94] sm:$0xf]
        %v901 = vld [vmem:[%s168 + $0x98] sm:$0x1]
        %v902 = vld [vmem:[%s168 + $0x9c] sm:$0xe]
        %v903 = vld [vmem:[%s168 + $0xa0] sm:$0xf]
        %v904 = vld [vmem:[%s168 + $0xa4] sm:$0x1]
        %v905 = vld [vmem:[%s168 + $0xa8] sm:$0xe]
        %v906 = vld [vmem:[%s168 + $0xac] sm:$0xf]
        %v907 = vld [vmem:[%s168 + $0xb0] sm:$0x1]
        %v908 = vld [vmem:[%s168 + $0xb4] sm:$0xe]
        %v909 = vld [vmem:[%s168 + $0xb8] sm:$0xf]
        %v910 = vld [vmem:[%s168 + $0xbc] sm:$0x1]
        %vm959 = vcmask 1042432
        %vm960 = vcmask 1046532
        %vm961 = vmor %vm959, %vm960
        %v962 = vrot.slane %v863, 5
        %v963 = vrot.slane %v962, 4
        %v964 = vrot.slane %v864, 5
        %v965 = vsel %vm961, %v963, %v964
        %v966 = vrot.slane %v964, 4
        %v967 = vrot.slane %v865, 5
        %v968 = vsel %vm961, %v966, %v967
        %v969 = vrot.slane %v866, 5
        %v970 = vrot.slane %v969, 4
        %v971 = vrot.slane %v867, 5
        %v972 = vsel %vm961, %v970, %v971
        %v973 = vrot.slane %v971, 4
        %v974 = vrot.slane %v868, 5
        %v975 = vsel %vm961, %v973, %v974
        %v976 = vrot.slane %v869, 5
        %v977 = vrot.slane %v976, 4
        %v978 = vrot.slane %v870, 5
        %v979 = vsel %vm961, %v977, %v978
        %v980 = vrot.slane %v978, 4
        %v981 = vrot.slane %v871, 5
        %v982 = vsel %vm961, %v980, %v981
        %v983 = vrot.slane %v872, 5
        %v984 = vrot.slane %v983, 4
        %v985 = vrot.slane %v873, 5
        %v986 = vsel %vm961, %v984, %v985
        %v987 = vrot.slane %v985, 4
        %v988 = vrot.slane %v874, 5
        %v989 = vsel %vm961, %v987, %v988
        %v990 = vrot.slane %v875, 5
        %v991 = vrot.slane %v990, 4
        %v992 = vrot.slane %v876, 5
        %v993 = vsel %vm961, %v991, %v992
        %v994 = vrot.slane %v992, 4
        %v995 = vrot.slane %v877, 5
        %v996 = vsel %vm961, %v994, %v995
        %v997 = vrot.slane %v878, 5
        %v998 = vrot.slane %v997, 4
        %v999 = vrot.slane %v879, 5
        %v1000 = vsel %vm961, %v998, %v999
        %v1001 = vrot.slane %v999, 4
        %v1002 = vrot.slane %v880, 5
        %v1003 = vsel %vm961, %v1001, %v1002
        %v1004 = vrot.slane %v881, 5
        %v1005 = vrot.slane %v1004, 4
        %v1006 = vrot.slane %v882, 5
        %v1007 = vsel %vm961, %v1005, %v1006
        %v1008 = vrot.slane %v1006, 4
        %v1009 = vrot.slane %v883, 5
        %v1010 = vsel %vm961, %v1008, %v1009
        %v1011 = vrot.slane %v884, 5
        %v1012 = vrot.slane %v1011, 4
        %v1013 = vrot.slane %v885, 5
        %v1014 = vsel %vm961, %v1012, %v1013
        %v1015 = vrot.slane %v1013, 4
        %v1016 = vrot.slane %v886, 5
        %v1017 = vsel %vm961, %v1015, %v1016
        %v1018 = vrot.slane %v887, 5
        %v1019 = vrot.slane %v1018, 4
        %v1020 = vrot.slane %v888, 5
        %v1021 = vsel %vm961, %v1019, %v1020
        %v1022 = vrot.slane %v1020, 4
        %v1023 = vrot.slane %v889, 5
        %v1024 = vsel %vm961, %v1022, %v1023
        %v1025 = vrot.slane %v890, 5
        %v1026 = vrot.slane %v1025, 4
        %v1027 = vrot.slane %v891, 5
        %v1028 = vsel %vm961, %v1026, %v1027
        %v1029 = vrot.slane %v1027, 4
        %v1030 = vrot.slane %v892, 5
        %v1031 = vsel %vm961, %v1029, %v1030
        %v1032 = vrot.slane %v893, 5
        %v1033 = vrot.slane %v1032, 4
        %v1034 = vrot.slane %v894, 5
        %v1035 = vsel %vm961, %v1033, %v1034
        %v1036 = vrot.slane %v1034, 4
        %v1037 = vrot.slane %v895, 5
        %v1038 = vsel %vm961, %v1036, %v1037
        %v1039 = vrot.slane %v896, 5
        %v1040 = vrot.slane %v1039, 4
        %v1041 = vrot.slane %v897, 5
        %v1042 = vsel %vm961, %v1040, %v1041
        %v1043 = vrot.slane %v1041, 4
        %v1044 = vrot.slane %v898, 5
        %v1045 = vsel %vm961, %v1043, %v1044
        %v1046 = vrot.slane %v899, 5
        %v1047 = vrot.slane %v1046, 4
        %v1048 = vrot.slane %v900, 5
        %v1049 = vsel %vm961, %v1047, %v1048
        %v1050 = vrot.slane %v1048, 4
        %v1051 = vrot.slane %v901, 5
        %v1052 = vsel %vm961, %v1050, %v1051
        %v1053 = vrot.slane %v902, 5
        %v1054 = vrot.slane %v1053, 4
        %v1055 = vrot.slane %v903, 5
        %v1056 = vsel %vm961, %v1054, %v1055
        %v1057 = vrot.slane %v1055, 4
        %v1058 = vrot.slane %v904, 5
        %v1059 = vsel %vm961, %v1057, %v1058
        %v1060 = vrot.slane %v905, 5
        %v1061 = vrot.slane %v1060, 4
        %v1062 = vrot.slane %v906, 5
        %v1063 = vsel %vm961, %v1061, %v1062
        %v1064 = vrot.slane %v1062, 4
        %v1065 = vrot.slane %v907, 5
        %v1066 = vsel %vm961, %v1064, %v1065
        %v1067 = vrot.slane %v908, 5
        %v1068 = vrot.slane %v1067, 4
        %v1069 = vrot.slane %v909, 5
        %v1070 = vsel %vm961, %v1068, %v1069
        %v1071 = vrot.slane %v1069, 4
        %v1072 = vrot.slane %v910, 5
        %v1073 = vsel %vm961, %v1071, %v1072
        %v1074 = vunpack.c.l.b16 %v965
        %v1075 = vunpack.c.l.b16 %v968
        %v1076 = vunpack.c.l.b16 %v972
        %v1077 = vunpack.c.l.b16 %v975
        %v1078 = vunpack.c.l.b16 %v979
        %v1079 = vunpack.c.l.b16 %v982
        %v1080 = vunpack.c.l.b16 %v986
        %v1081 = vunpack.c.l.b16 %v989
        %v1082 = vunpack.c.l.b16 %v993
        %v1083 = vunpack.c.l.b16 %v996
        %v1084 = vunpack.c.l.b16 %v1000
        %v1085 = vunpack.c.l.b16 %v1003
        %v1086 = vunpack.c.l.b16 %v1007
        %v1087 = vunpack.c.l.b16 %v1010
        %v1088 = vunpack.c.l.b16 %v1014
        %v1089 = vunpack.c.l.b16 %v1017
        %v1090 = vunpack.c.l.b16 %v1021
        %v1091 = vunpack.c.l.b16 %v1024
        %v1092 = vunpack.c.l.b16 %v1028
        %v1093 = vunpack.c.l.b16 %v1031
        %v1094 = vunpack.c.l.b16 %v1035
        %v1095 = vunpack.c.l.b16 %v1038
        %v1096 = vunpack.c.l.b16 %v1042
        %v1097 = vunpack.c.l.b16 %v1045
        %v1098 = vunpack.c.l.b16 %v1049
        %v1099 = vunpack.c.l.b16 %v1052
        %v1100 = vunpack.c.l.b16 %v1056
        %v1101 = vunpack.c.l.b16 %v1059
        %v1102 = vunpack.c.l.b16 %v1063
        %v1103 = vunpack.c.l.b16 %v1066
        %v1104 = vunpack.c.l.b16 %v1070
        %v1105 = vunpack.c.l.b16 %v1073
        %v1106 = vpack.c.b16 %v1075, %v1074
        %v1107 = vpack.c.b16 %v1077, %v1076
        %v1108 = vpack.c.b16 %v1079, %v1078
        %v1109 = vpack.c.b16 %v1081, %v1080
        %v1110 = vpack.c.b16 %v1083, %v1082
        %v1111 = vpack.c.b16 %v1085, %v1084
        %v1112 = vpack.c.b16 %v1087, %v1086
        %v1113 = vpack.c.b16 %v1089, %v1088
        %v1114 = vpack.c.b16 %v1091, %v1090
        %v1115 = vpack.c.b16 %v1093, %v1092
        %v1116 = vpack.c.b16 %v1095, %v1094
        %v1117 = vpack.c.b16 %v1097, %v1096
        %v1118 = vpack.c.b16 %v1099, %v1098
        %v1119 = vpack.c.b16 %v1101, %v1100
        %v1120 = vpack.c.b16 %v1103, %v1102
        %v1121 = vpack.c.b16 %v1105, %v1104
        %1122 = vrot.lane.b32.xlu0 %v1106, 8
        %v1123 = vpop.permute.xlu0 %1122
        %1124 = vrot.lane.b32.xlu0 %v1107, 8
        %v1125 = vpop.permute.xlu0 %1124
        %1126 = vrot.lane.b32.xlu0 %v1108, 8
        %v1127 = vpop.permute.xlu0 %1126
        %1128 = vrot.lane.b32.xlu0 %v1109, 8
        %v1129 = vpop.permute.xlu0 %1128
        %1130 = vrot.lane.b32.xlu0 %v1110, 8
        %v1131 = vpop.permute.xlu0 %1130
        %1132 = vrot.lane.b32.xlu0 %v1111, 8
        %v1133 = vpop.permute.xlu0 %1132
        %1134 = vrot.lane.b32.xlu0 %v1112, 8
        %v1135 = vpop.permute.xlu0 %1134
        %1136 = vrot.lane.b32.xlu0 %v1113, 8
        %v1137 = vpop.permute.xlu0 %1136
        %1138 = vrot.lane.b32.xlu0 %v1114, 8
        %v1139 = vpop.permute.xlu0 %1138
        %1140 = vrot.lane.b32.xlu0 %v1115, 8
        %v1141 = vpop.permute.xlu0 %1140
        %1142 = vrot.lane.b32.xlu0 %v1116, 8
        %v1143 = vpop.permute.xlu0 %1142
        %1144 = vrot.lane.b32.xlu0 %v1117, 8
        %v1145 = vpop.permute.xlu0 %1144
        %1146 = vrot.lane.b32.xlu0 %v1118, 8
        %v1147 = vpop.permute.xlu0 %1146
        %1148 = vrot.lane.b32.xlu0 %v1119, 8
        %v1149 = vpop.permute.xlu0 %1148
        %1150 = vrot.lane.b32.xlu0 %v1120, 8
        %v1151 = vpop.permute.xlu0 %1150
        %1152 = vrot.lane.b32.xlu0 %v1121, 8
        %v1153 = vpop.permute.xlu0 %1152
        %vm1170 = vcmask 97344
        %1171 = vst.msk [vmem:[#allocation2] sm:$0xff] %vm1170, %v1123
        %1172 = vst.msk [vmem:[#allocation2 + $0x8] sm:$0xff] %vm1170, %v1125
        %1173 = vst.msk [vmem:[#allocation2 + $0x10] sm:$0xff] %vm1170, %v1127
        %1174 = vst.msk [vmem:[#allocation2 + $0x18] sm:$0xff] %vm1170, %v1129
        %1175 = vst.msk [vmem:[#allocation2 + $0x20] sm:$0xff] %vm1170, %v1131
        %1176 = vst.msk [vmem:[#allocation2 + $0x28] sm:$0xff] %vm1170, %v1133
        %1177 = vst.msk [vmem:[#allocation2 + $0x30] sm:$0xff] %vm1170, %v1135
        %1178 = vst.msk [vmem:[#allocation2 + $0x38] sm:$0xff] %vm1170, %v1137
        %1179 = vst.msk [vmem:[#allocation2 + $0x40] sm:$0xff] %vm1170, %v1139
        %1180 = vst.msk [vmem:[#allocation2 + $0x48] sm:$0xff] %vm1170, %v1141
        %1181 = vst.msk [vmem:[#allocation2 + $0x50] sm:$0xff] %vm1170, %v1143
        %1182 = vst.msk [vmem:[#allocation2 + $0x58] sm:$0xff] %vm1170, %v1145
        %1183 = vst.msk [vmem:[#allocation2 + $0x60] sm:$0xff] %vm1170, %v1147
        %1184 = vst.msk [vmem:[#allocation2 + $0x68] sm:$0xff] %vm1170, %v1149
        %1185 = vst.msk [vmem:[#allocation2 + $0x70] sm:$0xff] %vm1170, %v1151
        %1186 = vst.msk [vmem:[#allocation2 + $0x78] sm:$0xff] %vm1170, %v1153
        %s1187 = scalar_lea.vmem %s168, 12
        %v1188 = vld [vmem:[%s1187] sm:$0xf]
        %v1189 = vld [vmem:[%s1187 + $0x4] sm:$0xf]
        %v1190 = vld [vmem:[%s1187 + $0xc] sm:$0xf]
        %v1191 = vld [vmem:[%s1187 + $0x10] sm:$0xf]
        %v1192 = vld [vmem:[%s1187 + $0x18] sm:$0xf]
        %v1193 = vld [vmem:[%s1187 + $0x1c] sm:$0xf]
        %v1194 = vld [vmem:[%s1187 + $0x24] sm:$0xf]
        %v1195 = vld [vmem:[%s1187 + $0x28] sm:$0xf]
        %v1196 = vld [vmem:[%s1187 + $0x30] sm:$0xf]
        %v1197 = vld [vmem:[%s1187 + $0x34] sm:$0xf]
        %v1198 = vld [vmem:[%s1187 + $0x3c] sm:$0xf]
        %v1199 = vld [vmem:[%s1187 + $0x40] sm:$0xf]
        %v1200 = vld [vmem:[%s1187 + $0x48] sm:$0xf]
        %v1201 = vld [vmem:[%s1187 + $0x4c] sm:$0xf]
        %v1202 = vld [vmem:[%s1187 + $0x54] sm:$0xf]
        %v1203 = vld [vmem:[%s1187 + $0x58] sm:$0xf]
        %v1204 = vld [vmem:[%s1187 + $0x60] sm:$0xf]
        %v1205 = vld [vmem:[%s1187 + $0x64] sm:$0xf]
        %v1206 = vld [vmem:[%s1187 + $0x6c] sm:$0xf]
        %v1207 = vld [vmem:[%s1187 + $0x70] sm:$0xf]
        %v1208 = vld [vmem:[%s1187 + $0x78] sm:$0xf]
        %v1209 = vld [vmem:[%s1187 + $0x7c] sm:$0xf]
        %v1210 = vld [vmem:[%s1187 + $0x84] sm:$0xf]
        %v1211 = vld [vmem:[%s1187 + $0x88] sm:$0xf]
        %v1212 = vld [vmem:[%s1187 + $0x90] sm:$0xf]
        %v1213 = vld [vmem:[%s1187 + $0x94] sm:$0xf]
        %v1214 = vld [vmem:[%s1187 + $0x9c] sm:$0xf]
        %v1215 = vld [vmem:[%s1187 + $0xa0] sm:$0xf]
        %v1216 = vld [vmem:[%s1187 + $0xa8] sm:$0xf]
        %v1217 = vld [vmem:[%s1187 + $0xac] sm:$0xf]
        %v1218 = vld [vmem:[%s1187 + $0xb4] sm:$0xf]
        %v1219 = vld [vmem:[%s1187 + $0xb8] sm:$0xf]
        %v1252 = vunpack.c.l.b16 %v1188
        %v1253 = vunpack.c.l.b16 %v1189
        %v1254 = vunpack.c.l.b16 %v1190
        %v1255 = vunpack.c.l.b16 %v1191
        %v1256 = vunpack.c.l.b16 %v1192
        %v1257 = vunpack.c.l.b16 %v1193
        %v1258 = vunpack.c.l.b16 %v1194
        %v1259 = vunpack.c.l.b16 %v1195
        %v1260 = vunpack.c.l.b16 %v1196
        %v1261 = vunpack.c.l.b16 %v1197
        %v1262 = vunpack.c.l.b16 %v1198
        %v1263 = vunpack.c.l.b16 %v1199
        %v1264 = vunpack.c.l.b16 %v1200
        %v1265 = vunpack.c.l.b16 %v1201
        %v1266 = vunpack.c.l.b16 %v1202
        %v1267 = vunpack.c.l.b16 %v1203
        %v1268 = vunpack.c.l.b16 %v1204
        %v1269 = vunpack.c.l.b16 %v1205
        %v1270 = vunpack.c.l.b16 %v1206
        %v1271 = vunpack.c.l.b16 %v1207
        %v1272 = vunpack.c.l.b16 %v1208
        %v1273 = vunpack.c.l.b16 %v1209
        %v1274 = vunpack.c.l.b16 %v1210
        %v1275 = vunpack.c.l.b16 %v1211
        %v1276 = vunpack.c.l.b16 %v1212
        %v1277 = vunpack.c.l.b16 %v1213
        %v1278 = vunpack.c.l.b16 %v1214
        %v1279 = vunpack.c.l.b16 %v1215
        %v1280 = vunpack.c.l.b16 %v1216
        %v1281 = vunpack.c.l.b16 %v1217
        %v1282 = vunpack.c.l.b16 %v1218
        %v1283 = vunpack.c.l.b16 %v1219
        %v1284 = vpack.c.b16 %v1253, %v1252
        %v1285 = vpack.c.b16 %v1255, %v1254
        %v1286 = vpack.c.b16 %v1257, %v1256
        %v1287 = vpack.c.b16 %v1259, %v1258
        %v1288 = vpack.c.b16 %v1261, %v1260
        %v1289 = vpack.c.b16 %v1263, %v1262
        %v1290 = vpack.c.b16 %v1265, %v1264
        %v1291 = vpack.c.b16 %v1267, %v1266
        %v1292 = vpack.c.b16 %v1269, %v1268
        %v1293 = vpack.c.b16 %v1271, %v1270
        %v1294 = vpack.c.b16 %v1273, %v1272
        %v1295 = vpack.c.b16 %v1275, %v1274
        %v1296 = vpack.c.b16 %v1277, %v1276
        %v1297 = vpack.c.b16 %v1279, %v1278
        %v1298 = vpack.c.b16 %v1281, %v1280
        %v1299 = vpack.c.b16 %v1283, %v1282
        %1300 = vrot.lane.b32.xlu0 %v1284, 12
        %v1301 = vpop.permute.xlu0 %1300
        %1302 = vrot.lane.b32.xlu0 %v1285, 12
        %v1303 = vpop.permute.xlu0 %1302
        %1304 = vrot.lane.b32.xlu0 %v1286, 12
        %v1305 = vpop.permute.xlu0 %1304
        %1306 = vrot.lane.b32.xlu0 %v1287, 12
        %v1307 = vpop.permute.xlu0 %1306
        %1308 = vrot.lane.b32.xlu0 %v1288, 12
        %v1309 = vpop.permute.xlu0 %1308
        %1310 = vrot.lane.b32.xlu0 %v1289, 12
        %v1311 = vpop.permute.xlu0 %1310
        %1312 = vrot.lane.b32.xlu0 %v1290, 12
        %v1313 = vpop.permute.xlu0 %1312
        %1314 = vrot.lane.b32.xlu0 %v1291, 12
        %v1315 = vpop.permute.xlu0 %1314
        %1316 = vrot.lane.b32.xlu0 %v1292, 12
        %v1317 = vpop.permute.xlu0 %1316
        %1318 = vrot.lane.b32.xlu0 %v1293, 12
        %v1319 = vpop.permute.xlu0 %1318
        %1320 = vrot.lane.b32.xlu0 %v1294, 12
        %v1321 = vpop.permute.xlu0 %1320
        %1322 = vrot.lane.b32.xlu0 %v1295, 12
        %v1323 = vpop.permute.xlu0 %1322
        %1324 = vrot.lane.b32.xlu0 %v1296, 12
        %v1325 = vpop.permute.xlu0 %1324
        %1326 = vrot.lane.b32.xlu0 %v1297, 12
        %v1327 = vpop.permute.xlu0 %1326
        %1328 = vrot.lane.b32.xlu0 %v1298, 12
        %v1329 = vpop.permute.xlu0 %1328
        %1330 = vrot.lane.b32.xlu0 %v1299, 12
        %v1331 = vpop.permute.xlu0 %1330
        %vm1348 = vcmask 130144
        %1349 = vst.msk [vmem:[#allocation2] sm:$0xff] %vm1348, %v1301
        %1350 = vst.msk [vmem:[#allocation2 + $0x8] sm:$0xff] %vm1348, %v1303
        %1351 = vst.msk [vmem:[#allocation2 + $0x10] sm:$0xff] %vm1348, %v1305
        %1352 = vst.msk [vmem:[#allocation2 + $0x18] sm:$0xff] %vm1348, %v1307
        %1353 = vst.msk [vmem:[#allocation2 + $0x20] sm:$0xff] %vm1348, %v1309
        %1354 = vst.msk [vmem:[#allocation2 + $0x28] sm:$0xff] %vm1348, %v1311
        %1355 = vst.msk [vmem:[#allocation2 + $0x30] sm:$0xff] %vm1348, %v1313
        %1356 = vst.msk [vmem:[#allocation2 + $0x38] sm:$0xff] %vm1348, %v1315
        %1357 = vst.msk [vmem:[#allocation2 + $0x40] sm:$0xff] %vm1348, %v1317
        %1358 = vst.msk [vmem:[#allocation2 + $0x48] sm:$0xff] %vm1348, %v1319
        %1359 = vst.msk [vmem:[#allocation2 + $0x50] sm:$0xff] %vm1348, %v1321
        %1360 = vst.msk [vmem:[#allocation2 + $0x58] sm:$0xff] %vm1348, %v1323
        %1361 = vst.msk [vmem:[#allocation2 + $0x60] sm:$0xff] %vm1348, %v1325
        %1362 = vst.msk [vmem:[#allocation2 + $0x68] sm:$0xff] %vm1348, %v1327
        %1363 = vst.msk [vmem:[#allocation2 + $0x70] sm:$0xff] %vm1348, %v1329
        %1364 = vst.msk [vmem:[#allocation2 + $0x78] sm:$0xff] %vm1348, %v1331
        %v1365 = vld [vmem:[%s1187] sm:$0xf]
        %v1366 = vld [vmem:[%s1187 + $0x4] sm:$0xf]
        %v1367 = vld [vmem:[%s1187 + $0x8] sm:$0x1]
        %v1368 = vld [vmem:[%s1187 + $0xc] sm:$0xf]
        %v1369 = vld [vmem:[%s1187 + $0x10] sm:$0xf]
        %v1370 = vld [vmem:[%s1187 + $0x14] sm:$0x1]
        %v1371 = vld [vmem:[%s1187 + $0x18] sm:$0xf]
        %v1372 = vld [vmem:[%s1187 + $0x1c] sm:$0xf]
        %v1373 = vld [vmem:[%s1187 + $0x20] sm:$0x1]
        %v1374 = vld [vmem:[%s1187 + $0x24] sm:$0xf]
        %v1375 = vld [vmem:[%s1187 + $0x28] sm:$0xf]
        %v1376 = vld [vmem:[%s1187 + $0x2c] sm:$0x1]
        %v1377 = vld [vmem:[%s1187 + $0x30] sm:$0xf]
        %v1378 = vld [vmem:[%s1187 + $0x34] sm:$0xf]
        %v1379 = vld [vmem:[%s1187 + $0x38] sm:$0x1]
        %v1380 = vld [vmem:[%s1187 + $0x3c] sm:$0xf]
        %v1381 = vld [vmem:[%s1187 + $0x40] sm:$0xf]
        %v1382 = vld [vmem:[%s1187 + $0x44] sm:$0x1]
        %v1383 = vld [vmem:[%s1187 + $0x48] sm:$0xf]
        %v1384 = vld [vmem:[%s1187 + $0x4c] sm:$0xf]
        %v1385 = vld [vmem:[%s1187 + $0x50] sm:$0x1]
        %v1386 = vld [vmem:[%s1187 + $0x54] sm:$0xf]
        %v1387 = vld [vmem:[%s1187 + $0x58] sm:$0xf]
        %v1388 = vld [vmem:[%s1187 + $0x5c] sm:$0x1]
        %v1389 = vld [vmem:[%s1187 + $0x60] sm:$0xf]
        %v1390 = vld [vmem:[%s1187 + $0x64] sm:$0xf]
        %v1391 = vld [vmem:[%s1187 + $0x68] sm:$0x1]
        %v1392 = vld [vmem:[%s1187 + $0x6c] sm:$0xf]
        %v1393 = vld [vmem:[%s1187 + $0x70] sm:$0xf]
        %v1394 = vld [vmem:[%s1187 + $0x74] sm:$0x1]
        %v1395 = vld [vmem:[%s1187 + $0x78] sm:$0xf]
        %v1396 = vld [vmem:[%s1187 + $0x7c] sm:$0xf]
        %v1397 = vld [vmem:[%s1187 + $0x80] sm:$0x1]
        %v1398 = vld [vmem:[%s1187 + $0x84] sm:$0xf]
        %v1399 = vld [vmem:[%s1187 + $0x88] sm:$0xf]
        %v1400 = vld [vmem:[%s1187 + $0x8c] sm:$0x1]
        %v1401 = vld [vmem:[%s1187 + $0x90] sm:$0xf]
        %v1402 = vld [vmem:[%s1187 + $0x94] sm:$0xf]
        %v1403 = vld [vmem:[%s1187 + $0x98] sm:$0x1]
        %v1404 = vld [vmem:[%s1187 + $0x9c] sm:$0xf]
        %v1405 = vld [vmem:[%s1187 + $0xa0] sm:$0xf]
        %v1406 = vld [vmem:[%s1187 + $0xa4] sm:$0x1]
        %v1407 = vld [vmem:[%s1187 + $0xa8] sm:$0xf]
        %v1408 = vld [vmem:[%s1187 + $0xac] sm:$0xf]
        %v1409 = vld [vmem:[%s1187 + $0xb0] sm:$0x1]
        %v1410 = vld [vmem:[%s1187 + $0xb4] sm:$0xf]
        %v1411 = vld [vmem:[%s1187 + $0xb8] sm:$0xf]
        %v1412 = vld [vmem:[%s1187 + $0xbc] sm:$0x1]
        %v1414 = vshrl.u32 %v1365, 16
        %v1416 = vrot.slane %v1414, 4
        %v1417 = vshll.u32 %v1365, 16
        %v1419 = vrot.slane %v1417, 5
        %v1420 = vor.u32 %v1416, %v1419
        %v1421 = vrot.slane %v1420, 4
        %v1423 = vshll.u32 %v1366, 16
        %v1425 = vrot.slane %v1423, 5
        %v1426 = vsel %vm365, %v1421, %v1425
        %v1427 = vshrl.u32 %v1366, 16
        %v1429 = vrot.slane %v1427, 4
        %v1430 = vor.u32 %v1429, %v1425
        %v1431 = vrot.slane %v1430, 4
        %v1433 = vshll.u32 %v1367, 16
        %v1435 = vrot.slane %v1433, 5
        %v1436 = vsel %vm365, %v1431, %v1435
        %v1438 = vshrl.u32 %v1368, 16
        %v1440 = vrot.slane %v1438, 4
        %v1441 = vshll.u32 %v1368, 16
        %v1443 = vrot.slane %v1441, 5
        %v1444 = vor.u32 %v1440, %v1443
        %v1445 = vrot.slane %v1444, 4
        %v1447 = vshll.u32 %v1369, 16
        %v1449 = vrot.slane %v1447, 5
        %v1450 = vsel %vm365, %v1445, %v1449
        %v1451 = vshrl.u32 %v1369, 16
        %v1453 = vrot.slane %v1451, 4
        %v1454 = vor.u32 %v1453, %v1449
        %v1455 = vrot.slane %v1454, 4
        %v1457 = vshll.u32 %v1370, 16
        %v1459 = vrot.slane %v1457, 5
        %v1460 = vsel %vm365, %v1455, %v1459
        %v1462 = vshrl.u32 %v1371, 16
        %v1464 = vrot.slane %v1462, 4
        %v1465 = vshll.u32 %v1371, 16
        %v1467 = vrot.slane %v1465, 5
        %v1468 = vor.u32 %v1464, %v1467
        %v1469 = vrot.slane %v1468, 4
        %v1471 = vshll.u32 %v1372, 16
        %v1473 = vrot.slane %v1471, 5
        %v1474 = vsel %vm365, %v1469, %v1473
        %v1475 = vshrl.u32 %v1372, 16
        %v1477 = vrot.slane %v1475, 4
        %v1478 = vor.u32 %v1477, %v1473
        %v1479 = vrot.slane %v1478, 4
        %v1481 = vshll.u32 %v1373, 16
        %v1483 = vrot.slane %v1481, 5
        %v1484 = vsel %vm365, %v1479, %v1483
        %v1486 = vshrl.u32 %v1374, 16
        %v1488 = vrot.slane %v1486, 4
        %v1489 = vshll.u32 %v1374, 16
        %v1491 = vrot.slane %v1489, 5
        %v1492 = vor.u32 %v1488, %v1491
        %v1493 = vrot.slane %v1492, 4
        %v1495 = vshll.u32 %v1375, 16
        %v1497 = vrot.slane %v1495, 5
        %v1498 = vsel %vm365, %v1493, %v1497
        %v1499 = vshrl.u32 %v1375, 16
        %v1501 = vrot.slane %v1499, 4
        %v1502 = vor.u32 %v1501, %v1497
        %v1503 = vrot.slane %v1502, 4
        %v1505 = vshll.u32 %v1376, 16
        %v1507 = vrot.slane %v1505, 5
        %v1508 = vsel %vm365, %v1503, %v1507
        %v1510 = vshrl.u32 %v1377, 16
        %v1512 = vrot.slane %v1510, 4
        %v1513 = vshll.u32 %v1377, 16
        %v1515 = vrot.slane %v1513, 5
        %v1516 = vor.u32 %v1512, %v1515
        %v1517 = vrot.slane %v1516, 4
        %v1519 = vshll.u32 %v1378, 16
        %v1521 = vrot.slane %v1519, 5
        %v1522 = vsel %vm365, %v1517, %v1521
        %v1523 = vshrl.u32 %v1378, 16
        %v1525 = vrot.slane %v1523, 4
        %v1526 = vor.u32 %v1525, %v1521
        %v1527 = vrot.slane %v1526, 4
        %v1529 = vshll.u32 %v1379, 16
        %v1531 = vrot.slane %v1529, 5
        %v1532 = vsel %vm365, %v1527, %v1531
        %v1534 = vshrl.u32 %v1380, 16
        %v1536 = vrot.slane %v1534, 4
        %v1537 = vshll.u32 %v1380, 16
        %v1539 = vrot.slane %v1537, 5
        %v1540 = vor.u32 %v1536, %v1539
        %v1541 = vrot.slane %v1540, 4
        %v1543 = vshll.u32 %v1381, 16
        %v1545 = vrot.slane %v1543, 5
        %v1546 = vsel %vm365, %v1541, %v1545
        %v1547 = vshrl.u32 %v1381, 16
        %v1549 = vrot.slane %v1547, 4
        %v1550 = vor.u32 %v1549, %v1545
        %v1551 = vrot.slane %v1550, 4
        %v1553 = vshll.u32 %v1382, 16
        %v1555 = vrot.slane %v1553, 5
        %v1556 = vsel %vm365, %v1551, %v1555
        %v1558 = vshrl.u32 %v1383, 16
        %v1560 = vrot.slane %v1558, 4
        %v1561 = vshll.u32 %v1383, 16
        %v1563 = vrot.slane %v1561, 5
        %v1564 = vor.u32 %v1560, %v1563
        %v1565 = vrot.slane %v1564, 4
        %v1567 = vshll.u32 %v1384, 16
        %v1569 = vrot.slane %v1567, 5
        %v1570 = vsel %vm365, %v1565, %v1569
        %v1571 = vshrl.u32 %v1384, 16
        %v1573 = vrot.slane %v1571, 4
        %v1574 = vor.u32 %v1573, %v1569
        %v1575 = vrot.slane %v1574, 4
        %v1577 = vshll.u32 %v1385, 16
        %v1579 = vrot.slane %v1577, 5
        %v1580 = vsel %vm365, %v1575, %v1579
        %v1582 = vshrl.u32 %v1386, 16
        %v1584 = vrot.slane %v1582, 4
        %v1585 = vshll.u32 %v1386, 16
        %v1587 = vrot.slane %v1585, 5
        %v1588 = vor.u32 %v1584, %v1587
        %v1589 = vrot.slane %v1588, 4
        %v1591 = vshll.u32 %v1387, 16
        %v1593 = vrot.slane %v1591, 5
        %v1594 = vsel %vm365, %v1589, %v1593
        %v1595 = vshrl.u32 %v1387, 16
        %v1597 = vrot.slane %v1595, 4
        %v1598 = vor.u32 %v1597, %v1593
        %v1599 = vrot.slane %v1598, 4
        %v1601 = vshll.u32 %v1388, 16
        %v1603 = vrot.slane %v1601, 5
        %v1604 = vsel %vm365, %v1599, %v1603
        %v1606 = vshrl.u32 %v1389, 16
        %v1608 = vrot.slane %v1606, 4
        %v1609 = vshll.u32 %v1389, 16
        %v1611 = vrot.slane %v1609, 5
        %v1612 = vor.u32 %v1608, %v1611
        %v1613 = vrot.slane %v1612, 4
        %v1615 = vshll.u32 %v1390, 16
        %v1617 = vrot.slane %v1615, 5
        %v1618 = vsel %vm365, %v1613, %v1617
        %v1619 = vshrl.u32 %v1390, 16
        %v1621 = vrot.slane %v1619, 4
        %v1622 = vor.u32 %v1621, %v1617
        %v1623 = vrot.slane %v1622, 4
        %v1625 = vshll.u32 %v1391, 16
        %v1627 = vrot.slane %v1625, 5
        %v1628 = vsel %vm365, %v1623, %v1627
        %v1630 = vshrl.u32 %v1392, 16
        %v1632 = vrot.slane %v1630, 4
        %v1633 = vshll.u32 %v1392, 16
        %v1635 = vrot.slane %v1633, 5
        %v1636 = vor.u32 %v1632, %v1635
        %v1637 = vrot.slane %v1636, 4
        %v1639 = vshll.u32 %v1393, 16
        %v1641 = vrot.slane %v1639, 5
        %v1642 = vsel %vm365, %v1637, %v1641
        %v1643 = vshrl.u32 %v1393, 16
        %v1645 = vrot.slane %v1643, 4
        %v1646 = vor.u32 %v1645, %v1641
        %v1647 = vrot.slane %v1646, 4
        %v1649 = vshll.u32 %v1394, 16
        %v1651 = vrot.slane %v1649, 5
        %v1652 = vsel %vm365, %v1647, %v1651
        %v1654 = vshrl.u32 %v1395, 16
        %v1656 = vrot.slane %v1654, 4
        %v1657 = vshll.u32 %v1395, 16
        %v1659 = vrot.slane %v1657, 5
        %v1660 = vor.u32 %v1656, %v1659
        %v1661 = vrot.slane %v1660, 4
        %v1663 = vshll.u32 %v1396, 16
        %v1665 = vrot.slane %v1663, 5
        %v1666 = vsel %vm365, %v1661, %v1665
        %v1667 = vshrl.u32 %v1396, 16
        %v1669 = vrot.slane %v1667, 4
        %v1670 = vor.u32 %v1669, %v1665
        %v1671 = vrot.slane %v1670, 4
        %v1673 = vshll.u32 %v1397, 16
        %v1675 = vrot.slane %v1673, 5
        %v1676 = vsel %vm365, %v1671, %v1675
        %v1678 = vshrl.u32 %v1398, 16
        %v1680 = vrot.slane %v1678, 4
        %v1681 = vshll.u32 %v1398, 16
        %v1683 = vrot.slane %v1681, 5
        %v1684 = vor.u32 %v1680, %v1683
        %v1685 = vrot.slane %v1684, 4
        %v1687 = vshll.u32 %v1399, 16
        %v1689 = vrot.slane %v1687, 5
        %v1690 = vsel %vm365, %v1685, %v1689
        %v1691 = vshrl.u32 %v1399, 16
        %v1693 = vrot.slane %v1691, 4
        %v1694 = vor.u32 %v1693, %v1689
        %v1695 = vrot.slane %v1694, 4
        %v1697 = vshll.u32 %v1400, 16
        %v1699 = vrot.slane %v1697, 5
        %v1700 = vsel %vm365, %v1695, %v1699
        %v1702 = vshrl.u32 %v1401, 16
        %v1704 = vrot.slane %v1702, 4
        %v1705 = vshll.u32 %v1401, 16
        %v1707 = vrot.slane %v1705, 5
        %v1708 = vor.u32 %v1704, %v1707
        %v1709 = vrot.slane %v1708, 4
        %v1711 = vshll.u32 %v1402, 16
        %v1713 = vrot.slane %v1711, 5
        %v1714 = vsel %vm365, %v1709, %v1713
        %v1715 = vshrl.u32 %v1402, 16
        %v1717 = vrot.slane %v1715, 4
        %v1718 = vor.u32 %v1717, %v1713
        %v1719 = vrot.slane %v1718, 4
        %v1721 = vshll.u32 %v1403, 16
        %v1723 = vrot.slane %v1721, 5
        %v1724 = vsel %vm365, %v1719, %v1723
        %v1726 = vshrl.u32 %v1404, 16
        %v1728 = vrot.slane %v1726, 4
        %v1729 = vshll.u32 %v1404, 16
        %v1731 = vrot.slane %v1729, 5
        %v1732 = vor.u32 %v1728, %v1731
        %v1733 = vrot.slane %v1732, 4
        %v1735 = vshll.u32 %v1405, 16
        %v1737 = vrot.slane %v1735, 5
        %v1738 = vsel %vm365, %v1733, %v1737
        %v1739 = vshrl.u32 %v1405, 16
        %v1741 = vrot.slane %v1739, 4
        %v1742 = vor.u32 %v1741, %v1737
        %v1743 = vrot.slane %v1742, 4
        %v1745 = vshll.u32 %v1406, 16
        %v1747 = vrot.slane %v1745, 5
        %v1748 = vsel %vm365, %v1743, %v1747
        %v1750 = vshrl.u32 %v1407, 16
        %v1752 = vrot.slane %v1750, 4
        %v1753 = vshll.u32 %v1407, 16
        %v1755 = vrot.slane %v1753, 5
        %v1756 = vor.u32 %v1752, %v1755
        %v1757 = vrot.slane %v1756, 4
        %v1759 = vshll.u32 %v1408, 16
        %v1761 = vrot.slane %v1759, 5
        %v1762 = vsel %vm365, %v1757, %v1761
        %v1763 = vshrl.u32 %v1408, 16
        %v1765 = vrot.slane %v1763, 4
        %v1766 = vor.u32 %v1765, %v1761
        %v1767 = vrot.slane %v1766, 4
        %v1769 = vshll.u32 %v1409, 16
        %v1771 = vrot.slane %v1769, 5
        %v1772 = vsel %vm365, %v1767, %v1771
        %v1774 = vshrl.u32 %v1410, 16
        %v1776 = vrot.slane %v1774, 4
        %v1777 = vshll.u32 %v1410, 16
        %v1779 = vrot.slane %v1777, 5
        %v1780 = vor.u32 %v1776, %v1779
        %v1781 = vrot.slane %v1780, 4
        %v1783 = vshll.u32 %v1411, 16
        %v1785 = vrot.slane %v1783, 5
        %v1786 = vsel %vm365, %v1781, %v1785
        %v1787 = vshrl.u32 %v1411, 16
        %v1789 = vrot.slane %v1787, 4
        %v1790 = vor.u32 %v1789, %v1785
        %v1791 = vrot.slane %v1790, 4
        %v1793 = vshll.u32 %v1412, 16
        %v1795 = vrot.slane %v1793, 5
        %v1796 = vsel %vm365, %v1791, %v1795
        %v1797 = vunpack.c.l.b16 %v1426
        %v1798 = vunpack.c.l.b16 %v1436
        %v1799 = vunpack.c.l.b16 %v1450
        %v1800 = vunpack.c.l.b16 %v1460
        %v1801 = vunpack.c.l.b16 %v1474
        %v1802 = vunpack.c.l.b16 %v1484
        %v1803 = vunpack.c.l.b16 %v1498
        %v1804 = vunpack.c.l.b16 %v1508
        %v1805 = vunpack.c.l.b16 %v1522
        %v1806 = vunpack.c.l.b16 %v1532
        %v1807 = vunpack.c.l.b16 %v1546
        %v1808 = vunpack.c.l.b16 %v1556
        %v1809 = vunpack.c.l.b16 %v1570
        %v1810 = vunpack.c.l.b16 %v1580
        %v1811 = vunpack.c.l.b16 %v1594
        %v1812 = vunpack.c.l.b16 %v1604
        %v1813 = vunpack.c.l.b16 %v1618
        %v1814 = vunpack.c.l.b16 %v1628
        %v1815 = vunpack.c.l.b16 %v1642
        %v1816 = vunpack.c.l.b16 %v1652
        %v1817 = vunpack.c.l.b16 %v1666
        %v1818 = vunpack.c.l.b16 %v1676
        %v1819 = vunpack.c.l.b16 %v1690
        %v1820 = vunpack.c.l.b16 %v1700
        %v1821 = vunpack.c.l.b16 %v1714
        %v1822 = vunpack.c.l.b16 %v1724
        %v1823 = vunpack.c.l.b16 %v1738
        %v1824 = vunpack.c.l.b16 %v1748
        %v1825 = vunpack.c.l.b16 %v1762
        %v1826 = vunpack.c.l.b16 %v1772
        %v1827 = vunpack.c.l.b16 %v1786
        %v1828 = vunpack.c.l.b16 %v1796
        %v1829 = vpack.c.b16 %v1798, %v1797
        %v1830 = vpack.c.b16 %v1800, %v1799
        %v1831 = vpack.c.b16 %v1802, %v1801
        %v1832 = vpack.c.b16 %v1804, %v1803
        %v1833 = vpack.c.b16 %v1806, %v1805
        %v1834 = vpack.c.b16 %v1808, %v1807
        %v1835 = vpack.c.b16 %v1810, %v1809
        %v1836 = vpack.c.b16 %v1812, %v1811
        %v1837 = vpack.c.b16 %v1814, %v1813
        %v1838 = vpack.c.b16 %v1816, %v1815
        %v1839 = vpack.c.b16 %v1818, %v1817
        %v1840 = vpack.c.b16 %v1820, %v1819
        %v1841 = vpack.c.b16 %v1822, %v1821
        %v1842 = vpack.c.b16 %v1824, %v1823
        %v1843 = vpack.c.b16 %v1826, %v1825
        %v1844 = vpack.c.b16 %v1828, %v1827
        %1845 = vrot.lane.b32.xlu0 %v1829, 16
        %v1846 = vpop.permute.xlu0 %1845
        %1847 = vrot.lane.b32.xlu0 %v1830, 16
        %v1848 = vpop.permute.xlu0 %1847
        %1849 = vrot.lane.b32.xlu0 %v1831, 16
        %v1850 = vpop.permute.xlu0 %1849
        %1851 = vrot.lane.b32.xlu0 %v1832, 16
        %v1852 = vpop.permute.xlu0 %1851
        %1853 = vrot.lane.b32.xlu0 %v1833, 16
        %v1854 = vpop.permute.xlu0 %1853
        %1855 = vrot.lane.b32.xlu0 %v1834, 16
        %v1856 = vpop.permute.xlu0 %1855
        %1857 = vrot.lane.b32.xlu0 %v1835, 16
        %v1858 = vpop.permute.xlu0 %1857
        %1859 = vrot.lane.b32.xlu0 %v1836, 16
        %v1860 = vpop.permute.xlu0 %1859
        %1861 = vrot.lane.b32.xlu0 %v1837, 16
        %v1862 = vpop.permute.xlu0 %1861
        %1863 = vrot.lane.b32.xlu0 %v1838, 16
        %v1864 = vpop.permute.xlu0 %1863
        %1865 = vrot.lane.b32.xlu0 %v1839, 16
        %v1866 = vpop.permute.xlu0 %1865
        %1867 = vrot.lane.b32.xlu0 %v1840, 16
        %v1868 = vpop.permute.xlu0 %1867
        %1869 = vrot.lane.b32.xlu0 %v1841, 16
        %v1870 = vpop.permute.xlu0 %1869
        %1871 = vrot.lane.b32.xlu0 %v1842, 16
        %v1872 = vpop.permute.xlu0 %1871
        %1873 = vrot.lane.b32.xlu0 %v1843, 16
        %v1874 = vpop.permute.xlu0 %1873
        %1875 = vrot.lane.b32.xlu0 %v1844, 16
        %v1876 = vpop.permute.xlu0 %1875
        %vm1893 = vcmask 162944
        %1894 = vst.msk [vmem:[#allocation2] sm:$0xff] %vm1893, %v1846
        %1895 = vst.msk [vmem:[#allocation2 + $0x8] sm:$0xff] %vm1893, %v1848
        %1896 = vst.msk [vmem:[#allocation2 + $0x10] sm:$0xff] %vm1893, %v1850
        %1897 = vst.msk [vmem:[#allocation2 + $0x18] sm:$0xff] %vm1893, %v1852
        %1898 = vst.msk [vmem:[#allocation2 + $0x20] sm:$0xff] %vm1893, %v1854
        %1899 = vst.msk [vmem:[#allocation2 + $0x28] sm:$0xff] %vm1893, %v1856
        %1900 = vst.msk [vmem:[#allocation2 + $0x30] sm:$0xff] %vm1893, %v1858
        %1901 = vst.msk [vmem:[#allocation2 + $0x38] sm:$0xff] %vm1893, %v1860
        %1902 = vst.msk [vmem:[#allocation2 + $0x40] sm:$0xff] %vm1893, %v1862
        %1903 = vst.msk [vmem:[#allocation2 + $0x48] sm:$0xff] %vm1893, %v1864
        %1904 = vst.msk [vmem:[#allocation2 + $0x50] sm:$0xff] %vm1893, %v1866
        %1905 = vst.msk [vmem:[#allocation2 + $0x58] sm:$0xff] %vm1893, %v1868
        %1906 = vst.msk [vmem:[#allocation2 + $0x60] sm:$0xff] %vm1893, %v1870
        %1907 = vst.msk [vmem:[#allocation2 + $0x68] sm:$0xff] %vm1893, %v1872
        %1908 = vst.msk [vmem:[#allocation2 + $0x70] sm:$0xff] %vm1893, %v1874
        %1909 = vst.msk [vmem:[#allocation2 + $0x78] sm:$0xff] %vm1893, %v1876
        %v1910 = vld [vmem:[%s1187] sm:$0xe]
        %v1911 = vld [vmem:[%s1187 + $0x4] sm:$0xf]
        %v1912 = vld [vmem:[%s1187 + $0x8] sm:$0x1]
        %v1913 = vld [vmem:[%s1187 + $0xc] sm:$0xe]
        %v1914 = vld [vmem:[%s1187 + $0x10] sm:$0xf]
        %v1915 = vld [vmem:[%s1187 + $0x14] sm:$0x1]
        %v1916 = vld [vmem:[%s1187 + $0x18] sm:$0xe]
        %v1917 = vld [vmem:[%s1187 + $0x1c] sm:$0xf]
        %v1918 = vld [vmem:[%s1187 + $0x20] sm:$0x1]
        %v1919 = vld [vmem:[%s1187 + $0x24] sm:$0xe]
        %v1920 = vld [vmem:[%s1187 + $0x28] sm:$0xf]
        %v1921 = vld [vmem:[%s1187 + $0x2c] sm:$0x1]
        %v1922 = vld [vmem:[%s1187 + $0x30] sm:$0xe]
        %v1923 = vld [vmem:[%s1187 + $0x34] sm:$0xf]
        %v1924 = vld [vmem:[%s1187 + $0x38] sm:$0x1]
        %v1925 = vld [vmem:[%s1187 + $0x3c] sm:$0xe]
        %v1926 = vld [vmem:[%s1187 + $0x40] sm:$0xf]
        %v1927 = vld [vmem:[%s1187 + $0x44] sm:$0x1]
        %v1928 = vld [vmem:[%s1187 + $0x48] sm:$0xe]
        %v1929 = vld [vmem:[%s1187 + $0x4c] sm:$0xf]
        %v1930 = vld [vmem:[%s1187 + $0x50] sm:$0x1]
        %v1931 = vld [vmem:[%s1187 + $0x54] sm:$0xe]
        %v1932 = vld [vmem:[%s1187 + $0x58] sm:$0xf]
        %v1933 = vld [vmem:[%s1187 + $0x5c] sm:$0x1]
        %v1934 = vld [vmem:[%s1187 + $0x60] sm:$0xe]
        %v1935 = vld [vmem:[%s1187 + $0x64] sm:$0xf]
        %v1936 = vld [vmem:[%s1187 + $0x68] sm:$0x1]
        %v1937 = vld [vmem:[%s1187 + $0x6c] sm:$0xe]
        %v1938 = vld [vmem:[%s1187 + $0x70] sm:$0xf]
        %v1939 = vld [vmem:[%s1187 + $0x74] sm:$0x1]
        %v1940 = vld [vmem:[%s1187 + $0x78] sm:$0xe]
        %v1941 = vld [vmem:[%s1187 + $0x7c] sm:$0xf]
        %v1942 = vld [vmem:[%s1187 + $0x80] sm:$0x1]
        %v1943 = vld [vmem:[%s1187 + $0x84] sm:$0xe]
        %v1944 = vld [vmem:[%s1187 + $0x88] sm:$0xf]
        %v1945 = vld [vmem:[%s1187 + $0x8c] sm:$0x1]
        %v1946 = vld [vmem:[%s1187 + $0x90] sm:$0xe]
        %v1947 = vld [vmem:[%s1187 + $0x94] sm:$0xf]
        %v1948 = vld [vmem:[%s1187 + $0x98] sm:$0x1]
        %v1949 = vld [vmem:[%s1187 + $0x9c] sm:$0xe]
        %v1950 = vld [vmem:[%s1187 + $0xa0] sm:$0xf]
        %v1951 = vld [vmem:[%s1187 + $0xa4] sm:$0x1]
        %v1952 = vld [vmem:[%s1187 + $0xa8] sm:$0xe]
        %v1953 = vld [vmem:[%s1187 + $0xac] sm:$0xf]
        %v1954 = vld [vmem:[%s1187 + $0xb0] sm:$0x1]
        %v1955 = vld [vmem:[%s1187 + $0xb4] sm:$0xe]
        %v1956 = vld [vmem:[%s1187 + $0xb8] sm:$0xf]
        %v1957 = vld [vmem:[%s1187 + $0xbc] sm:$0x1]
        %v2006 = vrot.slane %v1910, 5
        %v2007 = vrot.slane %v2006, 4
        %v2008 = vrot.slane %v1911, 5
        %v2009 = vsel %vm961, %v2007, %v2008
        %v2010 = vrot.slane %v2008, 4
        %v2011 = vrot.slane %v1912, 5
        %v2012 = vsel %vm961, %v2010, %v2011
        %v2013 = vrot.slane %v1913, 5
        %v2014 = vrot.slane %v2013, 4
        %v2015 = vrot.slane %v1914, 5
        %v2016 = vsel %vm961, %v2014, %v2015
        %v2017 = vrot.slane %v2015, 4
        %v2018 = vrot.slane %v1915, 5
        %v2019 = vsel %vm961, %v2017, %v2018
        %v2020 = vrot.slane %v1916, 5
        %v2021 = vrot.slane %v2020, 4
        %v2022 = vrot.slane %v1917, 5
        %v2023 = vsel %vm961, %v2021, %v2022
        %v2024 = vrot.slane %v2022, 4
        %v2025 = vrot.slane %v1918, 5
        %v2026 = vsel %vm961, %v2024, %v2025
        %v2027 = vrot.slane %v1919, 5
        %v2028 = vrot.slane %v2027, 4
        %v2029 = vrot.slane %v1920, 5
        %v2030 = vsel %vm961, %v2028, %v2029
        %v2031 = vrot.slane %v2029, 4
        %v2032 = vrot.slane %v1921, 5
        %v2033 = vsel %vm961, %v2031, %v2032
        %v2034 = vrot.slane %v1922, 5
        %v2035 = vrot.slane %v2034, 4
        %v2036 = vrot.slane %v1923, 5
        %v2037 = vsel %vm961, %v2035, %v2036
        %v2038 = vrot.slane %v2036, 4
        %v2039 = vrot.slane %v1924, 5
        %v2040 = vsel %vm961, %v2038, %v2039
        %v2041 = vrot.slane %v1925, 5
        %v2042 = vrot.slane %v2041, 4
        %v2043 = vrot.slane %v1926, 5
        %v2044 = vsel %vm961, %v2042, %v2043
        %v2045 = vrot.slane %v2043, 4
        %v2046 = vrot.slane %v1927, 5
        %v2047 = vsel %vm961, %v2045, %v2046
        %v2048 = vrot.slane %v1928, 5
        %v2049 = vrot.slane %v2048, 4
        %v2050 = vrot.slane %v1929, 5
        %v2051 = vsel %vm961, %v2049, %v2050
        %v2052 = vrot.slane %v2050, 4
        %v2053 = vrot.slane %v1930, 5
        %v2054 = vsel %vm961, %v2052, %v2053
        %v2055 = vrot.slane %v1931, 5
        %v2056 = vrot.slane %v2055, 4
        %v2057 = vrot.slane %v1932, 5
        %v2058 = vsel %vm961, %v2056, %v2057
        %v2059 = vrot.slane %v2057, 4
        %v2060 = vrot.slane %v1933, 5
        %v2061 = vsel %vm961, %v2059, %v2060
        %v2062 = vrot.slane %v1934, 5
        %v2063 = vrot.slane %v2062, 4
        %v2064 = vrot.slane %v1935, 5
        %v2065 = vsel %vm961, %v2063, %v2064
        %v2066 = vrot.slane %v2064, 4
        %v2067 = vrot.slane %v1936, 5
        %v2068 = vsel %vm961, %v2066, %v2067
        %v2069 = vrot.slane %v1937, 5
        %v2070 = vrot.slane %v2069, 4
        %v2071 = vrot.slane %v1938, 5
        %v2072 = vsel %vm961, %v2070, %v2071
        %v2073 = vrot.slane %v2071, 4
        %v2074 = vrot.slane %v1939, 5
        %v2075 = vsel %vm961, %v2073, %v2074
        %v2076 = vrot.slane %v1940, 5
        %v2077 = vrot.slane %v2076, 4
        %v2078 = vrot.slane %v1941, 5
        %v2079 = vsel %vm961, %v2077, %v2078
        %v2080 = vrot.slane %v2078, 4
        %v2081 = vrot.slane %v1942, 5
        %v2082 = vsel %vm961, %v2080, %v2081
        %v2083 = vrot.slane %v1943, 5
        %v2084 = vrot.slane %v2083, 4
        %v2085 = vrot.slane %v1944, 5
        %v2086 = vsel %vm961, %v2084, %v2085
        %v2087 = vrot.slane %v2085, 4
        %v2088 = vrot.slane %v1945, 5
        %v2089 = vsel %vm961, %v2087, %v2088
        %v2090 = vrot.slane %v1946, 5
        %v2091 = vrot.slane %v2090, 4
        %v2092 = vrot.slane %v1947, 5
        %v2093 = vsel %vm961, %v2091, %v2092
        %v2094 = vrot.slane %v2092, 4
        %v2095 = vrot.slane %v1948, 5
        %v2096 = vsel %vm961, %v2094, %v2095
        %v2097 = vrot.slane %v1949, 5
        %v2098 = vrot.slane %v2097, 4
        %v2099 = vrot.slane %v1950, 5
        %v2100 = vsel %vm961, %v2098, %v2099
        %v2101 = vrot.slane %v2099, 4
        %v2102 = vrot.slane %v1951, 5
        %v2103 = vsel %vm961, %v2101, %v2102
        %v2104 = vrot.slane %v1952, 5
        %v2105 = vrot.slane %v2104, 4
        %v2106 = vrot.slane %v1953, 5
        %v2107 = vsel %vm961, %v2105, %v2106
        %v2108 = vrot.slane %v2106, 4
        %v2109 = vrot.slane %v1954, 5
        %v2110 = vsel %vm961, %v2108, %v2109
        %v2111 = vrot.slane %v1955, 5
        %v2112 = vrot.slane %v2111, 4
        %v2113 = vrot.slane %v1956, 5
        %v2114 = vsel %vm961, %v2112, %v2113
        %v2115 = vrot.slane %v2113, 4
        %v2116 = vrot.slane %v1957, 5
        %v2117 = vsel %vm961, %v2115, %v2116
        %v2118 = vunpack.c.l.b16 %v2009
        %v2119 = vunpack.c.l.b16 %v2012
        %v2120 = vunpack.c.l.b16 %v2016
        %v2121 = vunpack.c.l.b16 %v2019
        %v2122 = vunpack.c.l.b16 %v2023
        %v2123 = vunpack.c.l.b16 %v2026
        %v2124 = vunpack.c.l.b16 %v2030
        %v2125 = vunpack.c.l.b16 %v2033
        %v2126 = vunpack.c.l.b16 %v2037
        %v2127 = vunpack.c.l.b16 %v2040
        %v2128 = vunpack.c.l.b16 %v2044
        %v2129 = vunpack.c.l.b16 %v2047
        %v2130 = vunpack.c.l.b16 %v2051
        %v2131 = vunpack.c.l.b16 %v2054
        %v2132 = vunpack.c.l.b16 %v2058
        %v2133 = vunpack.c.l.b16 %v2061
        %v2134 = vunpack.c.l.b16 %v2065
        %v2135 = vunpack.c.l.b16 %v2068
        %v2136 = vunpack.c.l.b16 %v2072
        %v2137 = vunpack.c.l.b16 %v2075
        %v2138 = vunpack.c.l.b16 %v2079
        %v2139 = vunpack.c.l.b16 %v2082
        %v2140 = vunpack.c.l.b16 %v2086
        %v2141 = vunpack.c.l.b16 %v2089
        %v2142 = vunpack.c.l.b16 %v2093
        %v2143 = vunpack.c.l.b16 %v2096
        %v2144 = vunpack.c.l.b16 %v2100
        %v2145 = vunpack.c.l.b16 %v2103
        %v2146 = vunpack.c.l.b16 %v2107
        %v2147 = vunpack.c.l.b16 %v2110
        %v2148 = vunpack.c.l.b16 %v2114
        %v2149 = vunpack.c.l.b16 %v2117
        %v2150 = vpack.c.b16 %v2119, %v2118
        %v2151 = vpack.c.b16 %v2121, %v2120
        %v2152 = vpack.c.b16 %v2123, %v2122
        %v2153 = vpack.c.b16 %v2125, %v2124
        %v2154 = vpack.c.b16 %v2127, %v2126
        %v2155 = vpack.c.b16 %v2129, %v2128
        %v2156 = vpack.c.b16 %v2131, %v2130
        %v2157 = vpack.c.b16 %v2133, %v2132
        %v2158 = vpack.c.b16 %v2135, %v2134
        %v2159 = vpack.c.b16 %v2137, %v2136
        %v2160 = vpack.c.b16 %v2139, %v2138
        %v2161 = vpack.c.b16 %v2141, %v2140
        %v2162 = vpack.c.b16 %v2143, %v2142
        %v2163 = vpack.c.b16 %v2145, %v2144
        %v2164 = vpack.c.b16 %v2147, %v2146
        %v2165 = vpack.c.b16 %v2149, %v2148
        %2166 = vrot.lane.b32.xlu0 %v2150, 20
        %v2167 = vpop.permute.xlu0 %2166
        %2168 = vrot.lane.b32.xlu0 %v2151, 20
        %v2169 = vpop.permute.xlu0 %2168
        %2170 = vrot.lane.b32.xlu0 %v2152, 20
        %v2171 = vpop.permute.xlu0 %2170
        %2172 = vrot.lane.b32.xlu0 %v2153, 20
        %v2173 = vpop.permute.xlu0 %2172
        %2174 = vrot.lane.b32.xlu0 %v2154, 20
        %v2175 = vpop.permute.xlu0 %2174
        %2176 = vrot.lane.b32.xlu0 %v2155, 20
        %v2177 = vpop.permute.xlu0 %2176
        %2178 = vrot.lane.b32.xlu0 %v2156, 20
        %v2179 = vpop.permute.xlu0 %2178
        %2180 = vrot.lane.b32.xlu0 %v2157, 20
        %v2181 = vpop.permute.xlu0 %2180
        %2182 = vrot.lane.b32.xlu0 %v2158, 20
        %v2183 = vpop.permute.xlu0 %2182
        %2184 = vrot.lane.b32.xlu0 %v2159, 20
        %v2185 = vpop.permute.xlu0 %2184
        %2186 = vrot.lane.b32.xlu0 %v2160, 20
        %v2187 = vpop.permute.xlu0 %2186
        %2188 = vrot.lane.b32.xlu0 %v2161, 20
        %v2189 = vpop.permute.xlu0 %2188
        %2190 = vrot.lane.b32.xlu0 %v2162, 20
        %v2191 = vpop.permute.xlu0 %2190
        %2192 = vrot.lane.b32.xlu0 %v2163, 20
        %v2193 = vpop.permute.xlu0 %2192
        %2194 = vrot.lane.b32.xlu0 %v2164, 20
        %v2195 = vpop.permute.xlu0 %2194
        %2196 = vrot.lane.b32.xlu0 %v2165, 20
        %v2197 = vpop.permute.xlu0 %2196
        %vm2214 = vcmask 195744
        %2215 = vst.msk [vmem:[#allocation2] sm:$0xff] %vm2214, %v2167
        %2216 = vst.msk [vmem:[#allocation2 + $0x8] sm:$0xff] %vm2214, %v2169
        %2217 = vst.msk [vmem:[#allocation2 + $0x10] sm:$0xff] %vm2214, %v2171
        %2218 = vst.msk [vmem:[#allocation2 + $0x18] sm:$0xff] %vm2214, %v2173
        %2219 = vst.msk [vmem:[#allocation2 + $0x20] sm:$0xff] %vm2214, %v2175
        %2220 = vst.msk [vmem:[#allocation2 + $0x28] sm:$0xff] %vm2214, %v2177
        %2221 = vst.msk [vmem:[#allocation2 + $0x30] sm:$0xff] %vm2214, %v2179
        %2222 = vst.msk [vmem:[#allocation2 + $0x38] sm:$0xff] %vm2214, %v2181
        %2223 = vst.msk [vmem:[#allocation2 + $0x40] sm:$0xff] %vm2214, %v2183
        %2224 = vst.msk [vmem:[#allocation2 + $0x48] sm:$0xff] %vm2214, %v2185
        %2225 = vst.msk [vmem:[#allocation2 + $0x50] sm:$0xff] %vm2214, %v2187
        %2226 = vst.msk [vmem:[#allocation2 + $0x58] sm:$0xff] %vm2214, %v2189
        %2227 = vst.msk [vmem:[#allocation2 + $0x60] sm:$0xff] %vm2214, %v2191
        %2228 = vst.msk [vmem:[#allocation2 + $0x68] sm:$0xff] %vm2214, %v2193
        %2229 = vst.msk [vmem:[#allocation2 + $0x70] sm:$0xff] %vm2214, %v2195
        %2230 = vst.msk [vmem:[#allocation2 + $0x78] sm:$0xff] %vm2214, %v2197
        %s2231 = scalar_lea.vmem %s168, 24
        %v2232 = vld [vmem:[%s2231] sm:$0xf]
        %v2233 = vld [vmem:[%s2231 + $0x4] sm:$0xf]
        %v2234 = vld [vmem:[%s2231 + $0xc] sm:$0xf]
        %v2235 = vld [vmem:[%s2231 + $0x10] sm:$0xf]
        %v2236 = vld [vmem:[%s2231 + $0x18] sm:$0xf]
        %v2237 = vld [vmem:[%s2231 + $0x1c] sm:$0xf]
        %v2238 = vld [vmem:[%s2231 + $0x24] sm:$0xf]
        %v2239 = vld [vmem:[%s2231 + $0x28] sm:$0xf]
        %v2240 = vld [vmem:[%s2231 + $0x30] sm:$0xf]
        %v2241 = vld [vmem:[%s2231 + $0x34] sm:$0xf]
        %v2242 = vld [vmem:[%s2231 + $0x3c] sm:$0xf]
        %v2243 = vld [vmem:[%s2231 + $0x40] sm:$0xf]
        %v2244 = vld [vmem:[%s2231 + $0x48] sm:$0xf]
        %v2245 = vld [vmem:[%s2231 + $0x4c] sm:$0xf]
        %v2246 = vld [vmem:[%s2231 + $0x54] sm:$0xf]
        %v2247 = vld [vmem:[%s2231 + $0x58] sm:$0xf]
        %v2248 = vld [vmem:[%s2231 + $0x60] sm:$0xf]
        %v2249 = vld [vmem:[%s2231 + $0x64] sm:$0xf]
        %v2250 = vld [vmem:[%s2231 + $0x6c] sm:$0xf]
        %v2251 = vld [vmem:[%s2231 + $0x70] sm:$0xf]
        %v2252 = vld [vmem:[%s2231 + $0x78] sm:$0xf]
        %v2253 = vld [vmem:[%s2231 + $0x7c] sm:$0xf]
        %v2254 = vld [vmem:[%s2231 + $0x84] sm:$0xf]
        %v2255 = vld [vmem:[%s2231 + $0x88] sm:$0xf]
        %v2256 = vld [vmem:[%s2231 + $0x90] sm:$0xf]
        %v2257 = vld [vmem:[%s2231 + $0x94] sm:$0xf]
        %v2258 = vld [vmem:[%s2231 + $0x9c] sm:$0xf]
        %v2259 = vld [vmem:[%s2231 + $0xa0] sm:$0xf]
        %v2260 = vld [vmem:[%s2231 + $0xa8] sm:$0xf]
        %v2261 = vld [vmem:[%s2231 + $0xac] sm:$0xf]
        %v2262 = vld [vmem:[%s2231 + $0xb4] sm:$0xf]
        %v2263 = vld [vmem:[%s2231 + $0xb8] sm:$0xf]
        %v2296 = vunpack.c.l.b16 %v2232
        %v2297 = vunpack.c.l.b16 %v2233
        %v2298 = vunpack.c.l.b16 %v2234
        %v2299 = vunpack.c.l.b16 %v2235
        %v2300 = vunpack.c.l.b16 %v2236
        %v2301 = vunpack.c.l.b16 %v2237
        %v2302 = vunpack.c.l.b16 %v2238
        %v2303 = vunpack.c.l.b16 %v2239
        %v2304 = vunpack.c.l.b16 %v2240
        %v2305 = vunpack.c.l.b16 %v2241
        %v2306 = vunpack.c.l.b16 %v2242
        %v2307 = vunpack.c.l.b16 %v2243
        %v2308 = vunpack.c.l.b16 %v2244
        %v2309 = vunpack.c.l.b16 %v2245
        %v2310 = vunpack.c.l.b16 %v2246
        %v2311 = vunpack.c.l.b16 %v2247
        %v2312 = vunpack.c.l.b16 %v2248
        %v2313 = vunpack.c.l.b16 %v2249
        %v2314 = vunpack.c.l.b16 %v2250
        %v2315 = vunpack.c.l.b16 %v2251
        %v2316 = vunpack.c.l.b16 %v2252
        %v2317 = vunpack.c.l.b16 %v2253
        %v2318 = vunpack.c.l.b16 %v2254
        %v2319 = vunpack.c.l.b16 %v2255
        %v2320 = vunpack.c.l.b16 %v2256
        %v2321 = vunpack.c.l.b16 %v2257
        %v2322 = vunpack.c.l.b16 %v2258
        %v2323 = vunpack.c.l.b16 %v2259
        %v2324 = vunpack.c.l.b16 %v2260
        %v2325 = vunpack.c.l.b16 %v2261
        %v2326 = vunpack.c.l.b16 %v2262
        %v2327 = vunpack.c.l.b16 %v2263
        %v2328 = vpack.c.b16 %v2297, %v2296
        %v2329 = vpack.c.b16 %v2299, %v2298
        %v2330 = vpack.c.b16 %v2301, %v2300
        %v2331 = vpack.c.b16 %v2303, %v2302
        %v2332 = vpack.c.b16 %v2305, %v2304
        %v2333 = vpack.c.b16 %v2307, %v2306
        %v2334 = vpack.c.b16 %v2309, %v2308
        %v2335 = vpack.c.b16 %v2311, %v2310
        %v2336 = vpack.c.b16 %v2313, %v2312
        %v2337 = vpack.c.b16 %v2315, %v2314
        %v2338 = vpack.c.b16 %v2317, %v2316
        %v2339 = vpack.c.b16 %v2319, %v2318
        %v2340 = vpack.c.b16 %v2321, %v2320
        %v2341 = vpack.c.b16 %v2323, %v2322
        %v2342 = vpack.c.b16 %v2325, %v2324
        %v2343 = vpack.c.b16 %v2327, %v2326
        %2344 = vrot.lane.b32.xlu0 %v2328, 24
        %v2345 = vpop.permute.xlu0 %2344
        %2346 = vrot.lane.b32.xlu0 %v2329, 24
        %v2347 = vpop.permute.xlu0 %2346
        %2348 = vrot.lane.b32.xlu0 %v2330, 24
        %v2349 = vpop.permute.xlu0 %2348
        %2350 = vrot.lane.b32.xlu0 %v2331, 24
        %v2351 = vpop.permute.xlu0 %2350
        %2352 = vrot.lane.b32.xlu0 %v2332, 24
        %v2353 = vpop.permute.xlu0 %2352
        %2354 = vrot.lane.b32.xlu0 %v2333, 24
        %v2355 = vpop.permute.xlu0 %2354
        %2356 = vrot.lane.b32.xlu0 %v2334, 24
        %v2357 = vpop.permute.xlu0 %2356
        %2358 = vrot.lane.b32.xlu0 %v2335, 24
        %v2359 = vpop.permute.xlu0 %2358
        %2360 = vrot.lane.b32.xlu0 %v2336, 24
        %v2361 = vpop.permute.xlu0 %2360
        %2362 = vrot.lane.b32.xlu0 %v2337, 24
        %v2363 = vpop.permute.xlu0 %2362
        %2364 = vrot.lane.b32.xlu0 %v2338, 24
        %v2365 = vpop.permute.xlu0 %2364
        %2366 = vrot.lane.b32.xlu0 %v2339, 24
        %v2367 = vpop.permute.xlu0 %2366
        %2368 = vrot.lane.b32.xlu0 %v2340, 24
        %v2369 = vpop.permute.xlu0 %2368
        %2370 = vrot.lane.b32.xlu0 %v2341, 24
        %v2371 = vpop.permute.xlu0 %2370
        %2372 = vrot.lane.b32.xlu0 %v2342, 24
        %v2373 = vpop.permute.xlu0 %2372
        %2374 = vrot.lane.b32.xlu0 %v2343, 24
        %v2375 = vpop.permute.xlu0 %2374
        %vm2392 = vcmask 228544
        %2393 = vst.msk [vmem:[#allocation2] sm:$0xff] %vm2392, %v2345
        %2394 = vst.msk [vmem:[#allocation2 + $0x8] sm:$0xff] %vm2392, %v2347
        %2395 = vst.msk [vmem:[#allocation2 + $0x10] sm:$0xff] %vm2392, %v2349
        %2396 = vst.msk [vmem:[#allocation2 + $0x18] sm:$0xff] %vm2392, %v2351
        %2397 = vst.msk [vmem:[#allocation2 + $0x20] sm:$0xff] %vm2392, %v2353
        %2398 = vst.msk [vmem:[#allocation2 + $0x28] sm:$0xff] %vm2392, %v2355
        %2399 = vst.msk [vmem:[#allocation2 + $0x30] sm:$0xff] %vm2392, %v2357
        %2400 = vst.msk [vmem:[#allocation2 + $0x38] sm:$0xff] %vm2392, %v2359
        %2401 = vst.msk [vmem:[#allocation2 + $0x40] sm:$0xff] %vm2392, %v2361
        %2402 = vst.msk [vmem:[#allocation2 + $0x48] sm:$0xff] %vm2392, %v2363
        %2403 = vst.msk [vmem:[#allocation2 + $0x50] sm:$0xff] %vm2392, %v2365
        %2404 = vst.msk [vmem:[#allocation2 + $0x58] sm:$0xff] %vm2392, %v2367
        %2405 = vst.msk [vmem:[#allocation2 + $0x60] sm:$0xff] %vm2392, %v2369
        %2406 = vst.msk [vmem:[#allocation2 + $0x68] sm:$0xff] %vm2392, %v2371
        %2407 = vst.msk [vmem:[#allocation2 + $0x70] sm:$0xff] %vm2392, %v2373
        %2408 = vst.msk [vmem:[#allocation2 + $0x78] sm:$0xff] %vm2392, %v2375
        %v2409 = vld [vmem:[%s2231] sm:$0xf]
        %v2410 = vld [vmem:[%s2231 + $0x4] sm:$0xf]
        %v2411 = vld [vmem:[%s2231 + $0x8] sm:$0x1]
        %v2412 = vld [vmem:[%s2231 + $0xc] sm:$0xf]
        %v2413 = vld [vmem:[%s2231 + $0x10] sm:$0xf]
        %v2414 = vld [vmem:[%s2231 + $0x14] sm:$0x1]
        %v2415 = vld [vmem:[%s2231 + $0x18] sm:$0xf]
        %v2416 = vld [vmem:[%s2231 + $0x1c] sm:$0xf]
        %v2417 = vld [vmem:[%s2231 + $0x20] sm:$0x1]
        %v2418 = vld [vmem:[%s2231 + $0x24] sm:$0xf]
        %v2419 = vld [vmem:[%s2231 + $0x28] sm:$0xf]
        %v2420 = vld [vmem:[%s2231 + $0x2c] sm:$0x1]
        %v2421 = vld [vmem:[%s2231 + $0x30] sm:$0xf]
        %v2422 = vld [vmem:[%s2231 + $0x34] sm:$0xf]
        %v2423 = vld [vmem:[%s2231 + $0x38] sm:$0x1]
        %v2424 = vld [vmem:[%s2231 + $0x3c] sm:$0xf]
        %v2425 = vld [vmem:[%s2231 + $0x40] sm:$0xf]
        %v2426 = vld [vmem:[%s2231 + $0x44] sm:$0x1]
        %v2427 = vld [vmem:[%s2231 + $0x48] sm:$0xf]
        %v2428 = vld [vmem:[%s2231 + $0x4c] sm:$0xf]
        %v2429 = vld [vmem:[%s2231 + $0x50] sm:$0x1]
        %v2430 = vld [vmem:[%s2231 + $0x54] sm:$0xf]
        %v2431 = vld [vmem:[%s2231 + $0x58] sm:$0xf]
        %v2432 = vld [vmem:[%s2231 + $0x5c] sm:$0x1]
        %v2433 = vld [vmem:[%s2231 + $0x60] sm:$0xf]
        %v2434 = vld [vmem:[%s2231 + $0x64] sm:$0xf]
        %v2435 = vld [vmem:[%s2231 + $0x68] sm:$0x1]
        %v2436 = vld [vmem:[%s2231 + $0x6c] sm:$0xf]
        %v2437 = vld [vmem:[%s2231 + $0x70] sm:$0xf]
        %v2438 = vld [vmem:[%s2231 + $0x74] sm:$0x1]
        %v2439 = vld [vmem:[%s2231 + $0x78] sm:$0xf]
        %v2440 = vld [vmem:[%s2231 + $0x7c] sm:$0xf]
        %v2441 = vld [vmem:[%s2231 + $0x80] sm:$0x1]
        %v2442 = vld [vmem:[%s2231 + $0x84] sm:$0xf]
        %v2443 = vld [vmem:[%s2231 + $0x88] sm:$0xf]
        %v2444 = vld [vmem:[%s2231 + $0x8c] sm:$0x1]
        %v2445 = vld [vmem:[%s2231 + $0x90] sm:$0xf]
        %v2446 = vld [vmem:[%s2231 + $0x94] sm:$0xf]
        %v2447 = vld [vmem:[%s2231 + $0x98] sm:$0x1]
        %v2448 = vld [vmem:[%s2231 + $0x9c] sm:$0xf]
        %v2449 = vld [vmem:[%s2231 + $0xa0] sm:$0xf]
        %v2450 = vld [vmem:[%s2231 + $0xa4] sm:$0x1]
        %v2451 = vld [vmem:[%s2231 + $0xa8] sm:$0xf]
        %v2452 = vld [vmem:[%s2231 + $0xac] sm:$0xf]
        %v2453 = vld [vmem:[%s2231 + $0xb0] sm:$0x1]
        %v2454 = vld [vmem:[%s2231 + $0xb4] sm:$0xf]
        %v2455 = vld [vmem:[%s2231 + $0xb8] sm:$0xf]
        %v2456 = vld [vmem:[%s2231 + $0xbc] sm:$0x1]
        %v2458 = vshrl.u32 %v2409, 16
        %v2460 = vrot.slane %v2458, 4
        %v2461 = vshll.u32 %v2409, 16
        %v2463 = vrot.slane %v2461, 5
        %v2464 = vor.u32 %v2460, %v2463
        %v2465 = vrot.slane %v2464, 4
        %v2467 = vshll.u32 %v2410, 16
        %v2469 = vrot.slane %v2467, 5
        %v2470 = vsel %vm365, %v2465, %v2469
        %v2471 = vshrl.u32 %v2410, 16
        %v2473 = vrot.slane %v2471, 4
        %v2474 = vor.u32 %v2473, %v2469
        %v2475 = vrot.slane %v2474, 4
        %v2477 = vshll.u32 %v2411, 16
        %v2479 = vrot.slane %v2477, 5
        %v2480 = vsel %vm365, %v2475, %v2479
        %v2482 = vshrl.u32 %v2412, 16
        %v2484 = vrot.slane %v2482, 4
        %v2485 = vshll.u32 %v2412, 16
        %v2487 = vrot.slane %v2485, 5
        %v2488 = vor.u32 %v2484, %v2487
        %v2489 = vrot.slane %v2488, 4
        %v2491 = vshll.u32 %v2413, 16
        %v2493 = vrot.slane %v2491, 5
        %v2494 = vsel %vm365, %v2489, %v2493
        %v2495 = vshrl.u32 %v2413, 16
        %v2497 = vrot.slane %v2495, 4
        %v2498 = vor.u32 %v2497, %v2493
        %v2499 = vrot.slane %v2498, 4
        %v2501 = vshll.u32 %v2414, 16
        %v2503 = vrot.slane %v2501, 5
        %v2504 = vsel %vm365, %v2499, %v2503
        %v2506 = vshrl.u32 %v2415, 16
        %v2508 = vrot.slane %v2506, 4
        %v2509 = vshll.u32 %v2415, 16
        %v2511 = vrot.slane %v2509, 5
        %v2512 = vor.u32 %v2508, %v2511
        %v2513 = vrot.slane %v2512, 4
        %v2515 = vshll.u32 %v2416, 16
        %v2517 = vrot.slane %v2515, 5
        %v2518 = vsel %vm365, %v2513, %v2517
        %v2519 = vshrl.u32 %v2416, 16
        %v2521 = vrot.slane %v2519, 4
        %v2522 = vor.u32 %v2521, %v2517
        %v2523 = vrot.slane %v2522, 4
        %v2525 = vshll.u32 %v2417, 16
        %v2527 = vrot.slane %v2525, 5
        %v2528 = vsel %vm365, %v2523, %v2527
        %v2530 = vshrl.u32 %v2418, 16
        %v2532 = vrot.slane %v2530, 4
        %v2533 = vshll.u32 %v2418, 16
        %v2535 = vrot.slane %v2533, 5
        %v2536 = vor.u32 %v2532, %v2535
        %v2537 = vrot.slane %v2536, 4
        %v2539 = vshll.u32 %v2419, 16
        %v2541 = vrot.slane %v2539, 5
        %v2542 = vsel %vm365, %v2537, %v2541
        %v2543 = vshrl.u32 %v2419, 16
        %v2545 = vrot.slane %v2543, 4
        %v2546 = vor.u32 %v2545, %v2541
        %v2547 = vrot.slane %v2546, 4
        %v2549 = vshll.u32 %v2420, 16
        %v2551 = vrot.slane %v2549, 5
        %v2552 = vsel %vm365, %v2547, %v2551
        %v2554 = vshrl.u32 %v2421, 16
        %v2556 = vrot.slane %v2554, 4
        %v2557 = vshll.u32 %v2421, 16
        %v2559 = vrot.slane %v2557, 5
        %v2560 = vor.u32 %v2556, %v2559
        %v2561 = vrot.slane %v2560, 4
        %v2563 = vshll.u32 %v2422, 16
        %v2565 = vrot.slane %v2563, 5
        %v2566 = vsel %vm365, %v2561, %v2565
        %v2567 = vshrl.u32 %v2422, 16
        %v2569 = vrot.slane %v2567, 4
        %v2570 = vor.u32 %v2569, %v2565
        %v2571 = vrot.slane %v2570, 4
        %v2573 = vshll.u32 %v2423, 16
        %v2575 = vrot.slane %v2573, 5
        %v2576 = vsel %vm365, %v2571, %v2575
        %v2578 = vshrl.u32 %v2424, 16
        %v2580 = vrot.slane %v2578, 4
        %v2581 = vshll.u32 %v2424, 16
        %v2583 = vrot.slane %v2581, 5
        %v2584 = vor.u32 %v2580, %v2583
        %v2585 = vrot.slane %v2584, 4
        %v2587 = vshll.u32 %v2425, 16
        %v2589 = vrot.slane %v2587, 5
        %v2590 = vsel %vm365, %v2585, %v2589
        %v2591 = vshrl.u32 %v2425, 16
        %v2593 = vrot.slane %v2591, 4
        %v2594 = vor.u32 %v2593, %v2589
        %v2595 = vrot.slane %v2594, 4
        %v2597 = vshll.u32 %v2426, 16
        %v2599 = vrot.slane %v2597, 5
        %v2600 = vsel %vm365, %v2595, %v2599
        %v2602 = vshrl.u32 %v2427, 16
        %v2604 = vrot.slane %v2602, 4
        %v2605 = vshll.u32 %v2427, 16
        %v2607 = vrot.slane %v2605, 5
        %v2608 = vor.u32 %v2604, %v2607
        %v2609 = vrot.slane %v2608, 4
        %v2611 = vshll.u32 %v2428, 16
        %v2613 = vrot.slane %v2611, 5
        %v2614 = vsel %vm365, %v2609, %v2613
        %v2615 = vshrl.u32 %v2428, 16
        %v2617 = vrot.slane %v2615, 4
        %v2618 = vor.u32 %v2617, %v2613
        %v2619 = vrot.slane %v2618, 4
        %v2621 = vshll.u32 %v2429, 16
        %v2623 = vrot.slane %v2621, 5
        %v2624 = vsel %vm365, %v2619, %v2623
        %v2626 = vshrl.u32 %v2430, 16
        %v2628 = vrot.slane %v2626, 4
        %v2629 = vshll.u32 %v2430, 16
        %v2631 = vrot.slane %v2629, 5
        %v2632 = vor.u32 %v2628, %v2631
        %v2633 = vrot.slane %v2632, 4
        %v2635 = vshll.u32 %v2431, 16
        %v2637 = vrot.slane %v2635, 5
        %v2638 = vsel %vm365, %v2633, %v2637
        %v2639 = vshrl.u32 %v2431, 16
        %v2641 = vrot.slane %v2639, 4
        %v2642 = vor.u32 %v2641, %v2637
        %v2643 = vrot.slane %v2642, 4
        %v2645 = vshll.u32 %v2432, 16
        %v2647 = vrot.slane %v2645, 5
        %v2648 = vsel %vm365, %v2643, %v2647
        %v2650 = vshrl.u32 %v2433, 16
        %v2652 = vrot.slane %v2650, 4
        %v2653 = vshll.u32 %v2433, 16
        %v2655 = vrot.slane %v2653, 5
        %v2656 = vor.u32 %v2652, %v2655
        %v2657 = vrot.slane %v2656, 4
        %v2659 = vshll.u32 %v2434, 16
        %v2661 = vrot.slane %v2659, 5
        %v2662 = vsel %vm365, %v2657, %v2661
        %v2663 = vshrl.u32 %v2434, 16
        %v2665 = vrot.slane %v2663, 4
        %v2666 = vor.u32 %v2665, %v2661
        %v2667 = vrot.slane %v2666, 4
        %v2669 = vshll.u32 %v2435, 16
        %v2671 = vrot.slane %v2669, 5
        %v2672 = vsel %vm365, %v2667, %v2671
        %v2674 = vshrl.u32 %v2436, 16
        %v2676 = vrot.slane %v2674, 4
        %v2677 = vshll.u32 %v2436, 16
        %v2679 = vrot.slane %v2677, 5
        %v2680 = vor.u32 %v2676, %v2679
        %v2681 = vrot.slane %v2680, 4
        %v2683 = vshll.u32 %v2437, 16
        %v2685 = vrot.slane %v2683, 5
        %v2686 = vsel %vm365, %v2681, %v2685
        %v2687 = vshrl.u32 %v2437, 16
        %v2689 = vrot.slane %v2687, 4
        %v2690 = vor.u32 %v2689, %v2685
        %v2691 = vrot.slane %v2690, 4
        %v2693 = vshll.u32 %v2438, 16
        %v2695 = vrot.slane %v2693, 5
        %v2696 = vsel %vm365, %v2691, %v2695
        %v2698 = vshrl.u32 %v2439, 16
        %v2700 = vrot.slane %v2698, 4
        %v2701 = vshll.u32 %v2439, 16
        %v2703 = vrot.slane %v2701, 5
        %v2704 = vor.u32 %v2700, %v2703
        %v2705 = vrot.slane %v2704, 4
        %v2707 = vshll.u32 %v2440, 16
        %v2709 = vrot.slane %v2707, 5
        %v2710 = vsel %vm365, %v2705, %v2709
        %v2711 = vshrl.u32 %v2440, 16
        %v2713 = vrot.slane %v2711, 4
        %v2714 = vor.u32 %v2713, %v2709
        %v2715 = vrot.slane %v2714, 4
        %v2717 = vshll.u32 %v2441, 16
        %v2719 = vrot.slane %v2717, 5
        %v2720 = vsel %vm365, %v2715, %v2719
        %v2722 = vshrl.u32 %v2442, 16
        %v2724 = vrot.slane %v2722, 4
        %v2725 = vshll.u32 %v2442, 16
        %v2727 = vrot.slane %v2725, 5
        %v2728 = vor.u32 %v2724, %v2727
        %v2729 = vrot.slane %v2728, 4
        %v2731 = vshll.u32 %v2443, 16
        %v2733 = vrot.slane %v2731, 5
        %v2734 = vsel %vm365, %v2729, %v2733
        %v2735 = vshrl.u32 %v2443, 16
        %v2737 = vrot.slane %v2735, 4
        %v2738 = vor.u32 %v2737, %v2733
        %v2739 = vrot.slane %v2738, 4
        %v2741 = vshll.u32 %v2444, 16
        %v2743 = vrot.slane %v2741, 5
        %v2744 = vsel %vm365, %v2739, %v2743
        %v2746 = vshrl.u32 %v2445, 16
        %v2748 = vrot.slane %v2746, 4
        %v2749 = vshll.u32 %v2445, 16
        %v2751 = vrot.slane %v2749, 5
        %v2752 = vor.u32 %v2748, %v2751
        %v2753 = vrot.slane %v2752, 4
        %v2755 = vshll.u32 %v2446, 16
        %v2757 = vrot.slane %v2755, 5
        %v2758 = vsel %vm365, %v2753, %v2757
        %v2759 = vshrl.u32 %v2446, 16
        %v2761 = vrot.slane %v2759, 4
        %v2762 = vor.u32 %v2761, %v2757
        %v2763 = vrot.slane %v2762, 4
        %v2765 = vshll.u32 %v2447, 16
        %v2767 = vrot.slane %v2765, 5
        %v2768 = vsel %vm365, %v2763, %v2767
        %v2770 = vshrl.u32 %v2448, 16
        %v2772 = vrot.slane %v2770, 4
        %v2773 = vshll.u32 %v2448, 16
        %v2775 = vrot.slane %v2773, 5
        %v2776 = vor.u32 %v2772, %v2775
        %v2777 = vrot.slane %v2776, 4
        %v2779 = vshll.u32 %v2449, 16
        %v2781 = vrot.slane %v2779, 5
        %v2782 = vsel %vm365, %v2777, %v2781
        %v2783 = vshrl.u32 %v2449, 16
        %v2785 = vrot.slane %v2783, 4
        %v2786 = vor.u32 %v2785, %v2781
        %v2787 = vrot.slane %v2786, 4
        %v2789 = vshll.u32 %v2450, 16
        %v2791 = vrot.slane %v2789, 5
        %v2792 = vsel %vm365, %v2787, %v2791
        %v2794 = vshrl.u32 %v2451, 16
        %v2796 = vrot.slane %v2794, 4
        %v2797 = vshll.u32 %v2451, 16
        %v2799 = vrot.slane %v2797, 5
        %v2800 = vor.u32 %v2796, %v2799
        %v2801 = vrot.slane %v2800, 4
        %v2803 = vshll.u32 %v2452, 16
        %v2805 = vrot.slane %v2803, 5
        %v2806 = vsel %vm365, %v2801, %v2805
        %v2807 = vshrl.u32 %v2452, 16
        %v2809 = vrot.slane %v2807, 4
        %v2810 = vor.u32 %v2809, %v2805
        %v2811 = vrot.slane %v2810, 4
        %v2813 = vshll.u32 %v2453, 16
        %v2815 = vrot.slane %v2813, 5
        %v2816 = vsel %vm365, %v2811, %v2815
        %v2818 = vshrl.u32 %v2454, 16
        %v2820 = vrot.slane %v2818, 4
        %v2821 = vshll.u32 %v2454, 16
        %v2823 = vrot.slane %v2821, 5
        %v2824 = vor.u32 %v2820, %v2823
        %v2825 = vrot.slane %v2824, 4
        %v2827 = vshll.u32 %v2455, 16
        %v2829 = vrot.slane %v2827, 5
        %v2830 = vsel %vm365, %v2825, %v2829
        %v2831 = vshrl.u32 %v2455, 16
        %v2833 = vrot.slane %v2831, 4
        %v2834 = vor.u32 %v2833, %v2829
        %v2835 = vrot.slane %v2834, 4
        %v2837 = vshll.u32 %v2456, 16
        %v2839 = vrot.slane %v2837, 5
        %v2840 = vsel %vm365, %v2835, %v2839
        %v2841 = vunpack.c.l.b16 %v2470
        %v2842 = vunpack.c.l.b16 %v2480
        %v2843 = vunpack.c.l.b16 %v2494
        %v2844 = vunpack.c.l.b16 %v2504
        %v2845 = vunpack.c.l.b16 %v2518
        %v2846 = vunpack.c.l.b16 %v2528
        %v2847 = vunpack.c.l.b16 %v2542
        %v2848 = vunpack.c.l.b16 %v2552
        %v2849 = vunpack.c.l.b16 %v2566
        %v2850 = vunpack.c.l.b16 %v2576
        %v2851 = vunpack.c.l.b16 %v2590
        %v2852 = vunpack.c.l.b16 %v2600
        %v2853 = vunpack.c.l.b16 %v2614
        %v2854 = vunpack.c.l.b16 %v2624
        %v2855 = vunpack.c.l.b16 %v2638
        %v2856 = vunpack.c.l.b16 %v2648
        %v2857 = vunpack.c.l.b16 %v2662
        %v2858 = vunpack.c.l.b16 %v2672
        %v2859 = vunpack.c.l.b16 %v2686
        %v2860 = vunpack.c.l.b16 %v2696
        %v2861 = vunpack.c.l.b16 %v2710
        %v2862 = vunpack.c.l.b16 %v2720
        %v2863 = vunpack.c.l.b16 %v2734
        %v2864 = vunpack.c.l.b16 %v2744
        %v2865 = vunpack.c.l.b16 %v2758
        %v2866 = vunpack.c.l.b16 %v2768
        %v2867 = vunpack.c.l.b16 %v2782
        %v2868 = vunpack.c.l.b16 %v2792
        %v2869 = vunpack.c.l.b16 %v2806
        %v2870 = vunpack.c.l.b16 %v2816
        %v2871 = vunpack.c.l.b16 %v2830
        %v2872 = vunpack.c.l.b16 %v2840
        %v2873 = vpack.c.b16 %v2842, %v2841
        %v2874 = vpack.c.b16 %v2844, %v2843
        %v2875 = vpack.c.b16 %v2846, %v2845
        %v2876 = vpack.c.b16 %v2848, %v2847
        %v2877 = vpack.c.b16 %v2850, %v2849
        %v2878 = vpack.c.b16 %v2852, %v2851
        %v2879 = vpack.c.b16 %v2854, %v2853
        %v2880 = vpack.c.b16 %v2856, %v2855
        %v2881 = vpack.c.b16 %v2858, %v2857
        %v2882 = vpack.c.b16 %v2860, %v2859
        %v2883 = vpack.c.b16 %v2862, %v2861
        %v2884 = vpack.c.b16 %v2864, %v2863
        %v2885 = vpack.c.b16 %v2866, %v2865
        %v2886 = vpack.c.b16 %v2868, %v2867
        %v2887 = vpack.c.b16 %v2870, %v2869
        %v2888 = vpack.c.b16 %v2872, %v2871
        %2889 = vrot.lane.b32.xlu0 %v2873, 28
        %v2890 = vpop.permute.xlu0 %2889
        %2891 = vrot.lane.b32.xlu0 %v2874, 28
        %v2892 = vpop.permute.xlu0 %2891
        %2893 = vrot.lane.b32.xlu0 %v2875, 28
        %v2894 = vpop.permute.xlu0 %2893
        %2895 = vrot.lane.b32.xlu0 %v2876, 28
        %v2896 = vpop.permute.xlu0 %2895
        %2897 = vrot.lane.b32.xlu0 %v2877, 28
        %v2898 = vpop.permute.xlu0 %2897
        %2899 = vrot.lane.b32.xlu0 %v2878, 28
        %v2900 = vpop.permute.xlu0 %2899
        %2901 = vrot.lane.b32.xlu0 %v2879, 28
        %v2902 = vpop.permute.xlu0 %2901
        %2903 = vrot.lane.b32.xlu0 %v2880, 28
        %v2904 = vpop.permute.xlu0 %2903
        %2905 = vrot.lane.b32.xlu0 %v2881, 28
        %v2906 = vpop.permute.xlu0 %2905
        %2907 = vrot.lane.b32.xlu0 %v2882, 28
        %v2908 = vpop.permute.xlu0 %2907
        %2909 = vrot.lane.b32.xlu0 %v2883, 28
        %v2910 = vpop.permute.xlu0 %2909
        %2911 = vrot.lane.b32.xlu0 %v2884, 28
        %v2912 = vpop.permute.xlu0 %2911
        %2913 = vrot.lane.b32.xlu0 %v2885, 28
        %v2914 = vpop.permute.xlu0 %2913
        %2915 = vrot.lane.b32.xlu0 %v2886, 28
        %v2916 = vpop.permute.xlu0 %2915
        %2917 = vrot.lane.b32.xlu0 %v2887, 28
        %v2918 = vpop.permute.xlu0 %2917
        %2919 = vrot.lane.b32.xlu0 %v2888, 28
        %v2920 = vpop.permute.xlu0 %2919
        %vm2937 = vcmask 261344
        %2938 = vst.msk [vmem:[#allocation2] sm:$0xff] %vm2937, %v2890
        %2939 = vst.msk [vmem:[#allocation2 + $0x8] sm:$0xff] %vm2937, %v2892
        %2940 = vst.msk [vmem:[#allocation2 + $0x10] sm:$0xff] %vm2937, %v2894
        %2941 = vst.msk [vmem:[#allocation2 + $0x18] sm:$0xff] %vm2937, %v2896
        %2942 = vst.msk [vmem:[#allocation2 + $0x20] sm:$0xff] %vm2937, %v2898
        %2943 = vst.msk [vmem:[#allocation2 + $0x28] sm:$0xff] %vm2937, %v2900
        %2944 = vst.msk [vmem:[#allocation2 + $0x30] sm:$0xff] %vm2937, %v2902
        %2945 = vst.msk [vmem:[#allocation2 + $0x38] sm:$0xff] %vm2937, %v2904
        %2946 = vst.msk [vmem:[#allocation2 + $0x40] sm:$0xff] %vm2937, %v2906
        %2947 = vst.msk [vmem:[#allocation2 + $0x48] sm:$0xff] %vm2937, %v2908
        %2948 = vst.msk [vmem:[#allocation2 + $0x50] sm:$0xff] %vm2937, %v2910
        %2949 = vst.msk [vmem:[#allocation2 + $0x58] sm:$0xff] %vm2937, %v2912
        %2950 = vst.msk [vmem:[#allocation2 + $0x60] sm:$0xff] %vm2937, %v2914
        %2951 = vst.msk [vmem:[#allocation2 + $0x68] sm:$0xff] %vm2937, %v2916
        %2952 = vst.msk [vmem:[#allocation2 + $0x70] sm:$0xff] %vm2937, %v2918
        %2953 = vst.msk [vmem:[#allocation2 + $0x78] sm:$0xff] %vm2937, %v2920
        %v2954 = vld [vmem:[%s2231] sm:$0xe]
        %v2955 = vld [vmem:[%s2231 + $0x4] sm:$0xf]
        %v2956 = vld [vmem:[%s2231 + $0x8] sm:$0x1]
        %v2957 = vld [vmem:[%s2231 + $0xc] sm:$0xe]
        %v2958 = vld [vmem:[%s2231 + $0x10] sm:$0xf]
        %v2959 = vld [vmem:[%s2231 + $0x14] sm:$0x1]
        %v2960 = vld [vmem:[%s2231 + $0x18] sm:$0xe]
        %v2961 = vld [vmem:[%s2231 + $0x1c] sm:$0xf]
        %v2962 = vld [vmem:[%s2231 + $0x20] sm:$0x1]
        %v2963 = vld [vmem:[%s2231 + $0x24] sm:$0xe]
        %v2964 = vld [vmem:[%s2231 + $0x28] sm:$0xf]
        %v2965 = vld [vmem:[%s2231 + $0x2c] sm:$0x1]
        %v2966 = vld [vmem:[%s2231 + $0x30] sm:$0xe]
        %v2967 = vld [vmem:[%s2231 + $0x34] sm:$0xf]
        %v2968 = vld [vmem:[%s2231 + $0x38] sm:$0x1]
        %v2969 = vld [vmem:[%s2231 + $0x3c] sm:$0xe]
        %v2970 = vld [vmem:[%s2231 + $0x40] sm:$0xf]
        %v2971 = vld [vmem:[%s2231 + $0x44] sm:$0x1]
        %v2972 = vld [vmem:[%s2231 + $0x48] sm:$0xe]
        %v2973 = vld [vmem:[%s2231 + $0x4c] sm:$0xf]
        %v2974 = vld [vmem:[%s2231 + $0x50] sm:$0x1]
        %v2975 = vld [vmem:[%s2231 + $0x54] sm:$0xe]
        %v2976 = vld [vmem:[%s2231 + $0x58] sm:$0xf]
        %v2977 = vld [vmem:[%s2231 + $0x5c] sm:$0x1]
        %v2978 = vld [vmem:[%s2231 + $0x60] sm:$0xe]
        %v2979 = vld [vmem:[%s2231 + $0x64] sm:$0xf]
        %v2980 = vld [vmem:[%s2231 + $0x68] sm:$0x1]
        %v2981 = vld [vmem:[%s2231 + $0x6c] sm:$0xe]
        %v2982 = vld [vmem:[%s2231 + $0x70] sm:$0xf]
        %v2983 = vld [vmem:[%s2231 + $0x74] sm:$0x1]
        %v2984 = vld [vmem:[%s2231 + $0x78] sm:$0xe]
        %v2985 = vld [vmem:[%s2231 + $0x7c] sm:$0xf]
        %v2986 = vld [vmem:[%s2231 + $0x80] sm:$0x1]
        %v2987 = vld [vmem:[%s2231 + $0x84] sm:$0xe]
        %v2988 = vld [vmem:[%s2231 + $0x88] sm:$0xf]
        %v2989 = vld [vmem:[%s2231 + $0x8c] sm:$0x1]
        %v2990 = vld [vmem:[%s2231 + $0x90] sm:$0xe]
        %v2991 = vld [vmem:[%s2231 + $0x94] sm:$0xf]
        %v2992 = vld [vmem:[%s2231 + $0x98] sm:$0x1]
        %v2993 = vld [vmem:[%s2231 + $0x9c] sm:$0xe]
        %v2994 = vld [vmem:[%s2231 + $0xa0] sm:$0xf]
        %v2995 = vld [vmem:[%s2231 + $0xa4] sm:$0x1]
        %v2996 = vld [vmem:[%s2231 + $0xa8] sm:$0xe]
        %v2997 = vld [vmem:[%s2231 + $0xac] sm:$0xf]
        %v2998 = vld [vmem:[%s2231 + $0xb0] sm:$0x1]
        %v2999 = vld [vmem:[%s2231 + $0xb4] sm:$0xe]
        %v3000 = vld [vmem:[%s2231 + $0xb8] sm:$0xf]
        %v3001 = vld [vmem:[%s2231 + $0xbc] sm:$0x1]
        %v3050 = vrot.slane %v2954, 5
        %v3051 = vrot.slane %v3050, 4
        %v3052 = vrot.slane %v2955, 5
        %v3053 = vsel %vm961, %v3051, %v3052
        %v3054 = vrot.slane %v3052, 4
        %v3055 = vrot.slane %v2956, 5
        %v3056 = vsel %vm961, %v3054, %v3055
        %v3057 = vrot.slane %v2957, 5
        %v3058 = vrot.slane %v3057, 4
        %v3059 = vrot.slane %v2958, 5
        %v3060 = vsel %vm961, %v3058, %v3059
        %v3061 = vrot.slane %v3059, 4
        %v3062 = vrot.slane %v2959, 5
        %v3063 = vsel %vm961, %v3061, %v3062
        %v3064 = vrot.slane %v2960, 5
        %v3065 = vrot.slane %v3064, 4
        %v3066 = vrot.slane %v2961, 5
        %v3067 = vsel %vm961, %v3065, %v3066
        %v3068 = vrot.slane %v3066, 4
        %v3069 = vrot.slane %v2962, 5
        %v3070 = vsel %vm961, %v3068, %v3069
        %v3071 = vrot.slane %v2963, 5
        %v3072 = vrot.slane %v3071, 4
        %v3073 = vrot.slane %v2964, 5
        %v3074 = vsel %vm961, %v3072, %v3073
        %v3075 = vrot.slane %v3073, 4
        %v3076 = vrot.slane %v2965, 5
        %v3077 = vsel %vm961, %v3075, %v3076
        %v3078 = vrot.slane %v2966, 5
        %v3079 = vrot.slane %v3078, 4
        %v3080 = vrot.slane %v2967, 5
        %v3081 = vsel %vm961, %v3079, %v3080
        %v3082 = vrot.slane %v3080, 4
        %v3083 = vrot.slane %v2968, 5
        %v3084 = vsel %vm961, %v3082, %v3083
        %v3085 = vrot.slane %v2969, 5
        %v3086 = vrot.slane %v3085, 4
        %v3087 = vrot.slane %v2970, 5
        %v3088 = vsel %vm961, %v3086, %v3087
        %v3089 = vrot.slane %v3087, 4
        %v3090 = vrot.slane %v2971, 5
        %v3091 = vsel %vm961, %v3089, %v3090
        %v3092 = vrot.slane %v2972, 5
        %v3093 = vrot.slane %v3092, 4
        %v3094 = vrot.slane %v2973, 5
        %v3095 = vsel %vm961, %v3093, %v3094
        %v3096 = vrot.slane %v3094, 4
        %v3097 = vrot.slane %v2974, 5
        %v3098 = vsel %vm961, %v3096, %v3097
        %v3099 = vrot.slane %v2975, 5
        %v3100 = vrot.slane %v3099, 4
        %v3101 = vrot.slane %v2976, 5
        %v3102 = vsel %vm961, %v3100, %v3101
        %v3103 = vrot.slane %v3101, 4
        %v3104 = vrot.slane %v2977, 5
        %v3105 = vsel %vm961, %v3103, %v3104
        %v3106 = vrot.slane %v2978, 5
        %v3107 = vrot.slane %v3106, 4
        %v3108 = vrot.slane %v2979, 5
        %v3109 = vsel %vm961, %v3107, %v3108
        %v3110 = vrot.slane %v3108, 4
        %v3111 = vrot.slane %v2980, 5
        %v3112 = vsel %vm961, %v3110, %v3111
        %v3113 = vrot.slane %v2981, 5
        %v3114 = vrot.slane %v3113, 4
        %v3115 = vrot.slane %v2982, 5
        %v3116 = vsel %vm961, %v3114, %v3115
        %v3117 = vrot.slane %v3115, 4
        %v3118 = vrot.slane %v2983, 5
        %v3119 = vsel %vm961, %v3117, %v3118
        %v3120 = vrot.slane %v2984, 5
        %v3121 = vrot.slane %v3120, 4
        %v3122 = vrot.slane %v2985, 5
        %v3123 = vsel %vm961, %v3121, %v3122
        %v3124 = vrot.slane %v3122, 4
        %v3125 = vrot.slane %v2986, 5
        %v3126 = vsel %vm961, %v3124, %v3125
        %v3127 = vrot.slane %v2987, 5
        %v3128 = vrot.slane %v3127, 4
        %v3129 = vrot.slane %v2988, 5
        %v3130 = vsel %vm961, %v3128, %v3129
        %v3131 = vrot.slane %v3129, 4
        %v3132 = vrot.slane %v2989, 5
        %v3133 = vsel %vm961, %v3131, %v3132
        %v3134 = vrot.slane %v2990, 5
        %v3135 = vrot.slane %v3134, 4
        %v3136 = vrot.slane %v2991, 5
        %v3137 = vsel %vm961, %v3135, %v3136
        %v3138 = vrot.slane %v3136, 4
        %v3139 = vrot.slane %v2992, 5
        %v3140 = vsel %vm961, %v3138, %v3139
        %v3141 = vrot.slane %v2993, 5
        %v3142 = vrot.slane %v3141, 4
        %v3143 = vrot.slane %v2994, 5
        %v3144 = vsel %vm961, %v3142, %v3143
        %v3145 = vrot.slane %v3143, 4
        %v3146 = vrot.slane %v2995, 5
        %v3147 = vsel %vm961, %v3145, %v3146
        %v3148 = vrot.slane %v2996, 5
        %v3149 = vrot.slane %v3148, 4
        %v3150 = vrot.slane %v2997, 5
        %v3151 = vsel %vm961, %v3149, %v3150
        %v3152 = vrot.slane %v3150, 4
        %v3153 = vrot.slane %v2998, 5
        %v3154 = vsel %vm961, %v3152, %v3153
        %v3155 = vrot.slane %v2999, 5
        %v3156 = vrot.slane %v3155, 4
        %v3157 = vrot.slane %v3000, 5
        %v3158 = vsel %vm961, %v3156, %v3157
        %v3159 = vrot.slane %v3157, 4
        %v3160 = vrot.slane %v3001, 5
        %v3161 = vsel %vm961, %v3159, %v3160
        %v3162 = vunpack.c.l.b16 %v3053
        %v3163 = vunpack.c.l.b16 %v3056
        %v3164 = vunpack.c.l.b16 %v3060
        %v3165 = vunpack.c.l.b16 %v3063
        %v3166 = vunpack.c.l.b16 %v3067
        %v3167 = vunpack.c.l.b16 %v3070
        %v3168 = vunpack.c.l.b16 %v3074
        %v3169 = vunpack.c.l.b16 %v3077
        %v3170 = vunpack.c.l.b16 %v3081
        %v3171 = vunpack.c.l.b16 %v3084
        %v3172 = vunpack.c.l.b16 %v3088
        %v3173 = vunpack.c.l.b16 %v3091
        %v3174 = vunpack.c.l.b16 %v3095
        %v3175 = vunpack.c.l.b16 %v3098
        %v3176 = vunpack.c.l.b16 %v3102
        %v3177 = vunpack.c.l.b16 %v3105
        %v3178 = vunpack.c.l.b16 %v3109
        %v3179 = vunpack.c.l.b16 %v3112
        %v3180 = vunpack.c.l.b16 %v3116
        %v3181 = vunpack.c.l.b16 %v3119
        %v3182 = vunpack.c.l.b16 %v3123
        %v3183 = vunpack.c.l.b16 %v3126
        %v3184 = vunpack.c.l.b16 %v3130
        %v3185 = vunpack.c.l.b16 %v3133
        %v3186 = vunpack.c.l.b16 %v3137
        %v3187 = vunpack.c.l.b16 %v3140
        %v3188 = vunpack.c.l.b16 %v3144
        %v3189 = vunpack.c.l.b16 %v3147
        %v3190 = vunpack.c.l.b16 %v3151
        %v3191 = vunpack.c.l.b16 %v3154
        %v3192 = vunpack.c.l.b16 %v3158
        %v3193 = vunpack.c.l.b16 %v3161
        %v3194 = vpack.c.b16 %v3163, %v3162
        %v3195 = vpack.c.b16 %v3165, %v3164
        %v3196 = vpack.c.b16 %v3167, %v3166
        %v3197 = vpack.c.b16 %v3169, %v3168
        %v3198 = vpack.c.b16 %v3171, %v3170
        %v3199 = vpack.c.b16 %v3173, %v3172
        %v3200 = vpack.c.b16 %v3175, %v3174
        %v3201 = vpack.c.b16 %v3177, %v3176
        %v3202 = vpack.c.b16 %v3179, %v3178
        %v3203 = vpack.c.b16 %v3181, %v3180
        %v3204 = vpack.c.b16 %v3183, %v3182
        %v3205 = vpack.c.b16 %v3185, %v3184
        %v3206 = vpack.c.b16 %v3187, %v3186
        %v3207 = vpack.c.b16 %v3189, %v3188
        %v3208 = vpack.c.b16 %v3191, %v3190
        %v3209 = vpack.c.b16 %v3193, %v3192
        %3210 = vrot.lane.b32.xlu0 %v3194, 32
        %v3211 = vpop.permute.xlu0 %3210
        %3212 = vrot.lane.b32.xlu0 %v3195, 32
        %v3213 = vpop.permute.xlu0 %3212
        %3214 = vrot.lane.b32.xlu0 %v3196, 32
        %v3215 = vpop.permute.xlu0 %3214
        %3216 = vrot.lane.b32.xlu0 %v3197, 32
        %v3217 = vpop.permute.xlu0 %3216
        %3218 = vrot.lane.b32.xlu0 %v3198, 32
        %v3219 = vpop.permute.xlu0 %3218
        %3220 = vrot.lane.b32.xlu0 %v3199, 32
        %v3221 = vpop.permute.xlu0 %3220
        %3222 = vrot.lane.b32.xlu0 %v3200, 32
        %v3223 = vpop.permute.xlu0 %3222
        %3224 = vrot.lane.b32.xlu0 %v3201, 32
        %v3225 = vpop.permute.xlu0 %3224
        %3226 = vrot.lane.b32.xlu0 %v3202, 32
        %v3227 = vpop.permute.xlu0 %3226
        %3228 = vrot.lane.b32.xlu0 %v3203, 32
        %v3229 = vpop.permute.xlu0 %3228
        %3230 = vrot.lane.b32.xlu0 %v3204, 32
        %v3231 = vpop.permute.xlu0 %3230
        %3232 = vrot.lane.b32.xlu0 %v3205, 32
        %v3233 = vpop.permute.xlu0 %3232
        %3234 = vrot.lane.b32.xlu0 %v3206, 32
        %v3235 = vpop.permute.xlu0 %3234
        %3236 = vrot.lane.b32.xlu0 %v3207, 32
        %v3237 = vpop.permute.xlu0 %3236
        %3238 = vrot.lane.b32.xlu0 %v3208, 32
        %v3239 = vpop.permute.xlu0 %3238
        %3240 = vrot.lane.b32.xlu0 %v3209, 32
        %v3241 = vpop.permute.xlu0 %3240
        %vm3258 = vcmask 294144
        %3259 = vst.msk [vmem:[#allocation2] sm:$0xff] %vm3258, %v3211
        %3260 = vst.msk [vmem:[#allocation2 + $0x8] sm:$0xff] %vm3258, %v3213
        %3261 = vst.msk [vmem:[#allocation2 + $0x10] sm:$0xff] %vm3258, %v3215
        %3262 = vst.msk [vmem:[#allocation2 + $0x18] sm:$0xff] %vm3258, %v3217
        %3263 = vst.msk [vmem:[#allocation2 + $0x20] sm:$0xff] %vm3258, %v3219
        %3264 = vst.msk [vmem:[#allocation2 + $0x28] sm:$0xff] %vm3258, %v3221
        %3265 = vst.msk [vmem:[#allocation2 + $0x30] sm:$0xff] %vm3258, %v3223
        %3266 = vst.msk [vmem:[#allocation2 + $0x38] sm:$0xff] %vm3258, %v3225
        %3267 = vst.msk [vmem:[#allocation2 + $0x40] sm:$0xff] %vm3258, %v3227
        %3268 = vst.msk [vmem:[#allocation2 + $0x48] sm:$0xff] %vm3258, %v3229
        %3269 = vst.msk [vmem:[#allocation2 + $0x50] sm:$0xff] %vm3258, %v3231
        %3270 = vst.msk [vmem:[#allocation2 + $0x58] sm:$0xff] %vm3258, %v3233
        %3271 = vst.msk [vmem:[#allocation2 + $0x60] sm:$0xff] %vm3258, %v3235
        %3272 = vst.msk [vmem:[#allocation2 + $0x68] sm:$0xff] %vm3258, %v3237
        %3273 = vst.msk [vmem:[#allocation2 + $0x70] sm:$0xff] %vm3258, %v3239
        %3274 = vst.msk [vmem:[#allocation2 + $0x78] sm:$0xff] %vm3258, %v3241
        %v3275 = vld [vmem:[#allocation2] sm:$0xff]
        %v3276 = vld [vmem:[#allocation2 + $0x8] sm:$0xff]
        %v3277 = vld [vmem:[#allocation2 + $0x10] sm:$0xff]
        %v3278 = vld [vmem:[#allocation2 + $0x18] sm:$0xff]
        %v3279 = vld [vmem:[#allocation2 + $0x20] sm:$0xff]
        %v3280 = vld [vmem:[#allocation2 + $0x28] sm:$0xff]
        %v3281 = vld [vmem:[#allocation2 + $0x30] sm:$0xff]
        %v3282 = vld [vmem:[#allocation2 + $0x38] sm:$0xff]
        %v3283 = vld [vmem:[#allocation2 + $0x40] sm:$0xff]
        %v3284 = vld [vmem:[#allocation2 + $0x48] sm:$0xff]
        %v3285 = vld [vmem:[#allocation2 + $0x50] sm:$0xff]
        %v3286 = vld [vmem:[#allocation2 + $0x58] sm:$0xff]
        %v3287 = vld [vmem:[#allocation2 + $0x60] sm:$0xff]
        %v3288 = vld [vmem:[#allocation2 + $0x68] sm:$0xff]
        %v3289 = vld [vmem:[#allocation2 + $0x70] sm:$0xff]
        %v3290 = vld [vmem:[#allocation2 + $0x78] sm:$0xff]
        %v3291 = vld [vmem:[%s1] sm:$0xf]
        %v3292 = vld [vmem:[%s1 + $0x4] sm:$0xf]
        %v3293 = vld [vmem:[%s1 + $0x8] sm:$0xf]
        %v3294 = vld [vmem:[%s1 + $0xc] sm:$0xf]
        %v3295 = vld [vmem:[%s1 + $0x10] sm:$0x3]
        %v3301 = vunpack.c.l.b16 %v3291
        %v3302 = vunpack.c.l.b16 %v3292
        %v3303 = vunpack.c.l.b16 %v3293
        %v3304 = vunpack.c.l.b16 %v3294
        %v3305 = vunpack.c.l.b16 %v3295
        %v3306 = vpack.c.b16 %v3302, %v3301
        %v3307 = vpack.c.b16 %v3304, %v3303
        %v3308 = vpack.c.b16 %v3305, %v3305
        %vm3311 = vcmask 293888
        %v3313 = vsel %vm3311, %v3275, 0
        %v3316 = vsel %vm3311, %v3276, 0
        %v3319 = vsel %vm3311, %v3277, 0
        %v3322 = vsel %vm3311, %v3278, 0
        %v3325 = vsel %vm3311, %v3279, 0
        %v3328 = vsel %vm3311, %v3280, 0
        %v3331 = vsel %vm3311, %v3281, 0
        %v3334 = vsel %vm3311, %v3282, 0
        %v3337 = vsel %vm3311, %v3283, 0
        %v3340 = vsel %vm3311, %v3284, 0
        %v3343 = vsel %vm3311, %v3285, 0
        %v3346 = vsel %vm3311, %v3286, 0
        %v3349 = vsel %vm3311, %v3287, 0
        %v3352 = vsel %vm3311, %v3288, 0
        %v3355 = vsel %vm3311, %v3289, 0
        %v3358 = vsel %vm3311, %v3290, 0
        %vm3360 = vcmask 1041408
        %v3362 = vsel %vm3360, %v3308, 0
        %3364 = vmatprep.subr.bf16.mxu0 0
        %3365 = vmatpush1.bf16.msra.mxu0 %v3306
        %3366 = vmatprep.subr.bf16.mxu0 0
        %3367 = vmatpush1.bf16.msra.mxu0 %v3307
        %3368 = vmatprep.subr.bf16.mxu0 0
        %3369 = vmatpush1.bf16.msra.mxu0 %v3362
        %3370 = vmatprep.subr.bf16.mxu0 0
        %3371 = vmatpush1.bf16.msra.mxu0 0
        %3372 = vmatprep.subr.bf16.mxu0 0
        %3373 = vmatpush1.bf16.msra.mxu0 0
        %3374 = vmatprep.subr.bf16.mxu0 0
        %3375 = vmatpush1.bf16.msra.mxu0 0
        %3376 = vmatprep.subr.bf16.mxu0 0
        %3377 = vmatpush1.bf16.msra.mxu0 0
        %3378 = vmatprep.subr.bf16.mxu0 0
        %3379 = vmatpush1.bf16.msra.mxu0 0
        %3380 = vmatprep.subr.bf16.mxu0 0
        %3381 = vmatpush1.bf16.msra.mxu0 0
        %3382 = vmatprep.subr.bf16.mxu0 0
        %3383 = vmatpush1.bf16.msra.mxu0 0
        %3384 = vmatprep.subr.bf16.mxu0 0
        %3385 = vmatpush1.bf16.msra.mxu0 0
        %3386 = vmatprep.subr.bf16.mxu0 0
        %3387 = vmatpush1.bf16.msra.mxu0 0
        %3388 = vmatprep.subr.bf16.mxu0 0
        %3389 = vmatpush1.bf16.msra.mxu0 0
        %3390 = vmatprep.subr.bf16.mxu0 0
        %3391 = vmatpush1.bf16.msra.mxu0 0
        %3392 = vmatprep.subr.bf16.mxu0 0
        %3393 = vmatpush1.bf16.msra.mxu0 0
        %3394 = vmatprep.subr.bf16.mxu0 0
        %3395 = vmatpush1.bf16.msra.mxu0 0
        %3396 = vmatprep.mubr.bf16.mxu0 0
        %3397 = vmatmul.mubr.bf16.gmra.mrb[0].mxu0 %v3313
        %v3398 = vpop.f32.mrb[0].mxu0
        %v3399 = vadd.f32 0.0, %v3398
        %v3400 = vpop.f32.mrb[0].mxu0
        %v3401 = vpop.f32.mrb[0].mxu0
        %v3402 = vadd.f32 0.0, %v3401
        %v3403 = vpop.f32.mrb[0].mxu0
        %3404 = vmatprep.mubr.bf16.mxu0 0
        %3405 = vmatmul.mubr.bf16.gmra.mrb[0].mxu0 %v3316
        %v3406 = vpop.f32.mrb[0].mxu0
        %v3407 = vadd.f32 0.0, %v3406
        %v3408 = vpop.f32.mrb[0].mxu0
        %v3409 = vpop.f32.mrb[0].mxu0
        %v3410 = vadd.f32 0.0, %v3409
        %v3411 = vpop.f32.mrb[0].mxu0
        %3412 = vmatprep.mubr.bf16.mxu0 0
        %3413 = vmatmul.mubr.bf16.gmra.mrb[0].mxu0 %v3319
        %v3414 = vpop.f32.mrb[0].mxu0
        %v3415 = vadd.f32 0.0, %v3414
        %v3416 = vpop.f32.mrb[0].mxu0
        %v3417 = vpop.f32.mrb[0].mxu0
        %v3418 = vadd.f32 0.0, %v3417
        %v3419 = vpop.f32.mrb[0].mxu0
        %3420 = vmatprep.mubr.bf16.mxu0 0
        %3421 = vmatmul.mubr.bf16.gmra.mrb[0].mxu0 %v3322
        %v3422 = vpop.f32.mrb[0].mxu0
        %v3423 = vadd.f32 0.0, %v3422
        %v3424 = vpop.f32.mrb[0].mxu0
        %v3425 = vpop.f32.mrb[0].mxu0
        %v3426 = vadd.f32 0.0, %v3425
        %v3427 = vpop.f32.mrb[0].mxu0
        %3428 = vmatprep.mubr.bf16.mxu0 0
        %3429 = vmatmul.mubr.bf16.gmra.mrb[0].mxu0 %v3325
        %v3430 = vpop.f32.mrb[0].mxu0
        %v3431 = vadd.f32 0.0, %v3430
        %v3432 = vpop.f32.mrb[0].mxu0
        %v3433 = vpop.f32.mrb[0].mxu0
        %v3434 = vadd.f32 0.0, %v3433
        %v3435 = vpop.f32.mrb[0].mxu0
        %3436 = vmatprep.mubr.bf16.mxu0 0
        %3437 = vmatmul.mubr.bf16.gmra.mrb[0].mxu0 %v3328
        %v3438 = vpop.f32.mrb[0].mxu0
        %v3439 = vadd.f32 0.0, %v3438
        %v3440 = vpop.f32.mrb[0].mxu0
        %v3441 = vpop.f32.mrb[0].mxu0
        %v3442 = vadd.f32 0.0, %v3441
        %v3443 = vpop.f32.mrb[0].mxu0
        %3444 = vmatprep.mubr.bf16.mxu0 0
        %3445 = vmatmul.mubr.bf16.gmra.mrb[0].mxu0 %v3331
        %v3446 = vpop.f32.mrb[0].mxu0
        %v3447 = vadd.f32 0.0, %v3446
        %v3448 = vpop.f32.mrb[0].mxu0
        %v3449 = vpop.f32.mrb[0].mxu0
        %v3450 = vadd.f32 0.0, %v3449
        %v3451 = vpop.f32.mrb[0].mxu0
        %3452 = vmatprep.mubr.bf16.mxu0 0
        %3453 = vmatmul.mubr.bf16.gmra.mrb[0].mxu0 %v3334
        %v3454 = vpop.f32.mrb[0].mxu0
        %v3455 = vadd.f32 0.0, %v3454
        %v3456 = vpop.f32.mrb[0].mxu0
        %v3457 = vpop.f32.mrb[0].mxu0
        %v3458 = vadd.f32 0.0, %v3457
        %v3459 = vpop.f32.mrb[0].mxu0
        %3460 = vmatprep.mubr.bf16.mxu0 0
        %3461 = vmatmul.mubr.bf16.gmra.mrb[0].mxu0 %v3337
        %v3462 = vpop.f32.mrb[0].mxu0
        %v3463 = vadd.f32 0.0, %v3462
        %v3464 = vpop.f32.mrb[0].mxu0
        %v3465 = vpop.f32.mrb[0].mxu0
        %v3466 = vadd.f32 0.0, %v3465
        %v3467 = vpop.f32.mrb[0].mxu0
        %3468 = vmatprep.mubr.bf16.mxu0 0
        %3469 = vmatmul.mubr.bf16.gmra.mrb[0].mxu0 %v3340
        %v3470 = vpop.f32.mrb[0].mxu0
        %v3471 = vadd.f32 0.0, %v3470
        %v3472 = vpop.f32.mrb[0].mxu0
        %v3473 = vpop.f32.mrb[0].mxu0
        %v3474 = vadd.f32 0.0, %v3473
        %v3475 = vpop.f32.mrb[0].mxu0
        %3476 = vmatprep.mubr.bf16.mxu0 0
        %3477 = vmatmul.mubr.bf16.gmra.mrb[0].mxu0 %v3343
        %v3478 = vpop.f32.mrb[0].mxu0
        %v3479 = vadd.f32 0.0, %v3478
        %v3480 = vpop.f32.mrb[0].mxu0
        %v3481 = vpop.f32.mrb[0].mxu0
        %v3482 = vadd.f32 0.0, %v3481
        %v3483 = vpop.f32.mrb[0].mxu0
        %3484 = vmatprep.mubr.bf16.mxu0 0
        %3485 = vmatmul.mubr.bf16.gmra.mrb[0].mxu0 %v3346
        %v3486 = vpop.f32.mrb[0].mxu0
        %v3487 = vadd.f32 0.0, %v3486
        %v3488 = vpop.f32.mrb[0].mxu0
        %v3489 = vpop.f32.mrb[0].mxu0
        %v3490 = vadd.f32 0.0, %v3489
        %v3491 = vpop.f32.mrb[0].mxu0
        %3492 = vmatprep.mubr.bf16.mxu0 0
        %3493 = vmatmul.mubr.bf16.gmra.mrb[0].mxu0 %v3349
        %v3494 = vpop.f32.mrb[0].mxu0
        %v3495 = vadd.f32 0.0, %v3494
        %v3496 = vpop.f32.mrb[0].mxu0
        %v3497 = vpop.f32.mrb[0].mxu0
        %v3498 = vadd.f32 0.0, %v3497
        %v3499 = vpop.f32.mrb[0].mxu0
        %3500 = vmatprep.mubr.bf16.mxu0 0
        %3501 = vmatmul.mubr.bf16.gmra.mrb[0].mxu0 %v3352
        %v3502 = vpop.f32.mrb[0].mxu0
        %v3503 = vadd.f32 0.0, %v3502
        %v3504 = vpop.f32.mrb[0].mxu0
        %v3505 = vpop.f32.mrb[0].mxu0
        %v3506 = vadd.f32 0.0, %v3505
        %v3507 = vpop.f32.mrb[0].mxu0
        %3508 = vmatprep.mubr.bf16.mxu0 0
        %3509 = vmatmul.mubr.bf16.gmra.mrb[0].mxu0 %v3355
        %v3510 = vpop.f32.mrb[0].mxu0
        %v3511 = vadd.f32 0.0, %v3510
        %v3512 = vpop.f32.mrb[0].mxu0
        %v3513 = vpop.f32.mrb[0].mxu0
        %v3514 = vadd.f32 0.0, %v3513
        %v3515 = vpop.f32.mrb[0].mxu0
        %3516 = vmatprep.mubr.bf16.mxu0 0
        %3517 = vmatmul.mubr.bf16.gmra.mrb[0].mxu0 %v3358
        %v3518 = vpop.f32.mrb[0].mxu0
        %v3519 = vadd.f32 0.0, %v3518
        %v3520 = vpop.f32.mrb[0].mxu0
        %v3521 = vpop.f32.mrb[0].mxu0
        %v3522 = vadd.f32 0.0, %v3521
        %v3523 = vpop.f32.mrb[0].mxu0
        %3524 = vdwg.mxu0
        %v3557 = vcombine.high %v3399, %v3399
        %v3559 = vunpack.c.l.s4 1983009808
        %v3560 = vunpack.c.0.s8 %v3559
        %v3561 = vlaneseq
        %v3562 = vshrl.u32 %v3561, 7
        %v3563 = vsub.s32 %v3560, %v3562
        %v3564 = vrot.slane %v3399, %v3563
        %v3566 = vunpack.c.l.s4 1983009808
        %v3567 = vunpack.c.0.s8 %v3566
        %v3568 = vlaneseq
        %v3569 = vshrl.u32 %v3568, 7
        %v3570 = vsub.s32 %v3567, %v3569
        %v3571 = vrot.slane %v3557, %v3570
        %v3572 = vcombine.high %v3564, %v3564
        %v3573 = vcombine.high %v3571, %v3571
        %v3574 = vcombine.high %v3402, %v3402
        %v3576 = vunpack.c.l.s4 1983009808
        %v3577 = vunpack.c.0.s8 %v3576
        %v3578 = vlaneseq
        %v3579 = vshrl.u32 %v3578, 7
        %v3580 = vsub.s32 %v3577, %v3579
        %v3581 = vrot.slane %v3402, %v3580
        %v3583 = vunpack.c.l.s4 1983009808
        %v3584 = vunpack.c.0.s8 %v3583
        %v3585 = vlaneseq
        %v3586 = vshrl.u32 %v3585, 7
        %v3587 = vsub.s32 %v3584, %v3586
        %v3588 = vrot.slane %v3574, %v3587
        %v3589 = vcombine.high %v3581, %v3581
        %v3590 = vcombine.high %v3588, %v3588
        %v3591 = vcombine.high %v3407, %v3407
        %v3593 = vunpack.c.l.s4 1983009808
        %v3594 = vunpack.c.0.s8 %v3593
        %v3595 = vlaneseq
        %v3596 = vshrl.u32 %v3595, 7
        %v3597 = vsub.s32 %v3594, %v3596
        %v3598 = vrot.slane %v3407, %v3597
        %v3600 = vunpack.c.l.s4 1983009808
        %v3601 = vunpack.c.0.s8 %v3600
        %v3602 = vlaneseq
        %v3603 = vshrl.u32 %v3602, 7
        %v3604 = vsub.s32 %v3601, %v3603
        %v3605 = vrot.slane %v3591, %v3604
        %v3606 = vcombine.high %v3598, %v3598
        %v3607 = vcombine.high %v3605, %v3605
        %v3608 = vcombine.high %v3410, %v3410
        %v3610 = vunpack.c.l.s4 1983009808
        %v3611 = vunpack.c.0.s8 %v3610
        %v3612 = vlaneseq
        %v3613 = vshrl.u32 %v3612, 7
        %v3614 = vsub.s32 %v3611, %v3613
        %v3615 = vrot.slane %v3410, %v3614
        %v3617 = vunpack.c.l.s4 1983009808
        %v3618 = vunpack.c.0.s8 %v3617
        %v3619 = vlaneseq
        %v3620 = vshrl.u32 %v3619, 7
        %v3621 = vsub.s32 %v3618, %v3620
        %v3622 = vrot.slane %v3608, %v3621
        %v3623 = vcombine.high %v3615, %v3615
        %v3624 = vcombine.high %v3622, %v3622
        %v3625 = vcombine.high %v3415, %v3415
        %v3627 = vunpack.c.l.s4 1983009808
        %v3628 = vunpack.c.0.s8 %v3627
        %v3629 = vlaneseq
        %v3630 = vshrl.u32 %v3629, 7
        %v3631 = vsub.s32 %v3628, %v3630
        %v3632 = vrot.slane %v3415, %v3631
        %v3634 = vunpack.c.l.s4 1983009808
        %v3635 = vunpack.c.0.s8 %v3634
        %v3636 = vlaneseq
        %v3637 = vshrl.u32 %v3636, 7
        %v3638 = vsub.s32 %v3635, %v3637
        %v3639 = vrot.slane %v3625, %v3638
        %v3640 = vcombine.high %v3632, %v3632
        %v3641 = vcombine.high %v3639, %v3639
        %v3642 = vcombine.high %v3418, %v3418
        %v3644 = vunpack.c.l.s4 1983009808
        %v3645 = vunpack.c.0.s8 %v3644
        %v3646 = vlaneseq
        %v3647 = vshrl.u32 %v3646, 7
        %v3648 = vsub.s32 %v3645, %v3647
        %v3649 = vrot.slane %v3418, %v3648
        %v3651 = vunpack.c.l.s4 1983009808
        %v3652 = vunpack.c.0.s8 %v3651
        %v3653 = vlaneseq
        %v3654 = vshrl.u32 %v3653, 7
        %v3655 = vsub.s32 %v3652, %v3654
        %v3656 = vrot.slane %v3642, %v3655
        %v3657 = vcombine.high %v3649, %v3649
        %v3658 = vcombine.high %v3656, %v3656
        %v3659 = vcombine.high %v3423, %v3423
        %v3661 = vunpack.c.l.s4 1983009808
        %v3662 = vunpack.c.0.s8 %v3661
        %v3663 = vlaneseq
        %v3664 = vshrl.u32 %v3663, 7
        %v3665 = vsub.s32 %v3662, %v3664
        %v3666 = vrot.slane %v3423, %v3665
        %v3668 = vunpack.c.l.s4 1983009808
        %v3669 = vunpack.c.0.s8 %v3668
        %v3670 = vlaneseq
        %v3671 = vshrl.u32 %v3670, 7
        %v3672 = vsub.s32 %v3669, %v3671
        %v3673 = vrot.slane %v3659, %v3672
        %v3674 = vcombine.high %v3666, %v3666
        %v3675 = vcombine.high %v3673, %v3673
        %v3676 = vcombine.high %v3426, %v3426
        %v3678 = vunpack.c.l.s4 1983009808
        %v3679 = vunpack.c.0.s8 %v3678
        %v3680 = vlaneseq
        %v3681 = vshrl.u32 %v3680, 7
        %v3682 = vsub.s32 %v3679, %v3681
        %v3683 = vrot.slane %v3426, %v3682
        %v3685 = vunpack.c.l.s4 1983009808
        %v3686 = vunpack.c.0.s8 %v3685
        %v3687 = vlaneseq
        %v3688 = vshrl.u32 %v3687, 7
        %v3689 = vsub.s32 %v3686, %v3688
        %v3690 = vrot.slane %v3676, %v3689
        %v3691 = vcombine.high %v3683, %v3683
        %v3692 = vcombine.high %v3690, %v3690
        %v3693 = vcombine.high %v3431, %v3431
        %v3695 = vunpack.c.l.s4 1983009808
        %v3696 = vunpack.c.0.s8 %v3695
        %v3697 = vlaneseq
        %v3698 = vshrl.u32 %v3697, 7
        %v3699 = vsub.s32 %v3696, %v3698
        %v3700 = vrot.slane %v3431, %v3699
        %v3702 = vunpack.c.l.s4 1983009808
        %v3703 = vunpack.c.0.s8 %v3702
        %v3704 = vlaneseq
        %v3705 = vshrl.u32 %v3704, 7
        %v3706 = vsub.s32 %v3703, %v3705
        %v3707 = vrot.slane %v3693, %v3706
        %v3708 = vcombine.high %v3700, %v3700
        %v3709 = vcombine.high %v3707, %v3707
        %v3710 = vcombine.high %v3434, %v3434
        %v3712 = vunpack.c.l.s4 1983009808
        %v3713 = vunpack.c.0.s8 %v3712
        %v3714 = vlaneseq
        %v3715 = vshrl.u32 %v3714, 7
        %v3716 = vsub.s32 %v3713, %v3715
        %v3717 = vrot.slane %v3434, %v3716
        %v3719 = vunpack.c.l.s4 1983009808
        %v3720 = vunpack.c.0.s8 %v3719
        %v3721 = vlaneseq
        %v3722 = vshrl.u32 %v3721, 7
        %v3723 = vsub.s32 %v3720, %v3722
        %v3724 = vrot.slane %v3710, %v3723
        %v3725 = vcombine.high %v3717, %v3717
        %v3726 = vcombine.high %v3724, %v3724
        %v3727 = vcombine.high %v3439, %v3439
        %v3729 = vunpack.c.l.s4 1983009808
        %v3730 = vunpack.c.0.s8 %v3729
        %v3731 = vlaneseq
        %v3732 = vshrl.u32 %v3731, 7
        %v3733 = vsub.s32 %v3730, %v3732
        %v3734 = vrot.slane %v3439, %v3733
        %v3736 = vunpack.c.l.s4 1983009808
        %v3737 = vunpack.c.0.s8 %v3736
        %v3738 = vlaneseq
        %v3739 = vshrl.u32 %v3738, 7
        %v3740 = vsub.s32 %v3737, %v3739
        %v3741 = vrot.slane %v3727, %v3740
        %v3742 = vcombine.high %v3734, %v3734
        %v3743 = vcombine.high %v3741, %v3741
        %v3744 = vcombine.high %v3442, %v3442
        %v3746 = vunpack.c.l.s4 1983009808
        %v3747 = vunpack.c.0.s8 %v3746
        %v3748 = vlaneseq
        %v3749 = vshrl.u32 %v3748, 7
        %v3750 = vsub.s32 %v3747, %v3749
        %v3751 = vrot.slane %v3442, %v3750
        %v3753 = vunpack.c.l.s4 1983009808
        %v3754 = vunpack.c.0.s8 %v3753
        %v3755 = vlaneseq
        %v3756 = vshrl.u32 %v3755, 7
        %v3757 = vsub.s32 %v3754, %v3756
        %v3758 = vrot.slane %v3744, %v3757
        %v3759 = vcombine.high %v3751, %v3751
        %v3760 = vcombine.high %v3758, %v3758
        %v3761 = vcombine.high %v3447, %v3447
        %v3763 = vunpack.c.l.s4 1983009808
        %v3764 = vunpack.c.0.s8 %v3763
        %v3765 = vlaneseq
        %v3766 = vshrl.u32 %v3765, 7
        %v3767 = vsub.s32 %v3764, %v3766
        %v3768 = vrot.slane %v3447, %v3767
        %v3770 = vunpack.c.l.s4 1983009808
        %v3771 = vunpack.c.0.s8 %v3770
        %v3772 = vlaneseq
        %v3773 = vshrl.u32 %v3772, 7
        %v3774 = vsub.s32 %v3771, %v3773
        %v3775 = vrot.slane %v3761, %v3774
        %v3776 = vcombine.high %v3768, %v3768
        %v3777 = vcombine.high %v3775, %v3775
        %v3778 = vcombine.high %v3450, %v3450
        %v3780 = vunpack.c.l.s4 1983009808
        %v3781 = vunpack.c.0.s8 %v3780
        %v3782 = vlaneseq
        %v3783 = vshrl.u32 %v3782, 7
        %v3784 = vsub.s32 %v3781, %v3783
        %v3785 = vrot.slane %v3450, %v3784
        %v3787 = vunpack.c.l.s4 1983009808
        %v3788 = vunpack.c.0.s8 %v3787
        %v3789 = vlaneseq
        %v3790 = vshrl.u32 %v3789, 7
        %v3791 = vsub.s32 %v3788, %v3790
        %v3792 = vrot.slane %v3778, %v3791
        %v3793 = vcombine.high %v3785, %v3785
        %v3794 = vcombine.high %v3792, %v3792
        %v3795 = vcombine.high %v3455, %v3455
        %v3797 = vunpack.c.l.s4 1983009808
        %v3798 = vunpack.c.0.s8 %v3797
        %v3799 = vlaneseq
        %v3800 = vshrl.u32 %v3799, 7
        %v3801 = vsub.s32 %v3798, %v3800
        %v3802 = vrot.slane %v3455, %v3801
        %v3804 = vunpack.c.l.s4 1983009808
        %v3805 = vunpack.c.0.s8 %v3804
        %v3806 = vlaneseq
        %v3807 = vshrl.u32 %v3806, 7
        %v3808 = vsub.s32 %v3805, %v3807
        %v3809 = vrot.slane %v3795, %v3808
        %v3810 = vcombine.high %v3802, %v3802
        %v3811 = vcombine.high %v3809, %v3809
        %v3812 = vcombine.high %v3458, %v3458
        %v3814 = vunpack.c.l.s4 1983009808
        %v3815 = vunpack.c.0.s8 %v3814
        %v3816 = vlaneseq
        %v3817 = vshrl.u32 %v3816, 7
        %v3818 = vsub.s32 %v3815, %v3817
        %v3819 = vrot.slane %v3458, %v3818
        %v3821 = vunpack.c.l.s4 1983009808
        %v3822 = vunpack.c.0.s8 %v3821
        %v3823 = vlaneseq
        %v3824 = vshrl.u32 %v3823, 7
        %v3825 = vsub.s32 %v3822, %v3824
        %v3826 = vrot.slane %v3812, %v3825
        %v3827 = vcombine.high %v3819, %v3819
        %v3828 = vcombine.high %v3826, %v3826
        %v3829 = vcombine.high %v3463, %v3463
        %v3831 = vunpack.c.l.s4 1983009808
        %v3832 = vunpack.c.0.s8 %v3831
        %v3833 = vlaneseq
        %v3834 = vshrl.u32 %v3833, 7
        %v3835 = vsub.s32 %v3832, %v3834
        %v3836 = vrot.slane %v3463, %v3835
        %v3838 = vunpack.c.l.s4 1983009808
        %v3839 = vunpack.c.0.s8 %v3838
        %v3840 = vlaneseq
        %v3841 = vshrl.u32 %v3840, 7
        %v3842 = vsub.s32 %v3839, %v3841
        %v3843 = vrot.slane %v3829, %v3842
        %v3844 = vcombine.high %v3836, %v3836
        %v3845 = vcombine.high %v3843, %v3843
        %v3846 = vcombine.high %v3466, %v3466
        %v3848 = vunpack.c.l.s4 1983009808
        %v3849 = vunpack.c.0.s8 %v3848
        %v3850 = vlaneseq
        %v3851 = vshrl.u32 %v3850, 7
        %v3852 = vsub.s32 %v3849, %v3851
        %v3853 = vrot.slane %v3466, %v3852
        %v3855 = vunpack.c.l.s4 1983009808
        %v3856 = vunpack.c.0.s8 %v3855
        %v3857 = vlaneseq
        %v3858 = vshrl.u32 %v3857, 7
        %v3859 = vsub.s32 %v3856, %v3858
        %v3860 = vrot.slane %v3846, %v3859
        %v3861 = vcombine.high %v3853, %v3853
        %v3862 = vcombine.high %v3860, %v3860
        %v3863 = vcombine.high %v3471, %v3471
        %v3865 = vunpack.c.l.s4 1983009808
        %v3866 = vunpack.c.0.s8 %v3865
        %v3867 = vlaneseq
        %v3868 = vshrl.u32 %v3867, 7
        %v3869 = vsub.s32 %v3866, %v3868
        %v3870 = vrot.slane %v3471, %v3869
        %v3872 = vunpack.c.l.s4 1983009808
        %v3873 = vunpack.c.0.s8 %v3872
        %v3874 = vlaneseq
        %v3875 = vshrl.u32 %v3874, 7
        %v3876 = vsub.s32 %v3873, %v3875
        %v3877 = vrot.slane %v3863, %v3876
        %v3878 = vcombine.high %v3870, %v3870
        %v3879 = vcombine.high %v3877, %v3877
        %v3880 = vcombine.high %v3474, %v3474
        %v3882 = vunpack.c.l.s4 1983009808
        %v3883 = vunpack.c.0.s8 %v3882
        %v3884 = vlaneseq
        %v3885 = vshrl.u32 %v3884, 7
        %v3886 = vsub.s32 %v3883, %v3885
        %v3887 = vrot.slane %v3474, %v3886
        %v3889 = vunpack.c.l.s4 1983009808
        %v3890 = vunpack.c.0.s8 %v3889
        %v3891 = vlaneseq
        %v3892 = vshrl.u32 %v3891, 7
        %v3893 = vsub.s32 %v3890, %v3892
        %v3894 = vrot.slane %v3880, %v3893
        %v3895 = vcombine.high %v3887, %v3887
        %v3896 = vcombine.high %v3894, %v3894
        %v3897 = vcombine.high %v3479, %v3479
        %v3899 = vunpack.c.l.s4 1983009808
        %v3900 = vunpack.c.0.s8 %v3899
        %v3901 = vlaneseq
        %v3902 = vshrl.u32 %v3901, 7
        %v3903 = vsub.s32 %v3900, %v3902
        %v3904 = vrot.slane %v3479, %v3903
        %v3906 = vunpack.c.l.s4 1983009808
        %v3907 = vunpack.c.0.s8 %v3906
        %v3908 = vlaneseq
        %v3909 = vshrl.u32 %v3908, 7
        %v3910 = vsub.s32 %v3907, %v3909
        %v3911 = vrot.slane %v3897, %v3910
        %v3912 = vcombine.high %v3904, %v3904
        %v3913 = vcombine.high %v3911, %v3911
        %v3914 = vcombine.high %v3482, %v3482
        %v3916 = vunpack.c.l.s4 1983009808
        %v3917 = vunpack.c.0.s8 %v3916
        %v3918 = vlaneseq
        %v3919 = vshrl.u32 %v3918, 7
        %v3920 = vsub.s32 %v3917, %v3919
        %v3921 = vrot.slane %v3482, %v3920
        %v3923 = vunpack.c.l.s4 1983009808
        %v3924 = vunpack.c.0.s8 %v3923
        %v3925 = vlaneseq
        %v3926 = vshrl.u32 %v3925, 7
        %v3927 = vsub.s32 %v3924, %v3926
        %v3928 = vrot.slane %v3914, %v3927
        %v3929 = vcombine.high %v3921, %v3921
        %v3930 = vcombine.high %v3928, %v3928
        %v3931 = vcombine.high %v3487, %v3487
        %v3933 = vunpack.c.l.s4 1983009808
        %v3934 = vunpack.c.0.s8 %v3933
        %v3935 = vlaneseq
        %v3936 = vshrl.u32 %v3935, 7
        %v3937 = vsub.s32 %v3934, %v3936
        %v3938 = vrot.slane %v3487, %v3937
        %v3940 = vunpack.c.l.s4 1983009808
        %v3941 = vunpack.c.0.s8 %v3940
        %v3942 = vlaneseq
        %v3943 = vshrl.u32 %v3942, 7
        %v3944 = vsub.s32 %v3941, %v3943
        %v3945 = vrot.slane %v3931, %v3944
        %v3946 = vcombine.high %v3938, %v3938
        %v3947 = vcombine.high %v3945, %v3945
        %v3948 = vcombine.high %v3490, %v3490
        %v3950 = vunpack.c.l.s4 1983009808
        %v3951 = vunpack.c.0.s8 %v3950
        %v3952 = vlaneseq
        %v3953 = vshrl.u32 %v3952, 7
        %v3954 = vsub.s32 %v3951, %v3953
        %v3955 = vrot.slane %v3490, %v3954
        %v3957 = vunpack.c.l.s4 1983009808
        %v3958 = vunpack.c.0.s8 %v3957
        %v3959 = vlaneseq
        %v3960 = vshrl.u32 %v3959, 7
        %v3961 = vsub.s32 %v3958, %v3960
        %v3962 = vrot.slane %v3948, %v3961
        %v3963 = vcombine.high %v3955, %v3955
        %v3964 = vcombine.high %v3962, %v3962
        %v3965 = vcombine.high %v3495, %v3495
        %v3967 = vunpack.c.l.s4 1983009808
        %v3968 = vunpack.c.0.s8 %v3967
        %v3969 = vlaneseq
        %v3970 = vshrl.u32 %v3969, 7
        %v3971 = vsub.s32 %v3968, %v3970
        %v3972 = vrot.slane %v3495, %v3971
        %v3974 = vunpack.c.l.s4 1983009808
        %v3975 = vunpack.c.0.s8 %v3974
        %v3976 = vlaneseq
        %v3977 = vshrl.u32 %v3976, 7
        %v3978 = vsub.s32 %v3975, %v3977
        %v3979 = vrot.slane %v3965, %v3978
        %v3980 = vcombine.high %v3972, %v3972
        %v3981 = vcombine.high %v3979, %v3979
        %v3982 = vcombine.high %v3498, %v3498
        %v3984 = vunpack.c.l.s4 1983009808
        %v3985 = vunpack.c.0.s8 %v3984
        %v3986 = vlaneseq
        %v3987 = vshrl.u32 %v3986, 7
        %v3988 = vsub.s32 %v3985, %v3987
        %v3989 = vrot.slane %v3498, %v3988
        %v3991 = vunpack.c.l.s4 1983009808
        %v3992 = vunpack.c.0.s8 %v3991
        %v3993 = vlaneseq
        %v3994 = vshrl.u32 %v3993, 7
        %v3995 = vsub.s32 %v3992, %v3994
        %v3996 = vrot.slane %v3982, %v3995
        %v3997 = vcombine.high %v3989, %v3989
        %v3998 = vcombine.high %v3996, %v3996
        %v3999 = vcombine.high %v3503, %v3503
        %v4001 = vunpack.c.l.s4 1983009808
        %v4002 = vunpack.c.0.s8 %v4001
        %v4003 = vlaneseq
        %v4004 = vshrl.u32 %v4003, 7
        %v4005 = vsub.s32 %v4002, %v4004
        %v4006 = vrot.slane %v3503, %v4005
        %v4008 = vunpack.c.l.s4 1983009808
        %v4009 = vunpack.c.0.s8 %v4008
        %v4010 = vlaneseq
        %v4011 = vshrl.u32 %v4010, 7
        %v4012 = vsub.s32 %v4009, %v4011
        %v4013 = vrot.slane %v3999, %v4012
        %v4014 = vcombine.high %v4006, %v4006
        %v4015 = vcombine.high %v4013, %v4013
        %v4016 = vcombine.high %v3506, %v3506
        %v4018 = vunpack.c.l.s4 1983009808
        %v4019 = vunpack.c.0.s8 %v4018
        %v4020 = vlaneseq
        %v4021 = vshrl.u32 %v4020, 7
        %v4022 = vsub.s32 %v4019, %v4021
        %v4023 = vrot.slane %v3506, %v4022
        %v4025 = vunpack.c.l.s4 1983009808
        %v4026 = vunpack.c.0.s8 %v4025
        %v4027 = vlaneseq
        %v4028 = vshrl.u32 %v4027, 7
        %v4029 = vsub.s32 %v4026, %v4028
        %v4030 = vrot.slane %v4016, %v4029
        %v4031 = vcombine.high %v4023, %v4023
        %v4032 = vcombine.high %v4030, %v4030
        %v4033 = vcombine.high %v3511, %v3511
        %v4035 = vunpack.c.l.s4 1983009808
        %v4036 = vunpack.c.0.s8 %v4035
        %v4037 = vlaneseq
        %v4038 = vshrl.u32 %v4037, 7
        %v4039 = vsub.s32 %v4036, %v4038
        %v4040 = vrot.slane %v3511, %v4039
        %v4042 = vunpack.c.l.s4 1983009808
        %v4043 = vunpack.c.0.s8 %v4042
        %v4044 = vlaneseq
        %v4045 = vshrl.u32 %v4044, 7
        %v4046 = vsub.s32 %v4043, %v4045
        %v4047 = vrot.slane %v4033, %v4046
        %v4048 = vcombine.high %v4040, %v4040
        %v4049 = vcombine.high %v4047, %v4047
        %v4050 = vcombine.high %v3514, %v3514
        %v4052 = vunpack.c.l.s4 1983009808
        %v4053 = vunpack.c.0.s8 %v4052
        %v4054 = vlaneseq
        %v4055 = vshrl.u32 %v4054, 7
        %v4056 = vsub.s32 %v4053, %v4055
        %v4057 = vrot.slane %v3514, %v4056
        %v4059 = vunpack.c.l.s4 1983009808
        %v4060 = vunpack.c.0.s8 %v4059
        %v4061 = vlaneseq
        %v4062 = vshrl.u32 %v4061, 7
        %v4063 = vsub.s32 %v4060, %v4062
        %v4064 = vrot.slane %v4050, %v4063
        %v4065 = vcombine.high %v4057, %v4057
        %v4066 = vcombine.high %v4064, %v4064
        %v4067 = vcombine.high %v3519, %v3519
        %v4069 = vunpack.c.l.s4 1983009808
        %v4070 = vunpack.c.0.s8 %v4069
        %v4071 = vlaneseq
        %v4072 = vshrl.u32 %v4071, 7
        %v4073 = vsub.s32 %v4070, %v4072
        %v4074 = vrot.slane %v3519, %v4073
        %v4076 = vunpack.c.l.s4 1983009808
        %v4077 = vunpack.c.0.s8 %v4076
        %v4078 = vlaneseq
        %v4079 = vshrl.u32 %v4078, 7
        %v4080 = vsub.s32 %v4077, %v4079
        %v4081 = vrot.slane %v4067, %v4080
        %v4082 = vcombine.high %v4074, %v4074
        %v4083 = vcombine.high %v4081, %v4081
        %v4084 = vcombine.high %v3522, %v3522
        %v4086 = vunpack.c.l.s4 1983009808
        %v4087 = vunpack.c.0.s8 %v4086
        %v4088 = vlaneseq
        %v4089 = vshrl.u32 %v4088, 7
        %v4090 = vsub.s32 %v4087, %v4089
        %v4091 = vrot.slane %v3522, %v4090
        %v4093 = vunpack.c.l.s4 1983009808
        %v4094 = vunpack.c.0.s8 %v4093
        %v4095 = vlaneseq
        %v4096 = vshrl.u32 %v4095, 7
        %v4097 = vsub.s32 %v4094, %v4096
        %v4098 = vrot.slane %v4084, %v4097
        %v4099 = vcombine.high %v4091, %v4091
        %v4100 = vcombine.high %v4098, %v4098
        %v4229 = vsel %vm3360, %v3564, -inf
        %v4230 = vrot.slane %v4229, 4
        %v4231 = vmax.f32 %v4229, %v4230
        %v4232 = vrot.slane %v4231, 2
        %v4233 = vmax.f32 %v4231, %v4232
        %v4234 = vrot.slane %v4233, 1
        %v4235 = vmax.f32 %v4233, %v4234
        %v4236 = vsel %vm3360, %v3572, -inf
        %v4237 = vrot.slane %v4236, 4
        %v4238 = vmax.f32 %v4236, %v4237
        %v4239 = vrot.slane %v4238, 2
        %v4240 = vmax.f32 %v4238, %v4239
        %v4241 = vrot.slane %v4240, 1
        %v4242 = vmax.f32 %v4240, %v4241
        %v4243 = vsel %vm3360, %v3571, -inf
        %v4244 = vrot.slane %v4243, 4
        %v4245 = vmax.f32 %v4243, %v4244
        %v4246 = vrot.slane %v4245, 2
        %v4247 = vmax.f32 %v4245, %v4246
        %v4248 = vrot.slane %v4247, 1
        %v4249 = vmax.f32 %v4247, %v4248
        %v4250 = vsel %vm3360, %v3573, -inf
        %v4251 = vrot.slane %v4250, 4
        %v4252 = vmax.f32 %v4250, %v4251
        %v4253 = vrot.slane %v4252, 2
        %v4254 = vmax.f32 %v4252, %v4253
        %v4255 = vrot.slane %v4254, 1
        %v4256 = vmax.f32 %v4254, %v4255
        %v4257 = vsel %vm3360, %v3581, -inf
        %v4258 = vrot.slane %v4257, 4
        %v4259 = vmax.f32 %v4257, %v4258
        %v4260 = vrot.slane %v4259, 2
        %v4261 = vmax.f32 %v4259, %v4260
        %v4262 = vrot.slane %v4261, 1
        %v4263 = vmax.f32 %v4261, %v4262
        %v4264 = vsel %vm3360, %v3589, -inf
        %v4265 = vrot.slane %v4264, 4
        %v4266 = vmax.f32 %v4264, %v4265
        %v4267 = vrot.slane %v4266, 2
        %v4268 = vmax.f32 %v4266, %v4267
        %v4269 = vrot.slane %v4268, 1
        %v4270 = vmax.f32 %v4268, %v4269
        %v4271 = vsel %vm3360, %v3588, -inf
        %v4272 = vrot.slane %v4271, 4
        %v4273 = vmax.f32 %v4271, %v4272
        %v4274 = vrot.slane %v4273, 2
        %v4275 = vmax.f32 %v4273, %v4274
        %v4276 = vrot.slane %v4275, 1
        %v4277 = vmax.f32 %v4275, %v4276
        %v4278 = vsel %vm3360, %v3590, -inf
        %v4279 = vrot.slane %v4278, 4
        %v4280 = vmax.f32 %v4278, %v4279
        %v4281 = vrot.slane %v4280, 2
        %v4282 = vmax.f32 %v4280, %v4281
        %v4283 = vrot.slane %v4282, 1
        %v4284 = vmax.f32 %v4282, %v4283
        %v4285 = vsel %vm3360, %v3598, -inf
        %v4286 = vrot.slane %v4285, 4
        %v4287 = vmax.f32 %v4285, %v4286
        %v4288 = vrot.slane %v4287, 2
        %v4289 = vmax.f32 %v4287, %v4288
        %v4290 = vrot.slane %v4289, 1
        %v4291 = vmax.f32 %v4289, %v4290
        %v4292 = vsel %vm3360, %v3606, -inf
        %v4293 = vrot.slane %v4292, 4
        %v4294 = vmax.f32 %v4292, %v4293
        %v4295 = vrot.slane %v4294, 2
        %v4296 = vmax.f32 %v4294, %v4295
        %v4297 = vrot.slane %v4296, 1
        %v4298 = vmax.f32 %v4296, %v4297
        %v4299 = vsel %vm3360, %v3605, -inf
        %v4300 = vrot.slane %v4299, 4
        %v4301 = vmax.f32 %v4299, %v4300
        %v4302 = vrot.slane %v4301, 2
        %v4303 = vmax.f32 %v4301, %v4302
        %v4304 = vrot.slane %v4303, 1
        %v4305 = vmax.f32 %v4303, %v4304
        %v4306 = vsel %vm3360, %v3607, -inf
        %v4307 = vrot.slane %v4306, 4
        %v4308 = vmax.f32 %v4306, %v4307
        %v4309 = vrot.slane %v4308, 2
        %v4310 = vmax.f32 %v4308, %v4309
        %v4311 = vrot.slane %v4310, 1
        %v4312 = vmax.f32 %v4310, %v4311
        %v4313 = vsel %vm3360, %v3615, -inf
        %v4314 = vrot.slane %v4313, 4
        %v4315 = vmax.f32 %v4313, %v4314
        %v4316 = vrot.slane %v4315, 2
        %v4317 = vmax.f32 %v4315, %v4316
        %v4318 = vrot.slane %v4317, 1
        %v4319 = vmax.f32 %v4317, %v4318
        %v4320 = vsel %vm3360, %v3623, -inf
        %v4321 = vrot.slane %v4320, 4
        %v4322 = vmax.f32 %v4320, %v4321
        %v4323 = vrot.slane %v4322, 2
        %v4324 = vmax.f32 %v4322, %v4323
        %v4325 = vrot.slane %v4324, 1
        %v4326 = vmax.f32 %v4324, %v4325
        %v4327 = vsel %vm3360, %v3622, -inf
        %v4328 = vrot.slane %v4327, 4
        %v4329 = vmax.f32 %v4327, %v4328
        %v4330 = vrot.slane %v4329, 2
        %v4331 = vmax.f32 %v4329, %v4330
        %v4332 = vrot.slane %v4331, 1
        %v4333 = vmax.f32 %v4331, %v4332
        %v4334 = vsel %vm3360, %v3624, -inf
        %v4335 = vrot.slane %v4334, 4
        %v4336 = vmax.f32 %v4334, %v4335
        %v4337 = vrot.slane %v4336, 2
        %v4338 = vmax.f32 %v4336, %v4337
        %v4339 = vrot.slane %v4338, 1
        %v4340 = vmax.f32 %v4338, %v4339
        %v4341 = vsel %vm3360, %v3632, -inf
        %v4342 = vrot.slane %v4341, 4
        %v4343 = vmax.f32 %v4341, %v4342
        %v4344 = vrot.slane %v4343, 2
        %v4345 = vmax.f32 %v4343, %v4344
        %v4346 = vrot.slane %v4345, 1
        %v4347 = vmax.f32 %v4345, %v4346
        %v4348 = vsel %vm3360, %v3640, -inf
        %v4349 = vrot.slane %v4348, 4
        %v4350 = vmax.f32 %v4348, %v4349
        %v4351 = vrot.slane %v4350, 2
        %v4352 = vmax.f32 %v4350, %v4351
        %v4353 = vrot.slane %v4352, 1
        %v4354 = vmax.f32 %v4352, %v4353
        %v4355 = vsel %vm3360, %v3639, -inf
        %v4356 = vrot.slane %v4355, 4
        %v4357 = vmax.f32 %v4355, %v4356
        %v4358 = vrot.slane %v4357, 2
        %v4359 = vmax.f32 %v4357, %v4358
        %v4360 = vrot.slane %v4359, 1
        %v4361 = vmax.f32 %v4359, %v4360
        %v4362 = vsel %vm3360, %v3641, -inf
        %v4363 = vrot.slane %v4362, 4
        %v4364 = vmax.f32 %v4362, %v4363
        %v4365 = vrot.slane %v4364, 2
        %v4366 = vmax.f32 %v4364, %v4365
        %v4367 = vrot.slane %v4366, 1
        %v4368 = vmax.f32 %v4366, %v4367
        %v4369 = vsel %vm3360, %v3649, -inf
        %v4370 = vrot.slane %v4369, 4
        %v4371 = vmax.f32 %v4369, %v4370
        %v4372 = vrot.slane %v4371, 2
        %v4373 = vmax.f32 %v4371, %v4372
        %v4374 = vrot.slane %v4373, 1
        %v4375 = vmax.f32 %v4373, %v4374
        %v4376 = vsel %vm3360, %v3657, -inf
        %v4377 = vrot.slane %v4376, 4
        %v4378 = vmax.f32 %v4376, %v4377
        %v4379 = vrot.slane %v4378, 2
        %v4380 = vmax.f32 %v4378, %v4379
        %v4381 = vrot.slane %v4380, 1
        %v4382 = vmax.f32 %v4380, %v4381
        %v4383 = vsel %vm3360, %v3656, -inf
        %v4384 = vrot.slane %v4383, 4
        %v4385 = vmax.f32 %v4383, %v4384
        %v4386 = vrot.slane %v4385, 2
        %v4387 = vmax.f32 %v4385, %v4386
        %v4388 = vrot.slane %v4387, 1
        %v4389 = vmax.f32 %v4387, %v4388
        %v4390 = vsel %vm3360, %v3658, -inf
        %v4391 = vrot.slane %v4390, 4
        %v4392 = vmax.f32 %v4390, %v4391
        %v4393 = vrot.slane %v4392, 2
        %v4394 = vmax.f32 %v4392, %v4393
        %v4395 = vrot.slane %v4394, 1
        %v4396 = vmax.f32 %v4394, %v4395
        %v4397 = vsel %vm3360, %v3666, -inf
        %v4398 = vrot.slane %v4397, 4
        %v4399 = vmax.f32 %v4397, %v4398
        %v4400 = vrot.slane %v4399, 2
        %v4401 = vmax.f32 %v4399, %v4400
        %v4402 = vrot.slane %v4401, 1
        %v4403 = vmax.f32 %v4401, %v4402
        %v4404 = vsel %vm3360, %v3674, -inf
        %v4405 = vrot.slane %v4404, 4
        %v4406 = vmax.f32 %v4404, %v4405
        %v4407 = vrot.slane %v4406, 2
        %v4408 = vmax.f32 %v4406, %v4407
        %v4409 = vrot.slane %v4408, 1
        %v4410 = vmax.f32 %v4408, %v4409
        %v4411 = vsel %vm3360, %v3673, -inf
        %v4412 = vrot.slane %v4411, 4
        %v4413 = vmax.f32 %v4411, %v4412
        %v4414 = vrot.slane %v4413, 2
        %v4415 = vmax.f32 %v4413, %v4414
        %v4416 = vrot.slane %v4415, 1
        %v4417 = vmax.f32 %v4415, %v4416
        %v4418 = vsel %vm3360, %v3675, -inf
        %v4419 = vrot.slane %v4418, 4
        %v4420 = vmax.f32 %v4418, %v4419
        %v4421 = vrot.slane %v4420, 2
        %v4422 = vmax.f32 %v4420, %v4421
        %v4423 = vrot.slane %v4422, 1
        %v4424 = vmax.f32 %v4422, %v4423
        %v4425 = vsel %vm3360, %v3683, -inf
        %v4426 = vrot.slane %v4425, 4
        %v4427 = vmax.f32 %v4425, %v4426
        %v4428 = vrot.slane %v4427, 2
        %v4429 = vmax.f32 %v4427, %v4428
        %v4430 = vrot.slane %v4429, 1
        %v4431 = vmax.f32 %v4429, %v4430
        %v4432 = vsel %vm3360, %v3691, -inf
        %v4433 = vrot.slane %v4432, 4
        %v4434 = vmax.f32 %v4432, %v4433
        %v4435 = vrot.slane %v4434, 2
        %v4436 = vmax.f32 %v4434, %v4435
        %v4437 = vrot.slane %v4436, 1
        %v4438 = vmax.f32 %v4436, %v4437
        %v4439 = vsel %vm3360, %v3690, -inf
        %v4440 = vrot.slane %v4439, 4
        %v4441 = vmax.f32 %v4439, %v4440
        %v4442 = vrot.slane %v4441, 2
        %v4443 = vmax.f32 %v4441, %v4442
        %v4444 = vrot.slane %v4443, 1
        %v4445 = vmax.f32 %v4443, %v4444
        %v4446 = vsel %vm3360, %v3692, -inf
        %v4447 = vrot.slane %v4446, 4
        %v4448 = vmax.f32 %v4446, %v4447
        %v4449 = vrot.slane %v4448, 2
        %v4450 = vmax.f32 %v4448, %v4449
        %v4451 = vrot.slane %v4450, 1
        %v4452 = vmax.f32 %v4450, %v4451
        %v4453 = vsel %vm3360, %v3700, -inf
        %v4454 = vrot.slane %v4453, 4
        %v4455 = vmax.f32 %v4453, %v4454
        %v4456 = vrot.slane %v4455, 2
        %v4457 = vmax.f32 %v4455, %v4456
        %v4458 = vrot.slane %v4457, 1
        %v4459 = vmax.f32 %v4457, %v4458
        %v4460 = vsel %vm3360, %v3708, -inf
        %v4461 = vrot.slane %v4460, 4
        %v4462 = vmax.f32 %v4460, %v4461
        %v4463 = vrot.slane %v4462, 2
        %v4464 = vmax.f32 %v4462, %v4463
        %v4465 = vrot.slane %v4464, 1
        %v4466 = vmax.f32 %v4464, %v4465
        %v4467 = vsel %vm3360, %v3707, -inf
        %v4468 = vrot.slane %v4467, 4
        %v4469 = vmax.f32 %v4467, %v4468
        %v4470 = vrot.slane %v4469, 2
        %v4471 = vmax.f32 %v4469, %v4470
        %v4472 = vrot.slane %v4471, 1
        %v4473 = vmax.f32 %v4471, %v4472
        %v4474 = vsel %vm3360, %v3709, -inf
        %v4475 = vrot.slane %v4474, 4
        %v4476 = vmax.f32 %v4474, %v4475
        %v4477 = vrot.slane %v4476, 2
        %v4478 = vmax.f32 %v4476, %v4477
        %v4479 = vrot.slane %v4478, 1
        %v4480 = vmax.f32 %v4478, %v4479
        %v4481 = vsel %vm3360, %v3717, -inf
        %v4482 = vrot.slane %v4481, 4
        %v4483 = vmax.f32 %v4481, %v4482
        %v4484 = vrot.slane %v4483, 2
        %v4485 = vmax.f32 %v4483, %v4484
        %v4486 = vrot.slane %v4485, 1
        %v4487 = vmax.f32 %v4485, %v4486
        %v4488 = vsel %vm3360, %v3725, -inf
        %v4489 = vrot.slane %v4488, 4
        %v4490 = vmax.f32 %v4488, %v4489
        %v4491 = vrot.slane %v4490, 2
        %v4492 = vmax.f32 %v4490, %v4491
        %v4493 = vrot.slane %v4492, 1
        %v4494 = vmax.f32 %v4492, %v4493
        %v4495 = vsel %vm3360, %v3724, -inf
        %v4496 = vrot.slane %v4495, 4
        %v4497 = vmax.f32 %v4495, %v4496
        %v4498 = vrot.slane %v4497, 2
        %v4499 = vmax.f32 %v4497, %v4498
        %v4500 = vrot.slane %v4499, 1
        %v4501 = vmax.f32 %v4499, %v4500
        %v4502 = vsel %vm3360, %v3726, -inf
        %v4503 = vrot.slane %v4502, 4
        %v4504 = vmax.f32 %v4502, %v4503
        %v4505 = vrot.slane %v4504, 2
        %v4506 = vmax.f32 %v4504, %v4505
        %v4507 = vrot.slane %v4506, 1
        %v4508 = vmax.f32 %v4506, %v4507
        %v4509 = vsel %vm3360, %v3734, -inf
        %v4510 = vrot.slane %v4509, 4
        %v4511 = vmax.f32 %v4509, %v4510
        %v4512 = vrot.slane %v4511, 2
        %v4513 = vmax.f32 %v4511, %v4512
        %v4514 = vrot.slane %v4513, 1
        %v4515 = vmax.f32 %v4513, %v4514
        %v4516 = vsel %vm3360, %v3742, -inf
        %v4517 = vrot.slane %v4516, 4
        %v4518 = vmax.f32 %v4516, %v4517
        %v4519 = vrot.slane %v4518, 2
        %v4520 = vmax.f32 %v4518, %v4519
        %v4521 = vrot.slane %v4520, 1
        %v4522 = vmax.f32 %v4520, %v4521
        %v4523 = vsel %vm3360, %v3741, -inf
        %v4524 = vrot.slane %v4523, 4
        %v4525 = vmax.f32 %v4523, %v4524
        %v4526 = vrot.slane %v4525, 2
        %v4527 = vmax.f32 %v4525, %v4526
        %v4528 = vrot.slane %v4527, 1
        %v4529 = vmax.f32 %v4527, %v4528
        %v4530 = vsel %vm3360, %v3743, -inf
        %v4531 = vrot.slane %v4530, 4
        %v4532 = vmax.f32 %v4530, %v4531
        %v4533 = vrot.slane %v4532, 2
        %v4534 = vmax.f32 %v4532, %v4533
        %v4535 = vrot.slane %v4534, 1
        %v4536 = vmax.f32 %v4534, %v4535
        %v4537 = vsel %vm3360, %v3751, -inf
        %v4538 = vrot.slane %v4537, 4
        %v4539 = vmax.f32 %v4537, %v4538
        %v4540 = vrot.slane %v4539, 2
        %v4541 = vmax.f32 %v4539, %v4540
        %v4542 = vrot.slane %v4541, 1
        %v4543 = vmax.f32 %v4541, %v4542
        %v4544 = vsel %vm3360, %v3759, -inf
        %v4545 = vrot.slane %v4544, 4
        %v4546 = vmax.f32 %v4544, %v4545
        %v4547 = vrot.slane %v4546, 2
        %v4548 = vmax.f32 %v4546, %v4547
        %v4549 = vrot.slane %v4548, 1
        %v4550 = vmax.f32 %v4548, %v4549
        %v4551 = vsel %vm3360, %v3758, -inf
        %v4552 = vrot.slane %v4551, 4
        %v4553 = vmax.f32 %v4551, %v4552
        %v4554 = vrot.slane %v4553, 2
        %v4555 = vmax.f32 %v4553, %v4554
        %v4556 = vrot.slane %v4555, 1
        %v4557 = vmax.f32 %v4555, %v4556
        %v4558 = vsel %vm3360, %v3760, -inf
        %v4559 = vrot.slane %v4558, 4
        %v4560 = vmax.f32 %v4558, %v4559
        %v4561 = vrot.slane %v4560, 2
        %v4562 = vmax.f32 %v4560, %v4561
        %v4563 = vrot.slane %v4562, 1
        %v4564 = vmax.f32 %v4562, %v4563
        %v4565 = vsel %vm3360, %v3768, -inf
        %v4566 = vrot.slane %v4565, 4
        %v4567 = vmax.f32 %v4565, %v4566
        %v4568 = vrot.slane %v4567, 2
        %v4569 = vmax.f32 %v4567, %v4568
        %v4570 = vrot.slane %v4569, 1
        %v4571 = vmax.f32 %v4569, %v4570
        %v4572 = vsel %vm3360, %v3776, -inf
        %v4573 = vrot.slane %v4572, 4
        %v4574 = vmax.f32 %v4572, %v4573
        %v4575 = vrot.slane %v4574, 2
        %v4576 = vmax.f32 %v4574, %v4575
        %v4577 = vrot.slane %v4576, 1
        %v4578 = vmax.f32 %v4576, %v4577
        %v4579 = vsel %vm3360, %v3775, -inf
        %v4580 = vrot.slane %v4579, 4
        %v4581 = vmax.f32 %v4579, %v4580
        %v4582 = vrot.slane %v4581, 2
        %v4583 = vmax.f32 %v4581, %v4582
        %v4584 = vrot.slane %v4583, 1
        %v4585 = vmax.f32 %v4583, %v4584
        %v4586 = vsel %vm3360, %v3777, -inf
        %v4587 = vrot.slane %v4586, 4
        %v4588 = vmax.f32 %v4586, %v4587
        %v4589 = vrot.slane %v4588, 2
        %v4590 = vmax.f32 %v4588, %v4589
        %v4591 = vrot.slane %v4590, 1
        %v4592 = vmax.f32 %v4590, %v4591
        %v4593 = vsel %vm3360, %v3785, -inf
        %v4594 = vrot.slane %v4593, 4
        %v4595 = vmax.f32 %v4593, %v4594
        %v4596 = vrot.slane %v4595, 2
        %v4597 = vmax.f32 %v4595, %v4596
        %v4598 = vrot.slane %v4597, 1
        %v4599 = vmax.f32 %v4597, %v4598
        %v4600 = vsel %vm3360, %v3793, -inf
        %v4601 = vrot.slane %v4600, 4
        %v4602 = vmax.f32 %v4600, %v4601
        %v4603 = vrot.slane %v4602, 2
        %v4604 = vmax.f32 %v4602, %v4603
        %v4605 = vrot.slane %v4604, 1
        %v4606 = vmax.f32 %v4604, %v4605
        %v4607 = vsel %vm3360, %v3792, -inf
        %v4608 = vrot.slane %v4607, 4
        %v4609 = vmax.f32 %v4607, %v4608
        %v4610 = vrot.slane %v4609, 2
        %v4611 = vmax.f32 %v4609, %v4610
        %v4612 = vrot.slane %v4611, 1
        %v4613 = vmax.f32 %v4611, %v4612
        %v4614 = vsel %vm3360, %v3794, -inf
        %v4615 = vrot.slane %v4614, 4
        %v4616 = vmax.f32 %v4614, %v4615
        %v4617 = vrot.slane %v4616, 2
        %v4618 = vmax.f32 %v4616, %v4617
        %v4619 = vrot.slane %v4618, 1
        %v4620 = vmax.f32 %v4618, %v4619
        %v4621 = vsel %vm3360, %v3802, -inf
        %v4622 = vrot.slane %v4621, 4
        %v4623 = vmax.f32 %v4621, %v4622
        %v4624 = vrot.slane %v4623, 2
        %v4625 = vmax.f32 %v4623, %v4624
        %v4626 = vrot.slane %v4625, 1
        %v4627 = vmax.f32 %v4625, %v4626
        %v4628 = vsel %vm3360, %v3810, -inf
        %v4629 = vrot.slane %v4628, 4
        %v4630 = vmax.f32 %v4628, %v4629
        %v4631 = vrot.slane %v4630, 2
        %v4632 = vmax.f32 %v4630, %v4631
        %v4633 = vrot.slane %v4632, 1
        %v4634 = vmax.f32 %v4632, %v4633
        %v4635 = vsel %vm3360, %v3809, -inf
        %v4636 = vrot.slane %v4635, 4
        %v4637 = vmax.f32 %v4635, %v4636
        %v4638 = vrot.slane %v4637, 2
        %v4639 = vmax.f32 %v4637, %v4638
        %v4640 = vrot.slane %v4639, 1
        %v4641 = vmax.f32 %v4639, %v4640
        %v4642 = vsel %vm3360, %v3811, -inf
        %v4643 = vrot.slane %v4642, 4
        %v4644 = vmax.f32 %v4642, %v4643
        %v4645 = vrot.slane %v4644, 2
        %v4646 = vmax.f32 %v4644, %v4645
        %v4647 = vrot.slane %v4646, 1
        %v4648 = vmax.f32 %v4646, %v4647
        %v4649 = vsel %vm3360, %v3819, -inf
        %v4650 = vrot.slane %v4649, 4
        %v4651 = vmax.f32 %v4649, %v4650
        %v4652 = vrot.slane %v4651, 2
        %v4653 = vmax.f32 %v4651, %v4652
        %v4654 = vrot.slane %v4653, 1
        %v4655 = vmax.f32 %v4653, %v4654
        %v4656 = vsel %vm3360, %v3827, -inf
        %v4657 = vrot.slane %v4656, 4
        %v4658 = vmax.f32 %v4656, %v4657
        %v4659 = vrot.slane %v4658, 2
        %v4660 = vmax.f32 %v4658, %v4659
        %v4661 = vrot.slane %v4660, 1
        %v4662 = vmax.f32 %v4660, %v4661
        %v4663 = vsel %vm3360, %v3826, -inf
        %v4664 = vrot.slane %v4663, 4
        %v4665 = vmax.f32 %v4663, %v4664
        %v4666 = vrot.slane %v4665, 2
        %v4667 = vmax.f32 %v4665, %v4666
        %v4668 = vrot.slane %v4667, 1
        %v4669 = vmax.f32 %v4667, %v4668
        %v4670 = vsel %vm3360, %v3828, -inf
        %v4671 = vrot.slane %v4670, 4
        %v4672 = vmax.f32 %v4670, %v4671
        %v4673 = vrot.slane %v4672, 2
        %v4674 = vmax.f32 %v4672, %v4673
        %v4675 = vrot.slane %v4674, 1
        %v4676 = vmax.f32 %v4674, %v4675
        %v4677 = vsel %vm3360, %v3836, -inf
        %v4678 = vrot.slane %v4677, 4
        %v4679 = vmax.f32 %v4677, %v4678
        %v4680 = vrot.slane %v4679, 2
        %v4681 = vmax.f32 %v4679, %v4680
        %v4682 = vrot.slane %v4681, 1
        %v4683 = vmax.f32 %v4681, %v4682
        %v4684 = vsel %vm3360, %v3844, -inf
        %v4685 = vrot.slane %v4684, 4
        %v4686 = vmax.f32 %v4684, %v4685
        %v4687 = vrot.slane %v4686, 2
        %v4688 = vmax.f32 %v4686, %v4687
        %v4689 = vrot.slane %v4688, 1
        %v4690 = vmax.f32 %v4688, %v4689
        %v4691 = vsel %vm3360, %v3843, -inf
        %v4692 = vrot.slane %v4691, 4
        %v4693 = vmax.f32 %v4691, %v4692
        %v4694 = vrot.slane %v4693, 2
        %v4695 = vmax.f32 %v4693, %v4694
        %v4696 = vrot.slane %v4695, 1
        %v4697 = vmax.f32 %v4695, %v4696
        %v4698 = vsel %vm3360, %v3845, -inf
        %v4699 = vrot.slane %v4698, 4
        %v4700 = vmax.f32 %v4698, %v4699
        %v4701 = vrot.slane %v4700, 2
        %v4702 = vmax.f32 %v4700, %v4701
        %v4703 = vrot.slane %v4702, 1
        %v4704 = vmax.f32 %v4702, %v4703
        %v4705 = vsel %vm3360, %v3853, -inf
        %v4706 = vrot.slane %v4705, 4
        %v4707 = vmax.f32 %v4705, %v4706
        %v4708 = vrot.slane %v4707, 2
        %v4709 = vmax.f32 %v4707, %v4708
        %v4710 = vrot.slane %v4709, 1
        %v4711 = vmax.f32 %v4709, %v4710
        %v4712 = vsel %vm3360, %v3861, -inf
        %v4713 = vrot.slane %v4712, 4
        %v4714 = vmax.f32 %v4712, %v4713
        %v4715 = vrot.slane %v4714, 2
        %v4716 = vmax.f32 %v4714, %v4715
        %v4717 = vrot.slane %v4716, 1
        %v4718 = vmax.f32 %v4716, %v4717
        %v4719 = vsel %vm3360, %v3860, -inf
        %v4720 = vrot.slane %v4719, 4
        %v4721 = vmax.f32 %v4719, %v4720
        %v4722 = vrot.slane %v4721, 2
        %v4723 = vmax.f32 %v4721, %v4722
        %v4724 = vrot.slane %v4723, 1
        %v4725 = vmax.f32 %v4723, %v4724
        %v4726 = vsel %vm3360, %v3862, -inf
        %v4727 = vrot.slane %v4726, 4
        %v4728 = vmax.f32 %v4726, %v4727
        %v4729 = vrot.slane %v4728, 2
        %v4730 = vmax.f32 %v4728, %v4729
        %v4731 = vrot.slane %v4730, 1
        %v4732 = vmax.f32 %v4730, %v4731
        %v4733 = vsel %vm3360, %v3870, -inf
        %v4734 = vrot.slane %v4733, 4
        %v4735 = vmax.f32 %v4733, %v4734
        %v4736 = vrot.slane %v4735, 2
        %v4737 = vmax.f32 %v4735, %v4736
        %v4738 = vrot.slane %v4737, 1
        %v4739 = vmax.f32 %v4737, %v4738
        %v4740 = vsel %vm3360, %v3878, -inf
        %v4741 = vrot.slane %v4740, 4
        %v4742 = vmax.f32 %v4740, %v4741
        %v4743 = vrot.slane %v4742, 2
        %v4744 = vmax.f32 %v4742, %v4743
        %v4745 = vrot.slane %v4744, 1
        %v4746 = vmax.f32 %v4744, %v4745
        %v4747 = vsel %vm3360, %v3877, -inf
        %v4748 = vrot.slane %v4747, 4
        %v4749 = vmax.f32 %v4747, %v4748
        %v4750 = vrot.slane %v4749, 2
        %v4751 = vmax.f32 %v4749, %v4750
        %v4752 = vrot.slane %v4751, 1
        %v4753 = vmax.f32 %v4751, %v4752
        %v4754 = vsel %vm3360, %v3879, -inf
        %v4755 = vrot.slane %v4754, 4
        %v4756 = vmax.f32 %v4754, %v4755
        %v4757 = vrot.slane %v4756, 2
        %v4758 = vmax.f32 %v4756, %v4757
        %v4759 = vrot.slane %v4758, 1
        %v4760 = vmax.f32 %v4758, %v4759
        %v4761 = vsel %vm3360, %v3887, -inf
        %v4762 = vrot.slane %v4761, 4
        %v4763 = vmax.f32 %v4761, %v4762
        %v4764 = vrot.slane %v4763, 2
        %v4765 = vmax.f32 %v4763, %v4764
        %v4766 = vrot.slane %v4765, 1
        %v4767 = vmax.f32 %v4765, %v4766
        %v4768 = vsel %vm3360, %v3895, -inf
        %v4769 = vrot.slane %v4768, 4
        %v4770 = vmax.f32 %v4768, %v4769
        %v4771 = vrot.slane %v4770, 2
        %v4772 = vmax.f32 %v4770, %v4771
        %v4773 = vrot.slane %v4772, 1
        %v4774 = vmax.f32 %v4772, %v4773
        %v4775 = vsel %vm3360, %v3894, -inf
        %v4776 = vrot.slane %v4775, 4
        %v4777 = vmax.f32 %v4775, %v4776
        %v4778 = vrot.slane %v4777, 2
        %v4779 = vmax.f32 %v4777, %v4778
        %v4780 = vrot.slane %v4779, 1
        %v4781 = vmax.f32 %v4779, %v4780
        %v4782 = vsel %vm3360, %v3896, -inf
        %v4783 = vrot.slane %v4782, 4
        %v4784 = vmax.f32 %v4782, %v4783
        %v4785 = vrot.slane %v4784, 2
        %v4786 = vmax.f32 %v4784, %v4785
        %v4787 = vrot.slane %v4786, 1
        %v4788 = vmax.f32 %v4786, %v4787
        %v4789 = vsel %vm3360, %v3904, -inf
        %v4790 = vrot.slane %v4789, 4
        %v4791 = vmax.f32 %v4789, %v4790
        %v4792 = vrot.slane %v4791, 2
        %v4793 = vmax.f32 %v4791, %v4792
        %v4794 = vrot.slane %v4793, 1
        %v4795 = vmax.f32 %v4793, %v4794
        %v4796 = vsel %vm3360, %v3912, -inf
        %v4797 = vrot.slane %v4796, 4
        %v4798 = vmax.f32 %v4796, %v4797
        %v4799 = vrot.slane %v4798, 2
        %v4800 = vmax.f32 %v4798, %v4799
        %v4801 = vrot.slane %v4800, 1
        %v4802 = vmax.f32 %v4800, %v4801
        %v4803 = vsel %vm3360, %v3911, -inf
        %v4804 = vrot.slane %v4803, 4
        %v4805 = vmax.f32 %v4803, %v4804
        %v4806 = vrot.slane %v4805, 2
        %v4807 = vmax.f32 %v4805, %v4806
        %v4808 = vrot.slane %v4807, 1
        %v4809 = vmax.f32 %v4807, %v4808
        %v4810 = vsel %vm3360, %v3913, -inf
        %v4811 = vrot.slane %v4810, 4
        %v4812 = vmax.f32 %v4810, %v4811
        %v4813 = vrot.slane %v4812, 2
        %v4814 = vmax.f32 %v4812, %v4813
        %v4815 = vrot.slane %v4814, 1
        %v4816 = vmax.f32 %v4814, %v4815
        %v4817 = vsel %vm3360, %v3921, -inf
        %v4818 = vrot.slane %v4817, 4
        %v4819 = vmax.f32 %v4817, %v4818
        %v4820 = vrot.slane %v4819, 2
        %v4821 = vmax.f32 %v4819, %v4820
        %v4822 = vrot.slane %v4821, 1
        %v4823 = vmax.f32 %v4821, %v4822
        %v4824 = vsel %vm3360, %v3929, -inf
        %v4825 = vrot.slane %v4824, 4
        %v4826 = vmax.f32 %v4824, %v4825
        %v4827 = vrot.slane %v4826, 2
        %v4828 = vmax.f32 %v4826, %v4827
        %v4829 = vrot.slane %v4828, 1
        %v4830 = vmax.f32 %v4828, %v4829
        %v4831 = vsel %vm3360, %v3928, -inf
        %v4832 = vrot.slane %v4831, 4
        %v4833 = vmax.f32 %v4831, %v4832
        %v4834 = vrot.slane %v4833, 2
        %v4835 = vmax.f32 %v4833, %v4834
        %v4836 = vrot.slane %v4835, 1
        %v4837 = vmax.f32 %v4835, %v4836
        %v4838 = vsel %vm3360, %v3930, -inf
        %v4839 = vrot.slane %v4838, 4
        %v4840 = vmax.f32 %v4838, %v4839
        %v4841 = vrot.slane %v4840, 2
        %v4842 = vmax.f32 %v4840, %v4841
        %v4843 = vrot.slane %v4842, 1
        %v4844 = vmax.f32 %v4842, %v4843
        %v4845 = vsel %vm3360, %v3938, -inf
        %v4846 = vrot.slane %v4845, 4
        %v4847 = vmax.f32 %v4845, %v4846
        %v4848 = vrot.slane %v4847, 2
        %v4849 = vmax.f32 %v4847, %v4848
        %v4850 = vrot.slane %v4849, 1
        %v4851 = vmax.f32 %v4849, %v4850
        %v4852 = vsel %vm3360, %v3946, -inf
        %v4853 = vrot.slane %v4852, 4
        %v4854 = vmax.f32 %v4852, %v4853
        %v4855 = vrot.slane %v4854, 2
        %v4856 = vmax.f32 %v4854, %v4855
        %v4857 = vrot.slane %v4856, 1
        %v4858 = vmax.f32 %v4856, %v4857
        %v4859 = vsel %vm3360, %v3945, -inf
        %v4860 = vrot.slane %v4859, 4
        %v4861 = vmax.f32 %v4859, %v4860
        %v4862 = vrot.slane %v4861, 2
        %v4863 = vmax.f32 %v4861, %v4862
        %v4864 = vrot.slane %v4863, 1
        %v4865 = vmax.f32 %v4863, %v4864
        %v4866 = vsel %vm3360, %v3947, -inf
        %v4867 = vrot.slane %v4866, 4
        %v4868 = vmax.f32 %v4866, %v4867
        %v4869 = vrot.slane %v4868, 2
        %v4870 = vmax.f32 %v4868, %v4869
        %v4871 = vrot.slane %v4870, 1
        %v4872 = vmax.f32 %v4870, %v4871
        %v4873 = vsel %vm3360, %v3955, -inf
        %v4874 = vrot.slane %v4873, 4
        %v4875 = vmax.f32 %v4873, %v4874
        %v4876 = vrot.slane %v4875, 2
        %v4877 = vmax.f32 %v4875, %v4876
        %v4878 = vrot.slane %v4877, 1
        %v4879 = vmax.f32 %v4877, %v4878
        %v4880 = vsel %vm3360, %v3963, -inf
        %v4881 = vrot.slane %v4880, 4
        %v4882 = vmax.f32 %v4880, %v4881
        %v4883 = vrot.slane %v4882, 2
        %v4884 = vmax.f32 %v4882, %v4883
        %v4885 = vrot.slane %v4884, 1
        %v4886 = vmax.f32 %v4884, %v4885
        %v4887 = vsel %vm3360, %v3962, -inf
        %v4888 = vrot.slane %v4887, 4
        %v4889 = vmax.f32 %v4887, %v4888
        %v4890 = vrot.slane %v4889, 2
        %v4891 = vmax.f32 %v4889, %v4890
        %v4892 = vrot.slane %v4891, 1
        %v4893 = vmax.f32 %v4891, %v4892
        %v4894 = vsel %vm3360, %v3964, -inf
        %v4895 = vrot.slane %v4894, 4
        %v4896 = vmax.f32 %v4894, %v4895
        %v4897 = vrot.slane %v4896, 2
        %v4898 = vmax.f32 %v4896, %v4897
        %v4899 = vrot.slane %v4898, 1
        %v4900 = vmax.f32 %v4898, %v4899
        %v4901 = vsel %vm3360, %v3972, -inf
        %v4902 = vrot.slane %v4901, 4
        %v4903 = vmax.f32 %v4901, %v4902
        %v4904 = vrot.slane %v4903, 2
        %v4905 = vmax.f32 %v4903, %v4904
        %v4906 = vrot.slane %v4905, 1
        %v4907 = vmax.f32 %v4905, %v4906
        %v4908 = vsel %vm3360, %v3980, -inf
        %v4909 = vrot.slane %v4908, 4
        %v4910 = vmax.f32 %v4908, %v4909
        %v4911 = vrot.slane %v4910, 2
        %v4912 = vmax.f32 %v4910, %v4911
        %v4913 = vrot.slane %v4912, 1
        %v4914 = vmax.f32 %v4912, %v4913
        %v4915 = vsel %vm3360, %v3979, -inf
        %v4916 = vrot.slane %v4915, 4
        %v4917 = vmax.f32 %v4915, %v4916
        %v4918 = vrot.slane %v4917, 2
        %v4919 = vmax.f32 %v4917, %v4918
        %v4920 = vrot.slane %v4919, 1
        %v4921 = vmax.f32 %v4919, %v4920
        %v4922 = vsel %vm3360, %v3981, -inf
        %v4923 = vrot.slane %v4922, 4
        %v4924 = vmax.f32 %v4922, %v4923
        %v4925 = vrot.slane %v4924, 2
        %v4926 = vmax.f32 %v4924, %v4925
        %v4927 = vrot.slane %v4926, 1
        %v4928 = vmax.f32 %v4926, %v4927
        %v4929 = vsel %vm3360, %v3989, -inf
        %v4930 = vrot.slane %v4929, 4
        %v4931 = vmax.f32 %v4929, %v4930
        %v4932 = vrot.slane %v4931, 2
        %v4933 = vmax.f32 %v4931, %v4932
        %v4934 = vrot.slane %v4933, 1
        %v4935 = vmax.f32 %v4933, %v4934
        %v4936 = vsel %vm3360, %v3997, -inf
        %v4937 = vrot.slane %v4936, 4
        %v4938 = vmax.f32 %v4936, %v4937
        %v4939 = vrot.slane %v4938, 2
        %v4940 = vmax.f32 %v4938, %v4939
        %v4941 = vrot.slane %v4940, 1
        %v4942 = vmax.f32 %v4940, %v4941
        %v4943 = vsel %vm3360, %v3996, -inf
        %v4944 = vrot.slane %v4943, 4
        %v4945 = vmax.f32 %v4943, %v4944
        %v4946 = vrot.slane %v4945, 2
        %v4947 = vmax.f32 %v4945, %v4946
        %v4948 = vrot.slane %v4947, 1
        %v4949 = vmax.f32 %v4947, %v4948
        %v4950 = vsel %vm3360, %v3998, -inf
        %v4951 = vrot.slane %v4950, 4
        %v4952 = vmax.f32 %v4950, %v4951
        %v4953 = vrot.slane %v4952, 2
        %v4954 = vmax.f32 %v4952, %v4953
        %v4955 = vrot.slane %v4954, 1
        %v4956 = vmax.f32 %v4954, %v4955
        %v4957 = vsel %vm3360, %v4006, -inf
        %v4958 = vrot.slane %v4957, 4
        %v4959 = vmax.f32 %v4957, %v4958
        %v4960 = vrot.slane %v4959, 2
        %v4961 = vmax.f32 %v4959, %v4960
        %v4962 = vrot.slane %v4961, 1
        %v4963 = vmax.f32 %v4961, %v4962
        %v4964 = vsel %vm3360, %v4014, -inf
        %v4965 = vrot.slane %v4964, 4
        %v4966 = vmax.f32 %v4964, %v4965
        %v4967 = vrot.slane %v4966, 2
        %v4968 = vmax.f32 %v4966, %v4967
        %v4969 = vrot.slane %v4968, 1
        %v4970 = vmax.f32 %v4968, %v4969
        %v4971 = vsel %vm3360, %v4013, -inf
        %v4972 = vrot.slane %v4971, 4
        %v4973 = vmax.f32 %v4971, %v4972
        %v4974 = vrot.slane %v4973, 2
        %v4975 = vmax.f32 %v4973, %v4974
        %v4976 = vrot.slane %v4975, 1
        %v4977 = vmax.f32 %v4975, %v4976
        %v4978 = vsel %vm3360, %v4015, -inf
        %v4979 = vrot.slane %v4978, 4
        %v4980 = vmax.f32 %v4978, %v4979
        %v4981 = vrot.slane %v4980, 2
        %v4982 = vmax.f32 %v4980, %v4981
        %v4983 = vrot.slane %v4982, 1
        %v4984 = vmax.f32 %v4982, %v4983
        %v4985 = vsel %vm3360, %v4023, -inf
        %v4986 = vrot.slane %v4985, 4
        %v4987 = vmax.f32 %v4985, %v4986
        %v4988 = vrot.slane %v4987, 2
        %v4989 = vmax.f32 %v4987, %v4988
        %v4990 = vrot.slane %v4989, 1
        %v4991 = vmax.f32 %v4989, %v4990
        %v4992 = vsel %vm3360, %v4031, -inf
        %v4993 = vrot.slane %v4992, 4
        %v4994 = vmax.f32 %v4992, %v4993
        %v4995 = vrot.slane %v4994, 2
        %v4996 = vmax.f32 %v4994, %v4995
        %v4997 = vrot.slane %v4996, 1
        %v4998 = vmax.f32 %v4996, %v4997
        %v4999 = vsel %vm3360, %v4030, -inf
        %v5000 = vrot.slane %v4999, 4
        %v5001 = vmax.f32 %v4999, %v5000
        %v5002 = vrot.slane %v5001, 2
        %v5003 = vmax.f32 %v5001, %v5002
        %v5004 = vrot.slane %v5003, 1
        %v5005 = vmax.f32 %v5003, %v5004
        %v5006 = vsel %vm3360, %v4032, -inf
        %v5007 = vrot.slane %v5006, 4
        %v5008 = vmax.f32 %v5006, %v5007
        %v5009 = vrot.slane %v5008, 2
        %v5010 = vmax.f32 %v5008, %v5009
        %v5011 = vrot.slane %v5010, 1
        %v5012 = vmax.f32 %v5010, %v5011
        %v5013 = vsel %vm3360, %v4040, -inf
        %v5014 = vrot.slane %v5013, 4
        %v5015 = vmax.f32 %v5013, %v5014
        %v5016 = vrot.slane %v5015, 2
        %v5017 = vmax.f32 %v5015, %v5016
        %v5018 = vrot.slane %v5017, 1
        %v5019 = vmax.f32 %v5017, %v5018
        %v5020 = vsel %vm3360, %v4048, -inf
        %v5021 = vrot.slane %v5020, 4
        %v5022 = vmax.f32 %v5020, %v5021
        %v5023 = vrot.slane %v5022, 2
        %v5024 = vmax.f32 %v5022, %v5023
        %v5025 = vrot.slane %v5024, 1
        %v5026 = vmax.f32 %v5024, %v5025
        %v5027 = vsel %vm3360, %v4047, -inf
        %v5028 = vrot.slane %v5027, 4
        %v5029 = vmax.f32 %v5027, %v5028
        %v5030 = vrot.slane %v5029, 2
        %v5031 = vmax.f32 %v5029, %v5030
        %v5032 = vrot.slane %v5031, 1
        %v5033 = vmax.f32 %v5031, %v5032
        %v5034 = vsel %vm3360, %v4049, -inf
        %v5035 = vrot.slane %v5034, 4
        %v5036 = vmax.f32 %v5034, %v5035
        %v5037 = vrot.slane %v5036, 2
        %v5038 = vmax.f32 %v5036, %v5037
        %v5039 = vrot.slane %v5038, 1
        %v5040 = vmax.f32 %v5038, %v5039
        %v5041 = vsel %vm3360, %v4057, -inf
        %v5042 = vrot.slane %v5041, 4
        %v5043 = vmax.f32 %v5041, %v5042
        %v5044 = vrot.slane %v5043, 2
        %v5045 = vmax.f32 %v5043, %v5044
        %v5046 = vrot.slane %v5045, 1
        %v5047 = vmax.f32 %v5045, %v5046
        %v5048 = vsel %vm3360, %v4065, -inf
        %v5049 = vrot.slane %v5048, 4
        %v5050 = vmax.f32 %v5048, %v5049
        %v5051 = vrot.slane %v5050, 2
        %v5052 = vmax.f32 %v5050, %v5051
        %v5053 = vrot.slane %v5052, 1
        %v5054 = vmax.f32 %v5052, %v5053
        %v5055 = vsel %vm3360, %v4064, -inf
        %v5056 = vrot.slane %v5055, 4
        %v5057 = vmax.f32 %v5055, %v5056
        %v5058 = vrot.slane %v5057, 2
        %v5059 = vmax.f32 %v5057, %v5058
        %v5060 = vrot.slane %v5059, 1
        %v5061 = vmax.f32 %v5059, %v5060
        %v5062 = vsel %vm3360, %v4066, -inf
        %v5063 = vrot.slane %v5062, 4
        %v5064 = vmax.f32 %v5062, %v5063
        %v5065 = vrot.slane %v5064, 2
        %v5066 = vmax.f32 %v5064, %v5065
        %v5067 = vrot.slane %v5066, 1
        %v5068 = vmax.f32 %v5066, %v5067
        %v5069 = vsel %vm3360, %v4074, -inf
        %v5070 = vrot.slane %v5069, 4
        %v5071 = vmax.f32 %v5069, %v5070
        %v5072 = vrot.slane %v5071, 2
        %v5073 = vmax.f32 %v5071, %v5072
        %v5074 = vrot.slane %v5073, 1
        %v5075 = vmax.f32 %v5073, %v5074
        %v5076 = vsel %vm3360, %v4082, -inf
        %v5077 = vrot.slane %v5076, 4
        %v5078 = vmax.f32 %v5076, %v5077
        %v5079 = vrot.slane %v5078, 2
        %v5080 = vmax.f32 %v5078, %v5079
        %v5081 = vrot.slane %v5080, 1
        %v5082 = vmax.f32 %v5080, %v5081
        %v5083 = vsel %vm3360, %v4081, -inf
        %v5084 = vrot.slane %v5083, 4
        %v5085 = vmax.f32 %v5083, %v5084
        %v5086 = vrot.slane %v5085, 2
        %v5087 = vmax.f32 %v5085, %v5086
        %v5088 = vrot.slane %v5087, 1
        %v5089 = vmax.f32 %v5087, %v5088
        %v5090 = vsel %vm3360, %v4083, -inf
        %v5091 = vrot.slane %v5090, 4
        %v5092 = vmax.f32 %v5090, %v5091
        %v5093 = vrot.slane %v5092, 2
        %v5094 = vmax.f32 %v5092, %v5093
        %v5095 = vrot.slane %v5094, 1
        %v5096 = vmax.f32 %v5094, %v5095
        %v5097 = vsel %vm3360, %v4091, -inf
        %v5098 = vrot.slane %v5097, 4
        %v5099 = vmax.f32 %v5097, %v5098
        %v5100 = vrot.slane %v5099, 2
        %v5101 = vmax.f32 %v5099, %v5100
        %v5102 = vrot.slane %v5101, 1
        %v5103 = vmax.f32 %v5101, %v5102
        %v5104 = vsel %vm3360, %v4099, -inf
        %v5105 = vrot.slane %v5104, 4
        %v5106 = vmax.f32 %v5104, %v5105
        %v5107 = vrot.slane %v5106, 2
        %v5108 = vmax.f32 %v5106, %v5107
        %v5109 = vrot.slane %v5108, 1
        %v5110 = vmax.f32 %v5108, %v5109
        %v5111 = vsel %vm3360, %v4098, -inf
        %v5112 = vrot.slane %v5111, 4
        %v5113 = vmax.f32 %v5111, %v5112
        %v5114 = vrot.slane %v5113, 2
        %v5115 = vmax.f32 %v5113, %v5114
        %v5116 = vrot.slane %v5115, 1
        %v5117 = vmax.f32 %v5115, %v5116
        %v5118 = vsel %vm3360, %v4100, -inf
        %v5119 = vrot.slane %v5118, 4
        %v5120 = vmax.f32 %v5118, %v5119
        %v5121 = vrot.slane %v5120, 2
        %v5122 = vmax.f32 %v5120, %v5121
        %v5123 = vrot.slane %v5122, 1
        %v5124 = vmax.f32 %v5122, %v5123
        %v5125 = vmax.f32 %v4235, %v4291
        %v5126 = vmax.f32 %v4242, %v4298
        %v5127 = vmax.f32 %v4249, %v4305
        %v5128 = vmax.f32 %v4256, %v4312
        %v5129 = vmax.f32 %v4263, %v4319
        %v5130 = vmax.f32 %v4270, %v4326
        %v5131 = vmax.f32 %v4277, %v4333
        %v5132 = vmax.f32 %v4284, %v4340
        %v5133 = vmax.f32 %v4347, %v4403
        %v5134 = vmax.f32 %v4354, %v4410
        %v5135 = vmax.f32 %v4361, %v4417
        %v5136 = vmax.f32 %v4368, %v4424
        %v5137 = vmax.f32 %v4375, %v4431
        %v5138 = vmax.f32 %v4382, %v4438
        %v5139 = vmax.f32 %v4389, %v4445
        %v5140 = vmax.f32 %v4396, %v4452
        %v5141 = vmax.f32 %v4459, %v4515
        %v5142 = vmax.f32 %v4466, %v4522
        %v5143 = vmax.f32 %v4473, %v4529
        %v5144 = vmax.f32 %v4480, %v4536
        %v5145 = vmax.f32 %v4487, %v4543
        %v5146 = vmax.f32 %v4494, %v4550
        %v5147 = vmax.f32 %v4501, %v4557
        %v5148 = vmax.f32 %v4508, %v4564
        %v5149 = vmax.f32 %v4571, %v4627
        %v5150 = vmax.f32 %v4578, %v4634
        %v5151 = vmax.f32 %v4585, %v4641
        %v5152 = vmax.f32 %v4592, %v4648
        %v5153 = vmax.f32 %v4599, %v4655
        %v5154 = vmax.f32 %v4606, %v4662
        %v5155 = vmax.f32 %v4613, %v4669
        %v5156 = vmax.f32 %v4620, %v4676
        %v5157 = vmax.f32 %v4683, %v4739
        %v5158 = vmax.f32 %v4690, %v4746
        %v5159 = vmax.f32 %v4697, %v4753
        %v5160 = vmax.f32 %v4704, %v4760
        %v5161 = vmax.f32 %v4711, %v4767
        %v5162 = vmax.f32 %v4718, %v4774
        %v5163 = vmax.f32 %v4725, %v4781
        %v5164 = vmax.f32 %v4732, %v4788
        %v5165 = vmax.f32 %v4795, %v4851
        %v5166 = vmax.f32 %v4802, %v4858
        %v5167 = vmax.f32 %v4809, %v4865
        %v5168 = vmax.f32 %v4816, %v4872
        %v5169 = vmax.f32 %v4823, %v4879
        %v5170 = vmax.f32 %v4830, %v4886
        %v5171 = vmax.f32 %v4837, %v4893
        %v5172 = vmax.f32 %v4844, %v4900
        %v5173 = vmax.f32 %v4907, %v4963
        %v5174 = vmax.f32 %v4914, %v4970
        %v5175 = vmax.f32 %v4921, %v4977
        %v5176 = vmax.f32 %v4928, %v4984
        %v5177 = vmax.f32 %v4935, %v4991
        %v5178 = vmax.f32 %v4942, %v4998
        %v5179 = vmax.f32 %v4949, %v5005
        %v5180 = vmax.f32 %v4956, %v5012
        %v5181 = vmax.f32 %v5019, %v5075
        %v5182 = vmax.f32 %v5026, %v5082
        %v5183 = vmax.f32 %v5033, %v5089
        %v5184 = vmax.f32 %v5040, %v5096
        %v5185 = vmax.f32 %v5047, %v5103
        %v5186 = vmax.f32 %v5054, %v5110
        %v5187 = vmax.f32 %v5061, %v5117
        %v5188 = vmax.f32 %v5068, %v5124
        %v5189 = vld [vmem:[%s2] sm:$0x1]
        %v5191 = vlaneseq
        %v5192 = vshrl.u32 %v5191, 7
        %v5193 = vsub.s32 0, %v5192
        %v5194 = vrot.slane %v5189, %v5193
        %v5196 = vadd.f32 %v5125, %v5194
        %v5197 = vadd.f32 %v5126, %v5194
        %v5198 = vadd.f32 %v5127, %v5194
        %v5199 = vadd.f32 %v5128, %v5194
        %v5200 = vadd.f32 %v5129, %v5194
        %v5201 = vadd.f32 %v5130, %v5194
        %v5202 = vadd.f32 %v5131, %v5194
        %v5203 = vadd.f32 %v5132, %v5194
        %v5204 = vadd.f32 %v5133, %v5194
        %v5205 = vadd.f32 %v5134, %v5194
        %v5206 = vadd.f32 %v5135, %v5194
        %v5207 = vadd.f32 %v5136, %v5194
        %v5208 = vadd.f32 %v5137, %v5194
        %v5209 = vadd.f32 %v5138, %v5194
        %v5210 = vadd.f32 %v5139, %v5194
        %v5211 = vadd.f32 %v5140, %v5194
        %v5212 = vadd.f32 %v5141, %v5194
        %v5213 = vadd.f32 %v5142, %v5194
        %v5214 = vadd.f32 %v5143, %v5194
        %v5215 = vadd.f32 %v5144, %v5194
        %v5216 = vadd.f32 %v5145, %v5194
        %v5217 = vadd.f32 %v5146, %v5194
        %v5218 = vadd.f32 %v5147, %v5194
        %v5219 = vadd.f32 %v5148, %v5194
        %v5220 = vadd.f32 %v5149, %v5194
        %v5221 = vadd.f32 %v5150, %v5194
        %v5222 = vadd.f32 %v5151, %v5194
        %v5223 = vadd.f32 %v5152, %v5194
        %v5224 = vadd.f32 %v5153, %v5194
        %v5225 = vadd.f32 %v5154, %v5194
        %v5226 = vadd.f32 %v5155, %v5194
        %v5227 = vadd.f32 %v5156, %v5194
        %v5228 = vadd.f32 %v5157, %v5194
        %v5229 = vadd.f32 %v5158, %v5194
        %v5230 = vadd.f32 %v5159, %v5194
        %v5231 = vadd.f32 %v5160, %v5194
        %v5232 = vadd.f32 %v5161, %v5194
        %v5233 = vadd.f32 %v5162, %v5194
        %v5234 = vadd.f32 %v5163, %v5194
        %v5235 = vadd.f32 %v5164, %v5194
        %v5236 = vadd.f32 %v5165, %v5194
        %v5237 = vadd.f32 %v5166, %v5194
        %v5238 = vadd.f32 %v5167, %v5194
        %v5239 = vadd.f32 %v5168, %v5194
        %v5240 = vadd.f32 %v5169, %v5194
        %v5241 = vadd.f32 %v5170, %v5194
        %v5242 = vadd.f32 %v5171, %v5194
        %v5243 = vadd.f32 %v5172, %v5194
        %v5244 = vadd.f32 %v5173, %v5194
        %v5245 = vadd.f32 %v5174, %v5194
        %v5246 = vadd.f32 %v5175, %v5194
        %v5247 = vadd.f32 %v5176, %v5194
        %v5248 = vadd.f32 %v5177, %v5194
        %v5249 = vadd.f32 %v5178, %v5194
        %v5250 = vadd.f32 %v5179, %v5194
        %v5251 = vadd.f32 %v5180, %v5194
        %v5252 = vadd.f32 %v5181, %v5194
        %v5253 = vadd.f32 %v5182, %v5194
        %v5254 = vadd.f32 %v5183, %v5194
        %v5255 = vadd.f32 %v5184, %v5194
        %v5256 = vadd.f32 %v5185, %v5194
        %v5257 = vadd.f32 %v5186, %v5194
        %v5258 = vadd.f32 %v5187, %v5194
        %v5259 = vadd.f32 %v5188, %v5194
        %v5260 = vmax.f32 %v5196, 0.0
        %v5261 = vmax.f32 %v5197, 0.0
        %v5262 = vmax.f32 %v5198, 0.0
        %v5263 = vmax.f32 %v5199, 0.0
        %v5264 = vmax.f32 %v5200, 0.0
        %v5265 = vmax.f32 %v5201, 0.0
        %v5266 = vmax.f32 %v5202, 0.0
        %v5267 = vmax.f32 %v5203, 0.0
        %v5268 = vmax.f32 %v5204, 0.0
        %v5269 = vmax.f32 %v5205, 0.0
        %v5270 = vmax.f32 %v5206, 0.0
        %v5271 = vmax.f32 %v5207, 0.0
        %v5272 = vmax.f32 %v5208, 0.0
        %v5273 = vmax.f32 %v5209, 0.0
        %v5274 = vmax.f32 %v5210, 0.0
        %v5275 = vmax.f32 %v5211, 0.0
        %v5276 = vmax.f32 %v5212, 0.0
        %v5277 = vmax.f32 %v5213, 0.0
        %v5278 = vmax.f32 %v5214, 0.0
        %v5279 = vmax.f32 %v5215, 0.0
        %v5280 = vmax.f32 %v5216, 0.0
        %v5281 = vmax.f32 %v5217, 0.0
        %v5282 = vmax.f32 %v5218, 0.0
        %v5283 = vmax.f32 %v5219, 0.0
        %v5284 = vmax.f32 %v5220, 0.0
        %v5285 = vmax.f32 %v5221, 0.0
        %v5286 = vmax.f32 %v5222, 0.0
        %v5287 = vmax.f32 %v5223, 0.0
        %v5288 = vmax.f32 %v5224, 0.0
        %v5289 = vmax.f32 %v5225, 0.0
        %v5290 = vmax.f32 %v5226, 0.0
        %v5291 = vmax.f32 %v5227, 0.0
        %v5292 = vmax.f32 %v5228, 0.0
        %v5293 = vmax.f32 %v5229, 0.0
        %v5294 = vmax.f32 %v5230, 0.0
        %v5295 = vmax.f32 %v5231, 0.0
        %v5296 = vmax.f32 %v5232, 0.0
        %v5297 = vmax.f32 %v5233, 0.0
        %v5298 = vmax.f32 %v5234, 0.0
        %v5299 = vmax.f32 %v5235, 0.0
        %v5300 = vmax.f32 %v5236, 0.0
        %v5301 = vmax.f32 %v5237, 0.0
        %v5302 = vmax.f32 %v5238, 0.0
        %v5303 = vmax.f32 %v5239, 0.0
        %v5304 = vmax.f32 %v5240, 0.0
        %v5305 = vmax.f32 %v5241, 0.0
        %v5306 = vmax.f32 %v5242, 0.0
        %v5307 = vmax.f32 %v5243, 0.0
        %v5308 = vmax.f32 %v5244, 0.0
        %v5309 = vmax.f32 %v5245, 0.0
        %v5310 = vmax.f32 %v5246, 0.0
        %v5311 = vmax.f32 %v5247, 0.0
        %v5312 = vmax.f32 %v5248, 0.0
        %v5313 = vmax.f32 %v5249, 0.0
        %v5314 = vmax.f32 %v5250, 0.0
        %v5315 = vmax.f32 %v5251, 0.0
        %v5316 = vmax.f32 %v5252, 0.0
        %v5317 = vmax.f32 %v5253, 0.0
        %v5318 = vmax.f32 %v5254, 0.0
        %v5319 = vmax.f32 %v5255, 0.0
        %v5320 = vmax.f32 %v5256, 0.0
        %v5321 = vmax.f32 %v5257, 0.0
        %v5322 = vmax.f32 %v5258, 0.0
        %v5323 = vmax.f32 %v5259, 0.0
        %v5388 = vrot.slane %v5261, 7
        %vm5389 = vcmask 1041409
        %v5390 = vsel %vm5389, %v5388, %v5260
        %v5391 = vrot.slane %v5262, 6
        %vm5392 = vcmask 1042434
        %v5393 = vsel %vm5392, %v5391, %v5390
        %v5394 = vrot.slane %v5263, 5
        %vm5395 = vcmask 1043459
        %v5396 = vsel %vm5395, %v5394, %v5393
        %v5397 = vrot.slane %v5264, 4
        %vm5398 = vcmask 1044484
        %v5399 = vsel %vm5398, %v5397, %v5396
        %v5400 = vrot.slane %v5265, 3
        %vm5401 = vcmask 1045509
        %v5402 = vsel %vm5401, %v5400, %v5399
        %v5403 = vrot.slane %v5266, 2
        %vm5404 = vcmask 1046534
        %v5405 = vsel %vm5404, %v5403, %v5402
        %v5406 = vrot.slane %v5267, 1
        %vm5407 = vcmask 1047559
        %v5408 = vsel %vm5407, %v5406, %v5405
        %v5409 = vrot.slane %v5269, 7
        %v5410 = vsel %vm5389, %v5409, %v5268
        %v5411 = vrot.slane %v5270, 6
        %v5412 = vsel %vm5392, %v5411, %v5410
        %v5413 = vrot.slane %v5271, 5
        %v5414 = vsel %vm5395, %v5413, %v5412
        %v5415 = vrot.slane %v5272, 4
        %v5416 = vsel %vm5398, %v5415, %v5414
        %v5417 = vrot.slane %v5273, 3
        %v5418 = vsel %vm5401, %v5417, %v5416
        %v5419 = vrot.slane %v5274, 2
        %v5420 = vsel %vm5404, %v5419, %v5418
        %v5421 = vrot.slane %v5275, 1
        %v5422 = vsel %vm5407, %v5421, %v5420
        %v5423 = vrot.slane %v5277, 7
        %v5424 = vsel %vm5389, %v5423, %v5276
        %v5425 = vrot.slane %v5278, 6
        %v5426 = vsel %vm5392, %v5425, %v5424
        %v5427 = vrot.slane %v5279, 5
        %v5428 = vsel %vm5395, %v5427, %v5426
        %v5429 = vrot.slane %v5280, 4
        %v5430 = vsel %vm5398, %v5429, %v5428
        %v5431 = vrot.slane %v5281, 3
        %v5432 = vsel %vm5401, %v5431, %v5430
        %v5433 = vrot.slane %v5282, 2
        %v5434 = vsel %vm5404, %v5433, %v5432
        %v5435 = vrot.slane %v5283, 1
        %v5436 = vsel %vm5407, %v5435, %v5434
        %v5437 = vrot.slane %v5285, 7
        %v5438 = vsel %vm5389, %v5437, %v5284
        %v5439 = vrot.slane %v5286, 6
        %v5440 = vsel %vm5392, %v5439, %v5438
        %v5441 = vrot.slane %v5287, 5
        %v5442 = vsel %vm5395, %v5441, %v5440
        %v5443 = vrot.slane %v5288, 4
        %v5444 = vsel %vm5398, %v5443, %v5442
        %v5445 = vrot.slane %v5289, 3
        %v5446 = vsel %vm5401, %v5445, %v5444
        %v5447 = vrot.slane %v5290, 2
        %v5448 = vsel %vm5404, %v5447, %v5446
        %v5449 = vrot.slane %v5291, 1
        %v5450 = vsel %vm5407, %v5449, %v5448
        %v5451 = vrot.slane %v5293, 7
        %v5452 = vsel %vm5389, %v5451, %v5292
        %v5453 = vrot.slane %v5294, 6
        %v5454 = vsel %vm5392, %v5453, %v5452
        %v5455 = vrot.slane %v5295, 5
        %v5456 = vsel %vm5395, %v5455, %v5454
        %v5457 = vrot.slane %v5296, 4
        %v5458 = vsel %vm5398, %v5457, %v5456
        %v5459 = vrot.slane %v5297, 3
        %v5460 = vsel %vm5401, %v5459, %v5458
        %v5461 = vrot.slane %v5298, 2
        %v5462 = vsel %vm5404, %v5461, %v5460
        %v5463 = vrot.slane %v5299, 1
        %v5464 = vsel %vm5407, %v5463, %v5462
        %v5465 = vrot.slane %v5301, 7
        %v5466 = vsel %vm5389, %v5465, %v5300
        %v5467 = vrot.slane %v5302, 6
        %v5468 = vsel %vm5392, %v5467, %v5466
        %v5469 = vrot.slane %v5303, 5
        %v5470 = vsel %vm5395, %v5469, %v5468
        %v5471 = vrot.slane %v5304, 4
        %v5472 = vsel %vm5398, %v5471, %v5470
        %v5473 = vrot.slane %v5305, 3
        %v5474 = vsel %vm5401, %v5473, %v5472
        %v5475 = vrot.slane %v5306, 2
        %v5476 = vsel %vm5404, %v5475, %v5474
        %v5477 = vrot.slane %v5307, 1
        %v5478 = vsel %vm5407, %v5477, %v5476
        %v5479 = vrot.slane %v5309, 7
        %v5480 = vsel %vm5389, %v5479, %v5308
        %v5481 = vrot.slane %v5310, 6
        %v5482 = vsel %vm5392, %v5481, %v5480
        %v5483 = vrot.slane %v5311, 5
        %v5484 = vsel %vm5395, %v5483, %v5482
        %v5485 = vrot.slane %v5312, 4
        %v5486 = vsel %vm5398, %v5485, %v5484
        %v5487 = vrot.slane %v5313, 3
        %v5488 = vsel %vm5401, %v5487, %v5486
        %v5489 = vrot.slane %v5314, 2
        %v5490 = vsel %vm5404, %v5489, %v5488
        %v5491 = vrot.slane %v5315, 1
        %v5492 = vsel %vm5407, %v5491, %v5490
        %v5493 = vrot.slane %v5317, 7
        %v5494 = vsel %vm5389, %v5493, %v5316
        %v5495 = vrot.slane %v5318, 6
        %v5496 = vsel %vm5392, %v5495, %v5494
        %v5497 = vrot.slane %v5319, 5
        %v5498 = vsel %vm5395, %v5497, %v5496
        %v5499 = vrot.slane %v5320, 4
        %v5500 = vsel %vm5398, %v5499, %v5498
        %v5501 = vrot.slane %v5321, 3
        %v5502 = vsel %vm5401, %v5501, %v5500
        %v5503 = vrot.slane %v5322, 2
        %v5504 = vsel %vm5404, %v5503, %v5502
        %v5505 = vrot.slane %v5323, 1
        %v5506 = vsel %vm5407, %v5505, %v5504
        %5515 = vst [vmem:[%s163] sm:$0xff] %v5408
        %5516 = vst [vmem:[%s163 + $0x8] sm:$0xff] %v5422
        %5517 = vst [vmem:[%s163 + $0x10] sm:$0xff] %v5436
        %5518 = vst [vmem:[%s163 + $0x18] sm:$0xff] %v5450
        %5519 = vst [vmem:[%s163 + $0x20] sm:$0xff] %v5464
        %5520 = vst [vmem:[%s163 + $0x28] sm:$0xff] %v5478
        %5521 = vst [vmem:[%s163 + $0x30] sm:$0xff] %v5492
        %5522 = vst [vmem:[%s163 + $0x38] sm:$0xff] %v5506
        %s5523 = sand.u32 %s93, 1
        %s5524 = scalar_lea.sflag [#allocation4], %s5523
        %s5525 = sand.u32 %s93, 1
        %s5526 = smul.addr %s5525, 64
        %s5527 = scalar_lea.vmem [#allocation3], %s5526
        // Predicated region
        $region33: #{tpu_custom_call.1} parent=31 // pred_check
          %p5528 = pneg %p103
        $region34: #{tpu_custom_call.1} parent=31 // pred_check_branch
          %5530 = sbr.rel (%p5528) target = $region36
        $region35: #{tpu_custom_call.1} parent=31 // pred_region
          %s5532 = ssub.s32 1024, 1024
          %5533 = vsyncadd %s5524, %s5532
          %s5534 = smul.addr %s17, 8
          %s5535 = smul.addr %s5534, 128
          %s5536 = scalar_lea.hbm %s3, %s5535
          %s5537 = sshll.u32 %s5527, 4
          %s5538 = int_to_ptr.vmem [resolvable:$true] %s5537
          %5543 = dma.vmem_to_hbm [thread:$0]  %s5538, 1024, %s5536, %s5524, 128, 128, 8
        $region36: #{tpu_custom_call.1} parent=31 // pred_fallthru
          _
      $region32: #{tpu_custom_call.1} parent=5 // pred_fallthru
        _
      %p5544 = scmp.le.s32.totalorder 2, %s12
      // Predicated region
      $region37: #{tpu_custom_call.1} parent=5 // pred_check
        %p5545 = pneg %p5544
      $region38: #{tpu_custom_call.1} parent=5 // pred_check_branch
        %5547 = sbr.rel (%p5545) target = $region40
      $region39: #{tpu_custom_call.1} parent=5 // pred_region
        %s5548 = ssub.s32 %s12, 2
        // Predicated region
        $region41: #{tpu_custom_call.1} parent=39 // pred_check
          %p5549 = pneg %p109
        $region42: #{tpu_custom_call.1} parent=39 // pred_check_branch
          %5551 = sbr.rel (%p5549) target = $region44
        $region43: #{tpu_custom_call.1} parent=39 // pred_region
          %s5552 = sand.u32 %s94, 1
          %s5553 = scalar_lea.sflag [#allocation4], %s5552
          %s5554 = sand.u32 %s94, 1
          %s5555 = smul.addr %s5554, 64
          %s5556 = scalar_lea.vmem [#allocation3], %s5555
          %5557 = dma.done %s5553, 1024
        $region44: #{tpu_custom_call.1} parent=39 // pred_fallthru
          _
      $region40: #{tpu_custom_call.1} parent=5 // pred_fallthru
        _
    $region6: #{tpu_custom_call.1} parent=1 // loop_footer
      %s16 = sadd.s32 1, %s12
    $region7: #{tpu_custom_call.1} parent=1 // loop_footer_branch
      %11 = sbr.rel target = $region3
    $region8: #{tpu_custom_call.1} parent=1 // loop_exit
      _
    %5558 = vsyncpa [#allocation4], 1
    %s5559 = scalar_lea.sflag [#allocation4], 1
    %5560 = vsyncpa %s5559, 1

</llo_original>
